<compile_context>
chip_gen: v5e
topology: v5e:2x2
jax: 0.10.0
libtpu: 0.0.40
codegen_flags: <defaults>
</compile_context>

<pallas_src>
import jax
import jax.numpy as jnp
import numpy as np
from jax.experimental import pallas as pl
from jax.experimental.pallas import tpu as pltpu

# ---------------- small, module-consistent config ----------------
BATCH = 2
NUM_POINTS = 64
NUM_CENTERS = 16      # config.num_pc_centers
NUM_KNN = 8           # config.num_pc_knn
HIDDEN = 32           # config.hidden_size
POINT_DIM = 3

D1, D2, D3 = 64, 128, 256          # SharedMlp widths


# ---------------- packed-parameter layout (lane-tile aligned) ----------------
def _seg_offsets(dims, align=128):
    offs, off = [], 0
    for d in dims:
        offs.append(off)
        off += -(-d // align) * align
    return tuple(offs), off


# b1,g1,be1, b2,g2,be2, b3,g3,be3, bc1, (b4+bc2)
_VEC_DIMS = (D1, D1, D1, D2, D2, D2, D3, D3, D3, HIDDEN, HIDDEN)
_VEC_OFFS, _VEC_WIDTH = _seg_offsets(_VEC_DIMS)        # width = 1792
_WC1_OFF = 128                                          # w_in = [w1 | pad | wc1]


# ---------------- math helpers (shared by kernel and reference) ----------------
def _gelu_tanh(x):
    c = 0.7978845608028654  # sqrt(2/pi)
    return 0.5 * x * (1.0 + jnp.tanh(c * (x + 0.044715 * x * x * x)))


def _layer_norm(x, gamma, beta, eps=1e-5):
    mu = jnp.mean(x, axis=-1, keepdims=True)
    var = jnp.mean(jnp.square(x - mu), axis=-1, keepdims=True)
    return (x - mu) * jax.lax.rsqrt(var + eps) * gamma + beta


# ---------------- FPS + KNN (plain-JAX glue, data-dependent) ----------------
# TODO(synk): farthest-point-sampling / knn are sequential argmax / top_k ops
# with no clean Pallas equivalent at this size; they stay in plain JAX.
def farthest_point_sampling(x, k):
    """x: (B, N, 3) -> (B, k, 3). Starts from point 0 (deterministic start)."""
    first = x[:, 0, :]                                       # (B, 3)
    mind0 = jnp.sum((x - first[:, None, :]) ** 2, axis=-1)   # (B, N)

    def step(mindist, _):
        idx = jnp.argmax(mindist, axis=-1)                                 # (B,)
        sel = jnp.take_along_axis(x, idx[:, None, None], axis=1)[:, 0]     # (B, 3)
        d = jnp.sum((x - sel[:, None, :]) ** 2, axis=-1)
        return jnp.minimum(mindist, d), sel

    _, sels = jax.lax.scan(step, mind0, None, length=k - 1)   # (k-1, B, 3)
    return jnp.concatenate(
        [first[:, None, :], jnp.transpose(sels, (1, 0, 2))], axis=1)


def knn_points(centers, x, k):
    """centers (B, C, 3), x (B, N, 3) -> (B, C, k, 3) nearest neighbours."""
    d = jnp.sum((centers[:, :, None, :] - x[:, None, :, :]) ** 2, axis=-1)  # (B,C,N)
    _, idx = jax.lax.top_k(-d, k)                                           # (B,C,k)
    return jax.vmap(lambda pts, ids: pts[ids])(x, idx)                      # (B,C,k,3)


# ---------------- Pallas kernel: batched point-group embedding ----------------
def _pc_embed_kernel(normed_ref, centers_ref, w_in_ref, w2_ref, w3_ref,
                     w_tail_ref, vec_ref, emb_ref):
    G = centers_ref.shape[0]            # total groups (B * num_centers)
    K = normed_ref.shape[0] // G        # neighbours per group

    def vec(i):                          # static, lane-tile-aligned slices
        o, d = _VEC_OFFS[i], _VEC_DIMS[i]
        return vec_ref[:, o:o + d]

    def lin3(pts, w):                    # (M,3) x (3,D) as three VPU FMAs
        return (pts[:, 0:1] * w[0:1, :]
                + pts[:, 1:2] * w[1:2, :]
                + pts[:, 2:3] * w[2:3, :])

    # ---- knn branch: SharedMlp(3->64) -> SharedMlp(64->128) -> SharedMlp(128->256)
    x = normed_ref[...]                                          # (G*K, 3)
    h = lin3(x, w_in_ref[:, 0:D1]) + vec(0)                      # (G*K, 64)
    h = _gelu_tanh(_layer_norm(h, vec(1), vec(2)))

    h = _gelu_tanh(_layer_norm(
        jnp.dot(h, w2_ref[...], preferred_element_type=jnp.float32) + vec(3),
        vec(4), vec(5)))                                         # (G*K, 128)
    h = _gelu_tanh(_layer_norm(
        jnp.dot(h, w3_ref[...], preferred_element_type=jnp.float32) + vec(6),
        vec(7), vec(8)))                                         # (G*K, 256)

    # MaxPool over the K neighbours of every group (sublane-tile aligned split).
    pooled = jnp.max(h.reshape(G, K, D3), axis=1)                # (G, 256)

    # ---- center branch: Linear(3->H) -> GELU(tanh)
    c = centers_ref[...]                                         # (G, 3)
    ce = _gelu_tanh(lin3(c, w_in_ref[:, _WC1_OFF:_WC1_OFF + HIDDEN]) + vec(9))

    # ---- fused tail: [pooled | ce] @ [w4; wc2] + (b4 + bc2)
    act = jnp.concatenate([pooled, ce], axis=-1)                 # (G, 256+H)
    emb = jnp.dot(act, w_tail_ref[...],
                  preferred_element_type=jnp.float32) + vec(10)  # (G, H)
    emb_ref[...] = emb.astype(emb_ref.dtype)


# ---------------- parameter packing (done once in the wrapper) ----------------
def _pack_params(params):
    (w1, b1, g1, be1, w2, b2, g2, be2, w3, b3, g3, be3,
     w4, b4, wc1, bc1, wc2, bc2) = params

    # 3-input weights for the two VPU "FMA linears": [w1 | pad | wc1]
    w_in = jnp.zeros((POINT_DIM, _WC1_OFF + HIDDEN), jnp.float32)
    w_in = w_in.at[:, :D1].set(w1).at[:, _WC1_OFF:_WC1_OFF + HIDDEN].set(wc1)

    # fused tail weight [w4; wc2] and fused bias (b4 + bc2)
    w_tail = jnp.concatenate([w4, wc2], axis=0)                  # (256+H, H)

    vec = jnp.zeros((1, _VEC_WIDTH), jnp.float32)
    segs = (b1, g1, be1, b2, g2, be2, b3, g3, be3, bc1, b4 + bc2)
    for off, d, s in zip(_VEC_OFFS, _VEC_DIMS, segs):
        vec = vec.at[:, off:off + d].set(s)

    return w_in, w2, w3, w_tail, vec


def point_cloud_embeddings(point_cloud, params, enable_point_cloud=True):
    """Mirrors EmbodiedMAEPointCloudEmbeddings.forward."""
    if point_cloud is None or not enable_point_cloud:
        return (None, None, None)

    point_cloud = point_cloud.astype(jnp.float32)
    centers = farthest_point_sampling(point_cloud, NUM_CENTERS)        # (B, C, 3)
    knn = knn_points(centers, point_cloud, NUM_KNN)                    # (B, C, K, 3)
    normed = knn - centers[:, :, None, :]                              # (B, C, K, 3)

    B = point_cloud.shape[0]
    G = B * NUM_CENTERS

    normed_flat = normed.reshape(G * NUM_KNN, POINT_DIM)               # (G*K, 3)
    centers_flat = centers.reshape(G, POINT_DIM)                       # (G, 3)
    w_in, w2, w3, w_tail, vec = _pack_params(params)

    operands = (normed_flat, centers_flat, w_in, w2, w3, w_tail, vec)
    # One grid step: whole problem fits trivially in VMEM on every generation
    # (v5e/v6e: single TC; v7x: cross-TC split is net-negative at this size).
    in_specs = [pl.BlockSpec(a.shape, lambda i: (0, 0)) for a in operands]

    emb = pl.pallas_call(
        _pc_embed_kernel,
        out_shape=jax.ShapeDtypeStruct((G, HIDDEN), jnp.float32),
        grid=(1,),
        in_specs=in_specs,
        out_specs=pl.BlockSpec((G, HIDDEN), lambda i: (0, 0)),
    )(*operands)

    emb = emb.reshape(B, NUM_CENTERS, HIDDEN)
    return emb, centers, normed


# ---------------- deterministic parameter init (no checkpoint) ----------------
def init_params(key):
    ks = jax.random.split(key, 6)

    def lin(k, din, dout):
        kw, kb = jax.random.split(k)
        w = jax.random.normal(kw, (din, dout), jnp.float32) * 0.05
        b = jax.random.normal(kb, (1, dout), jnp.float32) * 0.05
        return w, b

    def ln(k, dim):
        kg, kb = jax.random.split(k)
        g = 1.0 + 0.1 * jax.random.normal(kg, (1, dim), jnp.float32)
        b = 0.1 * jax.random.normal(kb, (1, dim), jnp.float32)
        return g, b

    w1, b1 = lin(ks[0], POINT_DIM, D1);   g1, be1 = ln(ks[0], D1)
    w2, b2 = lin(ks[1], D1, D2);          g2, be2 = ln(ks[1], D2)
    w3, b3 = lin(ks[2], D2, D3);          g3, be3 = ln(ks[2], D3)
    w4, b4 = lin(ks[3], D3, HIDDEN)
    wc1, bc1 = lin(ks[4], POINT_DIM, HIDDEN)
    wc2, bc2 = lin(ks[5], HIDDEN, HIDDEN)
    return (w1, b1, g1, be1, w2, b2, g2, be2, w3, b3, g3, be3,
            w4, b4, wc1, bc1, wc2, bc2)


# ---------------- pure-JAX reference for validation ----------------
def reference(point_cloud, params):
    (w1, b1, g1, be1, w2, b2, g2, be2, w3, b3, g3, be3,
     w4, b4, wc1, bc1, wc2, bc2) = params
    hi = jax.lax.Precision.HIGHEST
    point_cloud = point_cloud.astype(jnp.float32)
    centers = farthest_point_sampling(point_cloud, NUM_CENTERS)
    knn = knn_points(centers, point_cloud, NUM_KNN)
    normed = knn - centers[:, :, None, :]
    h = _gelu_tanh(_layer_norm(jnp.dot(normed, w1, precision=hi) + b1, g1, be1))
    h = _gelu_tanh(_layer_norm(jnp.dot(h, w2, precision=hi) + b2, g2, be2))
    h = _gelu_tanh(_layer_norm(jnp.dot(h, w3, precision=hi) + b3, g3, be3))
    pooled = jnp.max(h, axis=-2)
    knn_emb = jnp.dot(pooled, w4, precision=hi) + b4
    ce = _gelu_tanh(jnp.dot(centers, wc1, precision=hi) + bc1)
    ce = jnp.dot(ce, wc2, precision=hi) + bc2
    return knn_emb + ce, centers, normed


if __name__ == "__main__":
    key = jax.random.PRNGKey(0)
    kp, kx = jax.random.split(key)
    params = init_params(kp)
    point_cloud = jax.random.uniform(
        kx, (BATCH, NUM_POINTS, POINT_DIM), jnp.float32, -1.0, 1.0)

    emb, centers, normed = point_cloud_embeddings(point_cloud, params)
    jax.block_until_ready(emb)

    ref_emb, ref_centers, ref_normed = reference(point_cloud, params)
    np.testing.assert_allclose(np.asarray(centers), np.asarray(ref_centers),
                               atol=1e-5, rtol=1e-5)
    np.testing.assert_allclose(np.asarray(normed), np.asarray(ref_normed),
                               atol=1e-5, rtol=1e-5)
    # All activations/weights are f32 now (no in-kernel bf16 casts); the slack
    # below only covers possible MXU f32 pass-count differences between the
    # Mosaic kernel and the XLA reference matmuls.
    np.testing.assert_allclose(np.asarray(emb), np.asarray(ref_emb),
                               atol=1e-2, rtol=1e-2)
    print("KERNEL_OK")
</pallas_src>

<mosaic_0001>
module attributes {stable_mosaic.version = 11 : i64} {
  func.func @_pc_embed_kernel(%arg0: i32, %arg1: memref<256x3xf32, #tpu.memory_space<vmem>>, %arg2: memref<32x3xf32, #tpu.memory_space<vmem>>, %arg3: memref<3x160xf32, #tpu.memory_space<vmem>>, %arg4: memref<64x128xf32, #tpu.memory_space<vmem>>, %arg5: memref<128x256xf32, #tpu.memory_space<vmem>>, %arg6: memref<288x32xf32, #tpu.memory_space<vmem>>, %arg7: memref<1x1792xf32, #tpu.memory_space<vmem>>, %arg8: memref<32x32xf32, #tpu.memory_space<vmem>>) attributes {dimension_semantics = [#tpu.dimension_semantics<arbitrary>], iteration_bounds = array<i64: 1>, scalar_prefetch = 0 : i64, scratch_operands = 0 : i64, tpu.core_type = #tpu.core_type<tc>, window_params = [{pipeline_mode = #tpu.pipeline_mode<synchronous>, transform_indices = @transform_0, window_bounds = array<i64: 256, 3>}, {pipeline_mode = #tpu.pipeline_mode<synchronous>, transform_indices = @transform_1, window_bounds = array<i64: 32, 3>}, {pipeline_mode = #tpu.pipeline_mode<synchronous>, transform_indices = @transform_2, window_bounds = array<i64: 3, 160>}, {pipeline_mode = #tpu.pipeline_mode<synchronous>, transform_indices = @transform_3, window_bounds = array<i64: 64, 128>}, {pipeline_mode = #tpu.pipeline_mode<synchronous>, transform_indices = @transform_4, window_bounds = array<i64: 128, 256>}, {pipeline_mode = #tpu.pipeline_mode<synchronous>, transform_indices = @transform_5, window_bounds = array<i64: 288, 32>}, {pipeline_mode = #tpu.pipeline_mode<synchronous>, transform_indices = @transform_6, window_bounds = array<i64: 1, 1792>}, {pipeline_mode = #tpu.pipeline_mode<synchronous>, transform_indices = @transform_7, window_bounds = array<i64: 32, 32>}]} {
    %c0 = arith.constant 0 : index
    %c0_0 = arith.constant 0 : index
    %0 = vector.load %arg1[%c0, %c0_0] : memref<256x3xf32, #tpu.memory_space<vmem>>, vector<256x3xf32>
    %c0_1 = arith.constant 0 : index
    %c0_2 = arith.constant 0 : index
    %1 = vector.load %arg3[%c0_1, %c0_2] : memref<3x160xf32, #tpu.memory_space<vmem>>, vector<3x64xf32>
    %2 = vector.extract_strided_slice %0 {offsets = [0, 0], sizes = [256, 1], strides = [1, 1]} : vector<256x3xf32> to vector<256x1xf32>
    %3 = vector.extract_strided_slice %1 {offsets = [0, 0], sizes = [1, 64], strides = [1, 1]} : vector<3x64xf32> to vector<1x64xf32>
    %4 = vector.broadcast %2 : vector<256x1xf32> to vector<256x64xf32>
    %5 = vector.broadcast %3 : vector<1x64xf32> to vector<256x64xf32>
    %6 = arith.mulf %4, %5 : vector<256x64xf32>
    %7 = vector.extract_strided_slice %0 {offsets = [0, 1], sizes = [256, 1], strides = [1, 1]} : vector<256x3xf32> to vector<256x1xf32>
    %8 = vector.extract_strided_slice %1 {offsets = [1, 0], sizes = [1, 64], strides = [1, 1]} : vector<3x64xf32> to vector<1x64xf32>
    %9 = vector.broadcast %7 : vector<256x1xf32> to vector<256x64xf32>
    %10 = vector.broadcast %8 : vector<1x64xf32> to vector<256x64xf32>
    %11 = arith.mulf %9, %10 : vector<256x64xf32>
    %12 = arith.addf %6, %11 : vector<256x64xf32>
    %13 = vector.extract_strided_slice %0 {offsets = [0, 2], sizes = [256, 1], strides = [1, 1]} : vector<256x3xf32> to vector<256x1xf32>
    %14 = vector.extract_strided_slice %1 {offsets = [2, 0], sizes = [1, 64], strides = [1, 1]} : vector<3x64xf32> to vector<1x64xf32>
    %15 = vector.broadcast %13 : vector<256x1xf32> to vector<256x64xf32>
    %16 = vector.broadcast %14 : vector<1x64xf32> to vector<256x64xf32>
    %17 = arith.mulf %15, %16 : vector<256x64xf32>
    %18 = arith.addf %12, %17 : vector<256x64xf32>
    %c0_3 = arith.constant 0 : index
    %c0_4 = arith.constant 0 : index
    %19 = vector.load %arg7[%c0_3, %c0_4] : memref<1x1792xf32, #tpu.memory_space<vmem>>, vector<1x64xf32>
    %20 = vector.broadcast %19 : vector<1x64xf32> to vector<256x64xf32>
    %21 = arith.addf %18, %20 : vector<256x64xf32>
    %c0_5 = arith.constant 0 : index
    %c128 = arith.constant 128 : index
    %22 = vector.load %arg7[%c0_5, %c128] : memref<1x1792xf32, #tpu.memory_space<vmem>>, vector<1x64xf32>
    %c0_6 = arith.constant 0 : index
    %c256 = arith.constant 256 : index
    %23 = vector.load %arg7[%c0_6, %c256] : memref<1x1792xf32, #tpu.memory_space<vmem>>, vector<1x64xf32>
    %cst = arith.constant dense<0.000000e+00> : vector<256xf32>
    %24 = vector.multi_reduction <add>, %21, %cst [1] : vector<256x64xf32> to vector<256xf32>
    %25 = vector.shape_cast %24 : vector<256xf32> to vector<256x1xf32>
    %cst_7 = arith.constant 6.400000e+01 : f32
    %26 = vector.broadcast %cst_7 : f32 to vector<256x1xf32>
    %27 = arith.divf %25, %26 : vector<256x1xf32>
    %28 = vector.broadcast %27 : vector<256x1xf32> to vector<256x64xf32>
    %29 = arith.subf %21, %28 : vector<256x64xf32>
    %30 = arith.mulf %29, %29 : vector<256x64xf32>
    %cst_8 = arith.constant dense<0.000000e+00> : vector<256xf32>
    %31 = vector.multi_reduction <add>, %30, %cst_8 [1] : vector<256x64xf32> to vector<256xf32>
    %32 = vector.shape_cast %31 : vector<256xf32> to vector<256x1xf32>
    %cst_9 = arith.constant 6.400000e+01 : f32
    %33 = vector.broadcast %cst_9 : f32 to vector<256x1xf32>
    %34 = arith.divf %32, %33 : vector<256x1xf32>
    %35 = vector.broadcast %27 : vector<256x1xf32> to vector<256x64xf32>
    %36 = arith.subf %21, %35 : vector<256x64xf32>
    %cst_10 = arith.constant 9.99999974E-6 : f32
    %37 = vector.broadcast %cst_10 : f32 to vector<256x1xf32>
    %38 = arith.addf %34, %37 : vector<256x1xf32>
    %39 = math.rsqrt %38 : vector<256x1xf32>
    %40 = vector.broadcast %39 : vector<256x1xf32> to vector<256x64xf32>
    %41 = arith.mulf %36, %40 : vector<256x64xf32>
    %42 = vector.broadcast %22 : vector<1x64xf32> to vector<256x64xf32>
    %43 = arith.mulf %41, %42 : vector<256x64xf32>
    %44 = vector.broadcast %23 : vector<1x64xf32> to vector<256x64xf32>
    %45 = arith.addf %43, %44 : vector<256x64xf32>
    %cst_11 = arith.constant 5.000000e-01 : f32
    %46 = vector.broadcast %cst_11 : f32 to vector<256x64xf32>
    %47 = arith.mulf %46, %45 : vector<256x64xf32>
    %cst_12 = arith.constant 4.471500e-02 : f32
    %48 = vector.broadcast %cst_12 : f32 to vector<256x64xf32>
    %49 = arith.mulf %48, %45 : vector<256x64xf32>
    %50 = arith.mulf %49, %45 : vector<256x64xf32>
    %51 = arith.mulf %50, %45 : vector<256x64xf32>
    %52 = arith.addf %45, %51 : vector<256x64xf32>
    %cst_13 = arith.constant 0.797884583 : f32
    %53 = vector.broadcast %cst_13 : f32 to vector<256x64xf32>
    %54 = arith.mulf %53, %52 : vector<256x64xf32>
    %55 = math.tanh %54 : vector<256x64xf32>
    %cst_14 = arith.constant 1.000000e+00 : f32
    %56 = vector.broadcast %cst_14 : f32 to vector<256x64xf32>
    %57 = arith.addf %56, %55 : vector<256x64xf32>
    %58 = arith.mulf %47, %57 : vector<256x64xf32>
    %c0_15 = arith.constant 0 : index
    %c0_16 = arith.constant 0 : index
    %59 = vector.load %arg4[%c0_15, %c0_16] : memref<64x128xf32, #tpu.memory_space<vmem>>, vector<64x128xf32>
    %cst_17 = arith.constant dense<0.000000e+00> : vector<256x128xf32>
    %60 = tpu.matmul %58, %59, %cst_17 {dimension_numbers = #tpu.dot_dimension_numbers<[1], [0], [0], [1], [0, 0, 1, 1], [], []>} : vector<256x64xf32>, vector<64x128xf32>, vector<256x128xf32> -> vector<256x128xf32>
    %c0_18 = arith.constant 0 : index
    %c384 = arith.constant 384 : index
    %61 = vector.load %arg7[%c0_18, %c384] : memref<1x1792xf32, #tpu.memory_space<vmem>>, vector<1x128xf32>
    %62 = vector.broadcast %61 : vector<1x128xf32> to vector<256x128xf32>
    %63 = arith.addf %60, %62 : vector<256x128xf32>
    %c0_19 = arith.constant 0 : index
    %c512 = arith.constant 512 : index
    %64 = vector.load %arg7[%c0_19, %c512] : memref<1x1792xf32, #tpu.memory_space<vmem>>, vector<1x128xf32>
    %c0_20 = arith.constant 0 : index
    %c640 = arith.constant 640 : index
    %65 = vector.load %arg7[%c0_20, %c640] : memref<1x1792xf32, #tpu.memory_space<vmem>>, vector<1x128xf32>
    %cst_21 = arith.constant dense<0.000000e+00> : vector<256xf32>
    %66 = vector.multi_reduction <add>, %63, %cst_21 [1] : vector<256x128xf32> to vector<256xf32>
    %67 = vector.shape_cast %66 : vector<256xf32> to vector<256x1xf32>
    %cst_22 = arith.constant 1.280000e+02 : f32
    %68 = vector.broadcast %cst_22 : f32 to vector<256x1xf32>
    %69 = arith.divf %67, %68 : vector<256x1xf32>
    %70 = vector.broadcast %69 : vector<256x1xf32> to vector<256x128xf32>
    %71 = arith.subf %63, %70 : vector<256x128xf32>
    %72 = arith.mulf %71, %71 : vector<256x128xf32>
    %cst_23 = arith.constant dense<0.000000e+00> : vector<256xf32>
    %73 = vector.multi_reduction <add>, %72, %cst_23 [1] : vector<256x128xf32> to vector<256xf32>
    %74 = vector.shape_cast %73 : vector<256xf32> to vector<256x1xf32>
    %cst_24 = arith.constant 1.280000e+02 : f32
    %75 = vector.broadcast %cst_24 : f32 to vector<256x1xf32>
    %76 = arith.divf %74, %75 : vector<256x1xf32>
    %77 = vector.broadcast %69 : vector<256x1xf32> to vector<256x128xf32>
    %78 = arith.subf %63, %77 : vector<256x128xf32>
    %cst_25 = arith.constant 9.99999974E-6 : f32
    %79 = vector.broadcast %cst_25 : f32 to vector<256x1xf32>
    %80 = arith.addf %76, %79 : vector<256x1xf32>
    %81 = math.rsqrt %80 : vector<256x1xf32>
    %82 = vector.broadcast %81 : vector<256x1xf32> to vector<256x128xf32>
    %83 = arith.mulf %78, %82 : vector<256x128xf32>
    %84 = vector.broadcast %64 : vector<1x128xf32> to vector<256x128xf32>
    %85 = arith.mulf %83, %84 : vector<256x128xf32>
    %86 = vector.broadcast %65 : vector<1x128xf32> to vector<256x128xf32>
    %87 = arith.addf %85, %86 : vector<256x128xf32>
    %cst_26 = arith.constant 5.000000e-01 : f32
    %88 = vector.broadcast %cst_26 : f32 to vector<256x128xf32>
    %89 = arith.mulf %88, %87 : vector<256x128xf32>
    %cst_27 = arith.constant 4.471500e-02 : f32
    %90 = vector.broadcast %cst_27 : f32 to vector<256x128xf32>
    %91 = arith.mulf %90, %87 : vector<256x128xf32>
    %92 = arith.mulf %91, %87 : vector<256x128xf32>
    %93 = arith.mulf %92, %87 : vector<256x128xf32>
    %94 = arith.addf %87, %93 : vector<256x128xf32>
    %cst_28 = arith.constant 0.797884583 : f32
    %95 = vector.broadcast %cst_28 : f32 to vector<256x128xf32>
    %96 = arith.mulf %95, %94 : vector<256x128xf32>
    %97 = math.tanh %96 : vector<256x128xf32>
    %cst_29 = arith.constant 1.000000e+00 : f32
    %98 = vector.broadcast %cst_29 : f32 to vector<256x128xf32>
    %99 = arith.addf %98, %97 : vector<256x128xf32>
    %100 = arith.mulf %89, %99 : vector<256x128xf32>
    %c0_30 = arith.constant 0 : index
    %c0_31 = arith.constant 0 : index
    %101 = vector.load %arg5[%c0_30, %c0_31] : memref<128x256xf32, #tpu.memory_space<vmem>>, vector<128x256xf32>
    %cst_32 = arith.constant dense<0.000000e+00> : vector<256x256xf32>
    %102 = tpu.matmul %100, %101, %cst_32 {dimension_numbers = #tpu.dot_dimension_numbers<[1], [0], [0], [1], [0, 0, 1, 1], [], []>} : vector<256x128xf32>, vector<128x256xf32>, vector<256x256xf32> -> vector<256x256xf32>
    %c0_33 = arith.constant 0 : index
    %c768 = arith.constant 768 : index
    %103 = vector.load %arg7[%c0_33, %c768] : memref<1x1792xf32, #tpu.memory_space<vmem>>, vector<1x256xf32>
    %104 = vector.broadcast %103 : vector<1x256xf32> to vector<256x256xf32>
    %105 = arith.addf %102, %104 : vector<256x256xf32>
    %c0_34 = arith.constant 0 : index
    %c1024 = arith.constant 1024 : index
    %106 = vector.load %arg7[%c0_34, %c1024] : memref<1x1792xf32, #tpu.memory_space<vmem>>, vector<1x256xf32>
    %c0_35 = arith.constant 0 : index
    %c1280 = arith.constant 1280 : index
    %107 = vector.load %arg7[%c0_35, %c1280] : memref<1x1792xf32, #tpu.memory_space<vmem>>, vector<1x256xf32>
    %cst_36 = arith.constant dense<0.000000e+00> : vector<256xf32>
    %108 = vector.multi_reduction <add>, %105, %cst_36 [1] : vector<256x256xf32> to vector<256xf32>
    %109 = vector.shape_cast %108 : vector<256xf32> to vector<256x1xf32>
    %cst_37 = arith.constant 2.560000e+02 : f32
    %110 = vector.broadcast %cst_37 : f32 to vector<256x1xf32>
    %111 = arith.divf %109, %110 : vector<256x1xf32>
    %112 = vector.broadcast %111 : vector<256x1xf32> to vector<256x256xf32>
    %113 = arith.subf %105, %112 : vector<256x256xf32>
    %114 = arith.mulf %113, %113 : vector<256x256xf32>
    %cst_38 = arith.constant dense<0.000000e+00> : vector<256xf32>
    %115 = vector.multi_reduction <add>, %114, %cst_38 [1] : vector<256x256xf32> to vector<256xf32>
    %116 = vector.shape_cast %115 : vector<256xf32> to vector<256x1xf32>
    %cst_39 = arith.constant 2.560000e+02 : f32
    %117 = vector.broadcast %cst_39 : f32 to vector<256x1xf32>
    %118 = arith.divf %116, %117 : vector<256x1xf32>
    %119 = vector.broadcast %111 : vector<256x1xf32> to vector<256x256xf32>
    %120 = arith.subf %105, %119 : vector<256x256xf32>
    %cst_40 = arith.constant 9.99999974E-6 : f32
    %121 = vector.broadcast %cst_40 : f32 to vector<256x1xf32>
    %122 = arith.addf %118, %121 : vector<256x1xf32>
    %123 = math.rsqrt %122 : vector<256x1xf32>
    %124 = vector.broadcast %123 : vector<256x1xf32> to vector<256x256xf32>
    %125 = arith.mulf %120, %124 : vector<256x256xf32>
    %126 = vector.broadcast %106 : vector<1x256xf32> to vector<256x256xf32>
    %127 = arith.mulf %125, %126 : vector<256x256xf32>
    %128 = vector.broadcast %107 : vector<1x256xf32> to vector<256x256xf32>
    %129 = arith.addf %127, %128 : vector<256x256xf32>
    %cst_41 = arith.constant 5.000000e-01 : f32
    %130 = vector.broadcast %cst_41 : f32 to vector<256x256xf32>
    %131 = arith.mulf %130, %129 : vector<256x256xf32>
    %cst_42 = arith.constant 4.471500e-02 : f32
    %132 = vector.broadcast %cst_42 : f32 to vector<256x256xf32>
    %133 = arith.mulf %132, %129 : vector<256x256xf32>
    %134 = arith.mulf %133, %129 : vector<256x256xf32>
    %135 = arith.mulf %134, %129 : vector<256x256xf32>
    %136 = arith.addf %129, %135 : vector<256x256xf32>
    %cst_43 = arith.constant 0.797884583 : f32
    %137 = vector.broadcast %cst_43 : f32 to vector<256x256xf32>
    %138 = arith.mulf %137, %136 : vector<256x256xf32>
    %139 = math.tanh %138 : vector<256x256xf32>
    %cst_44 = arith.constant 1.000000e+00 : f32
    %140 = vector.broadcast %cst_44 : f32 to vector<256x256xf32>
    %141 = arith.addf %140, %139 : vector<256x256xf32>
    %142 = arith.mulf %131, %141 : vector<256x256xf32>
    %143 = vector.shape_cast %142 : vector<256x256xf32> to vector<32x8x256xf32>
    %cst_45 = arith.constant dense<0xFF800000> : vector<32x256xf32>
    %144 = vector.multi_reduction <maximumf>, %143, %cst_45 [1] : vector<32x8x256xf32> to vector<32x256xf32>
    %c0_46 = arith.constant 0 : index
    %c0_47 = arith.constant 0 : index
    %145 = vector.load %arg2[%c0_46, %c0_47] : memref<32x3xf32, #tpu.memory_space<vmem>>, vector<32x3xf32>
    %c0_48 = arith.constant 0 : index
    %c128_49 = arith.constant 128 : index
    %146 = vector.load %arg3[%c0_48, %c128_49] : memref<3x160xf32, #tpu.memory_space<vmem>>, vector<3x32xf32>
    %147 = vector.extract_strided_slice %145 {offsets = [0, 0], sizes = [32, 1], strides = [1, 1]} : vector<32x3xf32> to vector<32x1xf32>
    %148 = vector.extract_strided_slice %146 {offsets = [0, 0], sizes = [1, 32], strides = [1, 1]} : vector<3x32xf32> to vector<1x32xf32>
    %149 = vector.broadcast %147 : vector<32x1xf32> to vector<32x32xf32>
    %150 = vector.broadcast %148 : vector<1x32xf32> to vector<32x32xf32>
    %151 = arith.mulf %149, %150 : vector<32x32xf32>
    %152 = vector.extract_strided_slice %145 {offsets = [0, 1], sizes = [32, 1], strides = [1, 1]} : vector<32x3xf32> to vector<32x1xf32>
    %153 = vector.extract_strided_slice %146 {offsets = [1, 0], sizes = [1, 32], strides = [1, 1]} : vector<3x32xf32> to vector<1x32xf32>
    %154 = vector.broadcast %152 : vector<32x1xf32> to vector<32x32xf32>
    %155 = vector.broadcast %153 : vector<1x32xf32> to vector<32x32xf32>
    %156 = arith.mulf %154, %155 : vector<32x32xf32>
    %157 = arith.addf %151, %156 : vector<32x32xf32>
    %158 = vector.extract_strided_slice %145 {offsets = [0, 2], sizes = [32, 1], strides = [1, 1]} : vector<32x3xf32> to vector<32x1xf32>
    %159 = vector.extract_strided_slice %146 {offsets = [2, 0], sizes = [1, 32], strides = [1, 1]} : vector<3x32xf32> to vector<1x32xf32>
    %160 = vector.broadcast %158 : vector<32x1xf32> to vector<32x32xf32>
    %161 = vector.broadcast %159 : vector<1x32xf32> to vector<32x32xf32>
    %162 = arith.mulf %160, %161 : vector<32x32xf32>
    %163 = arith.addf %157, %162 : vector<32x32xf32>
    %c0_50 = arith.constant 0 : index
    %c1536 = arith.constant 1536 : index
    %164 = vector.load %arg7[%c0_50, %c1536] : memref<1x1792xf32, #tpu.memory_space<vmem>>, vector<1x32xf32>
    %165 = vector.broadcast %164 : vector<1x32xf32> to vector<32x32xf32>
    %166 = arith.addf %163, %165 : vector<32x32xf32>
    %cst_51 = arith.constant 5.000000e-01 : f32
    %167 = vector.broadcast %cst_51 : f32 to vector<32x32xf32>
    %168 = arith.mulf %167, %166 : vector<32x32xf32>
    %cst_52 = arith.constant 4.471500e-02 : f32
    %169 = vector.broadcast %cst_52 : f32 to vector<32x32xf32>
    %170 = arith.mulf %169, %166 : vector<32x32xf32>
    %171 = arith.mulf %170, %166 : vector<32x32xf32>
    %172 = arith.mulf %171, %166 : vector<32x32xf32>
    %173 = arith.addf %166, %172 : vector<32x32xf32>
    %cst_53 = arith.constant 0.797884583 : f32
    %174 = vector.broadcast %cst_53 : f32 to vector<32x32xf32>
    %175 = arith.mulf %174, %173 : vector<32x32xf32>
    %176 = math.tanh %175 : vector<32x32xf32>
    %cst_54 = arith.constant 1.000000e+00 : f32
    %177 = vector.broadcast %cst_54 : f32 to vector<32x32xf32>
    %178 = arith.addf %177, %176 : vector<32x32xf32>
    %179 = arith.mulf %168, %178 : vector<32x32xf32>
    %180 = tpu.concatenate %144, %179 in 1 : vector<32x256xf32>, vector<32x32xf32> -> vector<32x288xf32>
    %c0_55 = arith.constant 0 : index
    %c0_56 = arith.constant 0 : index
    %181 = vector.load %arg6[%c0_55, %c0_56] : memref<288x32xf32, #tpu.memory_space<vmem>>, vector<288x32xf32>
    %cst_57 = arith.constant dense<0.000000e+00> : vector<32x32xf32>
    %182 = tpu.matmul %180, %181, %cst_57 {dimension_numbers = #tpu.dot_dimension_numbers<[1], [0], [0], [1], [0, 0, 1, 1], [], []>} : vector<32x288xf32>, vector<288x32xf32>, vector<32x32xf32> -> vector<32x32xf32>
    %c0_58 = arith.constant 0 : index
    %c1664 = arith.constant 1664 : index
    %183 = vector.load %arg7[%c0_58, %c1664] : memref<1x1792xf32, #tpu.memory_space<vmem>>, vector<1x32xf32>
    %184 = vector.broadcast %183 : vector<1x32xf32> to vector<32x32xf32>
    %185 = arith.addf %182, %184 : vector<32x32xf32>
    %c0_59 = arith.constant 0 : index
    %c0_60 = arith.constant 0 : index
    %186 = vector.load %arg8[%c0_59, %c0_60] : memref<32x32xf32, #tpu.memory_space<vmem>>, vector<32x32xf32>
    tpu.vector_store %arg8[%c0_59, %c0_60], %185 {strides = array<i32>} : memref<32x32xf32, #tpu.memory_space<vmem>>, vector<32x32xf32>,
    return
  }
  func.func @transform_0(%arg0: i32) -> (i32, i32) {
    %c0_i32 = arith.constant 0 : i32
    %c0_i32_0 = arith.constant 0 : i32
    %c0_i32_1 = arith.constant 0 : i32
    return %c0_i32, %c0_i32_0 : i32, i32
  }
  func.func @transform_1(%arg0: i32) -> (i32, i32) {
    %c0_i32 = arith.constant 0 : i32
    %c0_i32_0 = arith.constant 0 : i32
    %c0_i32_1 = arith.constant 0 : i32
    return %c0_i32, %c0_i32_0 : i32, i32
  }
  func.func @transform_2(%arg0: i32) -> (i32, i32) {
    %c0_i32 = arith.constant 0 : i32
    %c0_i32_0 = arith.constant 0 : i32
    %c0_i32_1 = arith.constant 0 : i32
    return %c0_i32, %c0_i32_0 : i32, i32
  }
  func.func @transform_3(%arg0: i32) -> (i32, i32) {
    %c0_i32 = arith.constant 0 : i32
    %c0_i32_0 = arith.constant 0 : i32
    %c0_i32_1 = arith.constant 0 : i32
    return %c0_i32, %c0_i32_0 : i32, i32
  }
  func.func @transform_4(%arg0: i32) -> (i32, i32) {
    %c0_i32 = arith.constant 0 : i32
    %c0_i32_0 = arith.constant 0 : i32
    %c0_i32_1 = arith.constant 0 : i32
    return %c0_i32, %c0_i32_0 : i32, i32
  }
  func.func @transform_5(%arg0: i32) -> (i32, i32) {
    %c0_i32 = arith.constant 0 : i32
    %c0_i32_0 = arith.constant 0 : i32
    %c0_i32_1 = arith.constant 0 : i32
    return %c0_i32, %c0_i32_0 : i32, i32
  }
  func.func @transform_6(%arg0: i32) -> (i32, i32) {
    %c0_i32 = arith.constant 0 : i32
    %c0_i32_0 = arith.constant 0 : i32
    %c0_i32_1 = arith.constant 0 : i32
    return %c0_i32, %c0_i32_0 : i32, i32
  }
  func.func @transform_7(%arg0: i32) -> (i32, i32) {
    %c0_i32 = arith.constant 0 : i32
    %c0_i32_0 = arith.constant 0 : i32
    %c0_i32_1 = arith.constant 0 : i32
    return %c0_i32, %c0_i32_0 : i32, i32
  }
}

</mosaic_0001>

<llo_original>
// kernel: tpu_custom_call.1
$region0: #{tpu_custom_call.1}
  #allocation0 [shape = 'u32[]', space=smem, size = 0x4, offset = 0x4, fixed_abs, tag = 'smem constant byte address 0x4 - core index']
  #allocation1 [shape = 'u32[72,128]{1,0:T(1,128)}', space=vmem, size = 0x9000, scoped, tag = 'internal scratch']
  %s0 = inlined_call_operand.vmem [shape: f32[256,3], index: 0, kind: input, shape index: {}]
  %s1 = inlined_call_operand.vmem [shape: f32[32,3], index: 1, kind: input, shape index: {}]
  %s2 = inlined_call_operand.vmem [shape: f32[3,160], index: 2, kind: input, shape index: {}]
  %s3 = inlined_call_operand.vmem [shape: f32[64,128], index: 3, kind: input, shape index: {}]
  %s4 = inlined_call_operand.vmem [shape: f32[128,256], index: 4, kind: input, shape index: {}]
  %s5 = inlined_call_operand.vmem [shape: f32[288,32], index: 5, kind: input, shape index: {}]
  %s6 = inlined_call_operand.vmem [shape: f32[1,1792], index: 6, kind: input, shape index: {}]
  %s7 = inlined_call_operand.hbm [shape: f32[32,32], index: 7, kind: output, shape index: {}]
  %s8 = sld [smem:[#allocation0]]
  $region38: #{tpu_custom_call.1} parent=0
    _
  %s10 = ssub.s32 1, %s8
  %s11 = scalar_select 0, %s10, %s8
  $region1: #{tpu_custom_call.1} parent=0
    #allocation2 [shape = 'u8[16384]{0}', space=vmem, size = 0x4000, scoped, tag = 'output window, operand 0, single buffered']
    #allocation3 [shape = 's32[1]{0}', space=sflag, size = 0x4, scoped, tag = 'scoped memory for tpu_custom_call.1']
    %12 = vsyncpa [#allocation3], 0
    // Predicated region
    $region2: #{tpu_custom_call.1} parent=1 // pred_check
      _
    $region3: #{tpu_custom_call.1} parent=1 // pred_check_branch
      %14 = sbr.rel (0) target = $region5
    $region4: #{tpu_custom_call.1} parent=1 // pred_region
      _
    $region5: #{tpu_custom_call.1} parent=1 // pred_fallthru
      _
    // Predicated region
    $region6: #{tpu_custom_call.1} parent=1 // pred_check
      _
    $region7: #{tpu_custom_call.1} parent=1 // pred_check_branch
      %16 = sbr.rel (0) target = $region9
    $region8: #{tpu_custom_call.1} parent=1 // pred_region
      _
    $region9: #{tpu_custom_call.1} parent=1 // pred_fallthru
      _
    // Predicated region
    $region10: #{tpu_custom_call.1} parent=1 // pred_check
      _
    $region11: #{tpu_custom_call.1} parent=1 // pred_check_branch
      %18 = sbr.rel (0) target = $region13
    $region12: #{tpu_custom_call.1} parent=1 // pred_region
      _
    $region13: #{tpu_custom_call.1} parent=1 // pred_fallthru
      _
    // Predicated region
    $region14: #{tpu_custom_call.1} parent=1 // pred_check
      _
    $region15: #{tpu_custom_call.1} parent=1 // pred_check_branch
      %20 = sbr.rel (0) target = $region17
    $region16: #{tpu_custom_call.1} parent=1 // pred_region
      _
    $region17: #{tpu_custom_call.1} parent=1 // pred_fallthru
      _
    // Predicated region
    $region18: #{tpu_custom_call.1} parent=1 // pred_check
      _
    $region19: #{tpu_custom_call.1} parent=1 // pred_check_branch
      %22 = sbr.rel (0) target = $region21
    $region20: #{tpu_custom_call.1} parent=1 // pred_region
      _
    $region21: #{tpu_custom_call.1} parent=1 // pred_fallthru
      _
    // Predicated region
    $region22: #{tpu_custom_call.1} parent=1 // pred_check
      _
    $region23: #{tpu_custom_call.1} parent=1 // pred_check_branch
      %24 = sbr.rel (0) target = $region25
    $region24: #{tpu_custom_call.1} parent=1 // pred_region
      _
    $region25: #{tpu_custom_call.1} parent=1 // pred_fallthru
      _
    // Predicated region
    $region26: #{tpu_custom_call.1} parent=1 // pred_check
      _
    $region27: #{tpu_custom_call.1} parent=1 // pred_check_branch
      %26 = sbr.rel (0) target = $region29
    $region28: #{tpu_custom_call.1} parent=1 // pred_region
      _
    $region29: #{tpu_custom_call.1} parent=1 // pred_fallthru
      _
    %v27 = vld [vmem:[%s0] sm:$0xff]
    %v28 = vld [vmem:[%s0 + $0x8] sm:$0xff]
    %v29 = vld [vmem:[%s0 + $0x10] sm:$0xff]
    %v30 = vld [vmem:[%s0 + $0x18] sm:$0xff]
    %v31 = vld [vmem:[%s0 + $0x20] sm:$0xff]
    %v32 = vld [vmem:[%s0 + $0x28] sm:$0xff]
    %v33 = vld [vmem:[%s0 + $0x30] sm:$0xff]
    %v34 = vld [vmem:[%s0 + $0x38] sm:$0xff]
    %v35 = vld [vmem:[%s0 + $0x40] sm:$0xff]
    %v36 = vld [vmem:[%s0 + $0x48] sm:$0xff]
    %v37 = vld [vmem:[%s0 + $0x50] sm:$0xff]
    %v38 = vld [vmem:[%s0 + $0x58] sm:$0xff]
    %v39 = vld [vmem:[%s0 + $0x60] sm:$0xff]
    %v40 = vld [vmem:[%s0 + $0x68] sm:$0xff]
    %v41 = vld [vmem:[%s0 + $0x70] sm:$0xff]
    %v42 = vld [vmem:[%s0 + $0x78] sm:$0xff]
    %v43 = vld [vmem:[%s0 + $0x80] sm:$0xff]
    %v44 = vld [vmem:[%s0 + $0x88] sm:$0xff]
    %v45 = vld [vmem:[%s0 + $0x90] sm:$0xff]
    %v46 = vld [vmem:[%s0 + $0x98] sm:$0xff]
    %v47 = vld [vmem:[%s0 + $0xa0] sm:$0xff]
    %v48 = vld [vmem:[%s0 + $0xa8] sm:$0xff]
    %v49 = vld [vmem:[%s0 + $0xb0] sm:$0xff]
    %v50 = vld [vmem:[%s0 + $0xb8] sm:$0xff]
    %v51 = vld [vmem:[%s0 + $0xc0] sm:$0xff]
    %v52 = vld [vmem:[%s0 + $0xc8] sm:$0xff]
    %v53 = vld [vmem:[%s0 + $0xd0] sm:$0xff]
    %v54 = vld [vmem:[%s0 + $0xd8] sm:$0xff]
    %v55 = vld [vmem:[%s0 + $0xe0] sm:$0xff]
    %v56 = vld [vmem:[%s0 + $0xe8] sm:$0xff]
    %v57 = vld [vmem:[%s0 + $0xf0] sm:$0xff]
    %v58 = vld [vmem:[%s0 + $0xf8] sm:$0xff]
    %v59 = vld [vmem:[%s2] sm:$0x7]
    %61 = vset.pattern.permute.xlu0 0
    %62 = vperm.xlu0 %61, %v27
    %v63 = vpop.permute.xlu0 %62
    %66 = vset.pattern.permute.xlu0 0
    %67 = vperm.xlu0 %66, %v28
    %v68 = vpop.permute.xlu0 %67
    %71 = vset.pattern.permute.xlu0 0
    %72 = vperm.xlu0 %71, %v29
    %v73 = vpop.permute.xlu0 %72
    %76 = vset.pattern.permute.xlu0 0
    %77 = vperm.xlu0 %76, %v30
    %v78 = vpop.permute.xlu0 %77
    %81 = vset.pattern.permute.xlu0 0
    %82 = vperm.xlu0 %81, %v31
    %v83 = vpop.permute.xlu0 %82
    %86 = vset.pattern.permute.xlu0 0
    %87 = vperm.xlu0 %86, %v32
    %v88 = vpop.permute.xlu0 %87
    %91 = vset.pattern.permute.xlu0 0
    %92 = vperm.xlu0 %91, %v33
    %v93 = vpop.permute.xlu0 %92
    %96 = vset.pattern.permute.xlu0 0
    %97 = vperm.xlu0 %96, %v34
    %v98 = vpop.permute.xlu0 %97
    %101 = vset.pattern.permute.xlu0 0
    %102 = vperm.xlu0 %101, %v35
    %v103 = vpop.permute.xlu0 %102
    %106 = vset.pattern.permute.xlu0 0
    %107 = vperm.xlu0 %106, %v36
    %v108 = vpop.permute.xlu0 %107
    %111 = vset.pattern.permute.xlu0 0
    %112 = vperm.xlu0 %111, %v37
    %v113 = vpop.permute.xlu0 %112
    %116 = vset.pattern.permute.xlu0 0
    %117 = vperm.xlu0 %116, %v38
    %v118 = vpop.permute.xlu0 %117
    %121 = vset.pattern.permute.xlu0 0
    %122 = vperm.xlu0 %121, %v39
    %v123 = vpop.permute.xlu0 %122
    %126 = vset.pattern.permute.xlu0 0
    %127 = vperm.xlu0 %126, %v40
    %v128 = vpop.permute.xlu0 %127
    %131 = vset.pattern.permute.xlu0 0
    %132 = vperm.xlu0 %131, %v41
    %v133 = vpop.permute.xlu0 %132
    %136 = vset.pattern.permute.xlu0 0
    %137 = vperm.xlu0 %136, %v42
    %v138 = vpop.permute.xlu0 %137
    %141 = vset.pattern.permute.xlu0 0
    %142 = vperm.xlu0 %141, %v43
    %v143 = vpop.permute.xlu0 %142
    %146 = vset.pattern.permute.xlu0 0
    %147 = vperm.xlu0 %146, %v44
    %v148 = vpop.permute.xlu0 %147
    %151 = vset.pattern.permute.xlu0 0
    %152 = vperm.xlu0 %151, %v45
    %v153 = vpop.permute.xlu0 %152
    %156 = vset.pattern.permute.xlu0 0
    %157 = vperm.xlu0 %156, %v46
    %v158 = vpop.permute.xlu0 %157
    %161 = vset.pattern.permute.xlu0 0
    %162 = vperm.xlu0 %161, %v47
    %v163 = vpop.permute.xlu0 %162
    %166 = vset.pattern.permute.xlu0 0
    %167 = vperm.xlu0 %166, %v48
    %v168 = vpop.permute.xlu0 %167
    %171 = vset.pattern.permute.xlu0 0
    %172 = vperm.xlu0 %171, %v49
    %v173 = vpop.permute.xlu0 %172
    %176 = vset.pattern.permute.xlu0 0
    %177 = vperm.xlu0 %176, %v50
    %v178 = vpop.permute.xlu0 %177
    %181 = vset.pattern.permute.xlu0 0
    %182 = vperm.xlu0 %181, %v51
    %v183 = vpop.permute.xlu0 %182
    %186 = vset.pattern.permute.xlu0 0
    %187 = vperm.xlu0 %186, %v52
    %v188 = vpop.permute.xlu0 %187
    %191 = vset.pattern.permute.xlu0 0
    %192 = vperm.xlu0 %191, %v53
    %v193 = vpop.permute.xlu0 %192
    %196 = vset.pattern.permute.xlu0 0
    %197 = vperm.xlu0 %196, %v54
    %v198 = vpop.permute.xlu0 %197
    %201 = vset.pattern.permute.xlu0 0
    %202 = vperm.xlu0 %201, %v55
    %v203 = vpop.permute.xlu0 %202
    %206 = vset.pattern.permute.xlu0 0
    %207 = vperm.xlu0 %206, %v56
    %v208 = vpop.permute.xlu0 %207
    %211 = vset.pattern.permute.xlu0 0
    %212 = vperm.xlu0 %211, %v57
    %v213 = vpop.permute.xlu0 %212
    %216 = vset.pattern.permute.xlu0 0
    %217 = vperm.xlu0 %216, %v58
    %v218 = vpop.permute.xlu0 %217
    %v220 = vperm.slane %v59, 0
    %v221 = vmul.f32 %v63, %v220
    %v222 = vmul.f32 %v68, %v220
    %v223 = vmul.f32 %v73, %v220
    %v224 = vmul.f32 %v78, %v220
    %v225 = vmul.f32 %v83, %v220
    %v226 = vmul.f32 %v88, %v220
    %v227 = vmul.f32 %v93, %v220
    %v228 = vmul.f32 %v98, %v220
    %v229 = vmul.f32 %v103, %v220
    %v230 = vmul.f32 %v108, %v220
    %v231 = vmul.f32 %v113, %v220
    %v232 = vmul.f32 %v118, %v220
    %v233 = vmul.f32 %v123, %v220
    %v234 = vmul.f32 %v128, %v220
    %v235 = vmul.f32 %v133, %v220
    %v236 = vmul.f32 %v138, %v220
    %v237 = vmul.f32 %v143, %v220
    %v238 = vmul.f32 %v148, %v220
    %v239 = vmul.f32 %v153, %v220
    %v240 = vmul.f32 %v158, %v220
    %v241 = vmul.f32 %v163, %v220
    %v242 = vmul.f32 %v168, %v220
    %v243 = vmul.f32 %v173, %v220
    %v244 = vmul.f32 %v178, %v220
    %v245 = vmul.f32 %v183, %v220
    %v246 = vmul.f32 %v188, %v220
    %v247 = vmul.f32 %v193, %v220
    %v248 = vmul.f32 %v198, %v220
    %v249 = vmul.f32 %v203, %v220
    %v250 = vmul.f32 %v208, %v220
    %v251 = vmul.f32 %v213, %v220
    %v252 = vmul.f32 %v218, %v220
    %253 = vset.pattern.permute.xlu0 1
    %254 = vperm.xlu0 %253, %v27
    %v255 = vpop.permute.xlu0 %254
    %257 = vset.pattern.permute.xlu0 1
    %258 = vperm.xlu0 %257, %v28
    %v259 = vpop.permute.xlu0 %258
    %261 = vset.pattern.permute.xlu0 1
    %262 = vperm.xlu0 %261, %v29
    %v263 = vpop.permute.xlu0 %262
    %265 = vset.pattern.permute.xlu0 1
    %266 = vperm.xlu0 %265, %v30
    %v267 = vpop.permute.xlu0 %266
    %269 = vset.pattern.permute.xlu0 1
    %270 = vperm.xlu0 %269, %v31
    %v271 = vpop.permute.xlu0 %270
    %273 = vset.pattern.permute.xlu0 1
    %274 = vperm.xlu0 %273, %v32
    %v275 = vpop.permute.xlu0 %274
    %277 = vset.pattern.permute.xlu0 1
    %278 = vperm.xlu0 %277, %v33
    %v279 = vpop.permute.xlu0 %278
    %281 = vset.pattern.permute.xlu0 1
    %282 = vperm.xlu0 %281, %v34
    %v283 = vpop.permute.xlu0 %282
    %285 = vset.pattern.permute.xlu0 1
    %286 = vperm.xlu0 %285, %v35
    %v287 = vpop.permute.xlu0 %286
    %289 = vset.pattern.permute.xlu0 1
    %290 = vperm.xlu0 %289, %v36
    %v291 = vpop.permute.xlu0 %290
    %293 = vset.pattern.permute.xlu0 1
    %294 = vperm.xlu0 %293, %v37
    %v295 = vpop.permute.xlu0 %294
    %297 = vset.pattern.permute.xlu0 1
    %298 = vperm.xlu0 %297, %v38
    %v299 = vpop.permute.xlu0 %298
    %301 = vset.pattern.permute.xlu0 1
    %302 = vperm.xlu0 %301, %v39
    %v303 = vpop.permute.xlu0 %302
    %305 = vset.pattern.permute.xlu0 1
    %306 = vperm.xlu0 %305, %v40
    %v307 = vpop.permute.xlu0 %306
    %309 = vset.pattern.permute.xlu0 1
    %310 = vperm.xlu0 %309, %v41
    %v311 = vpop.permute.xlu0 %310
    %313 = vset.pattern.permute.xlu0 1
    %314 = vperm.xlu0 %313, %v42
    %v315 = vpop.permute.xlu0 %314
    %317 = vset.pattern.permute.xlu0 1
    %318 = vperm.xlu0 %317, %v43
    %v319 = vpop.permute.xlu0 %318
    %321 = vset.pattern.permute.xlu0 1
    %322 = vperm.xlu0 %321, %v44
    %v323 = vpop.permute.xlu0 %322
    %325 = vset.pattern.permute.xlu0 1
    %326 = vperm.xlu0 %325, %v45
    %v327 = vpop.permute.xlu0 %326
    %329 = vset.pattern.permute.xlu0 1
    %330 = vperm.xlu0 %329, %v46
    %v331 = vpop.permute.xlu0 %330
    %333 = vset.pattern.permute.xlu0 1
    %334 = vperm.xlu0 %333, %v47
    %v335 = vpop.permute.xlu0 %334
    %337 = vset.pattern.permute.xlu0 1
    %338 = vperm.xlu0 %337, %v48
    %v339 = vpop.permute.xlu0 %338
    %341 = vset.pattern.permute.xlu0 1
    %342 = vperm.xlu0 %341, %v49
    %v343 = vpop.permute.xlu0 %342
    %345 = vset.pattern.permute.xlu0 1
    %346 = vperm.xlu0 %345, %v50
    %v347 = vpop.permute.xlu0 %346
    %349 = vset.pattern.permute.xlu0 1
    %350 = vperm.xlu0 %349, %v51
    %v351 = vpop.permute.xlu0 %350
    %353 = vset.pattern.permute.xlu0 1
    %354 = vperm.xlu0 %353, %v52
    %v355 = vpop.permute.xlu0 %354
    %357 = vset.pattern.permute.xlu0 1
    %358 = vperm.xlu0 %357, %v53
    %v359 = vpop.permute.xlu0 %358
    %361 = vset.pattern.permute.xlu0 1
    %362 = vperm.xlu0 %361, %v54
    %v363 = vpop.permute.xlu0 %362
    %365 = vset.pattern.permute.xlu0 1
    %366 = vperm.xlu0 %365, %v55
    %v367 = vpop.permute.xlu0 %366
    %369 = vset.pattern.permute.xlu0 1
    %370 = vperm.xlu0 %369, %v56
    %v371 = vpop.permute.xlu0 %370
    %373 = vset.pattern.permute.xlu0 1
    %374 = vperm.xlu0 %373, %v57
    %v375 = vpop.permute.xlu0 %374
    %377 = vset.pattern.permute.xlu0 1
    %378 = vperm.xlu0 %377, %v58
    %v379 = vpop.permute.xlu0 %378
    %v381 = vperm.slane %v59, 1
    %v382 = vmul.f32 %v255, %v381
    %v383 = vmul.f32 %v259, %v381
    %v384 = vmul.f32 %v263, %v381
    %v385 = vmul.f32 %v267, %v381
    %v386 = vmul.f32 %v271, %v381
    %v387 = vmul.f32 %v275, %v381
    %v388 = vmul.f32 %v279, %v381
    %v389 = vmul.f32 %v283, %v381
    %v390 = vmul.f32 %v287, %v381
    %v391 = vmul.f32 %v291, %v381
    %v392 = vmul.f32 %v295, %v381
    %v393 = vmul.f32 %v299, %v381
    %v394 = vmul.f32 %v303, %v381
    %v395 = vmul.f32 %v307, %v381
    %v396 = vmul.f32 %v311, %v381
    %v397 = vmul.f32 %v315, %v381
    %v398 = vmul.f32 %v319, %v381
    %v399 = vmul.f32 %v323, %v381
    %v400 = vmul.f32 %v327, %v381
    %v401 = vmul.f32 %v331, %v381
    %v402 = vmul.f32 %v335, %v381
    %v403 = vmul.f32 %v339, %v381
    %v404 = vmul.f32 %v343, %v381
    %v405 = vmul.f32 %v347, %v381
    %v406 = vmul.f32 %v351, %v381
    %v407 = vmul.f32 %v355, %v381
    %v408 = vmul.f32 %v359, %v381
    %v409 = vmul.f32 %v363, %v381
    %v410 = vmul.f32 %v367, %v381
    %v411 = vmul.f32 %v371, %v381
    %v412 = vmul.f32 %v375, %v381
    %v413 = vmul.f32 %v379, %v381
    %v414 = vadd.f32 %v221, %v382
    %v415 = vadd.f32 %v222, %v383
    %v416 = vadd.f32 %v223, %v384
    %v417 = vadd.f32 %v224, %v385
    %v418 = vadd.f32 %v225, %v386
    %v419 = vadd.f32 %v226, %v387
    %v420 = vadd.f32 %v227, %v388
    %v421 = vadd.f32 %v228, %v389
    %v422 = vadd.f32 %v229, %v390
    %v423 = vadd.f32 %v230, %v391
    %v424 = vadd.f32 %v231, %v392
    %v425 = vadd.f32 %v232, %v393
    %v426 = vadd.f32 %v233, %v394
    %v427 = vadd.f32 %v234, %v395
    %v428 = vadd.f32 %v235, %v396
    %v429 = vadd.f32 %v236, %v397
    %v430 = vadd.f32 %v237, %v398
    %v431 = vadd.f32 %v238, %v399
    %v432 = vadd.f32 %v239, %v400
    %v433 = vadd.f32 %v240, %v401
    %v434 = vadd.f32 %v241, %v402
    %v435 = vadd.f32 %v242, %v403
    %v436 = vadd.f32 %v243, %v404
    %v437 = vadd.f32 %v244, %v405
    %v438 = vadd.f32 %v245, %v406
    %v439 = vadd.f32 %v246, %v407
    %v440 = vadd.f32 %v247, %v408
    %v441 = vadd.f32 %v248, %v409
    %v442 = vadd.f32 %v249, %v410
    %v443 = vadd.f32 %v250, %v411
    %v444 = vadd.f32 %v251, %v412
    %v445 = vadd.f32 %v252, %v413
    %446 = vset.pattern.permute.xlu0 2
    %447 = vperm.xlu0 %446, %v27
    %v448 = vpop.permute.xlu0 %447
    %450 = vset.pattern.permute.xlu0 2
    %451 = vperm.xlu0 %450, %v28
    %v452 = vpop.permute.xlu0 %451
    %454 = vset.pattern.permute.xlu0 2
    %455 = vperm.xlu0 %454, %v29
    %v456 = vpop.permute.xlu0 %455
    %458 = vset.pattern.permute.xlu0 2
    %459 = vperm.xlu0 %458, %v30
    %v460 = vpop.permute.xlu0 %459
    %462 = vset.pattern.permute.xlu0 2
    %463 = vperm.xlu0 %462, %v31
    %v464 = vpop.permute.xlu0 %463
    %466 = vset.pattern.permute.xlu0 2
    %467 = vperm.xlu0 %466, %v32
    %v468 = vpop.permute.xlu0 %467
    %470 = vset.pattern.permute.xlu0 2
    %471 = vperm.xlu0 %470, %v33
    %v472 = vpop.permute.xlu0 %471
    %474 = vset.pattern.permute.xlu0 2
    %475 = vperm.xlu0 %474, %v34
    %v476 = vpop.permute.xlu0 %475
    %478 = vset.pattern.permute.xlu0 2
    %479 = vperm.xlu0 %478, %v35
    %v480 = vpop.permute.xlu0 %479
    %482 = vset.pattern.permute.xlu0 2
    %483 = vperm.xlu0 %482, %v36
    %v484 = vpop.permute.xlu0 %483
    %486 = vset.pattern.permute.xlu0 2
    %487 = vperm.xlu0 %486, %v37
    %v488 = vpop.permute.xlu0 %487
    %490 = vset.pattern.permute.xlu0 2
    %491 = vperm.xlu0 %490, %v38
    %v492 = vpop.permute.xlu0 %491
    %494 = vset.pattern.permute.xlu0 2
    %495 = vperm.xlu0 %494, %v39
    %v496 = vpop.permute.xlu0 %495
    %498 = vset.pattern.permute.xlu0 2
    %499 = vperm.xlu0 %498, %v40
    %v500 = vpop.permute.xlu0 %499
    %502 = vset.pattern.permute.xlu0 2
    %503 = vperm.xlu0 %502, %v41
    %v504 = vpop.permute.xlu0 %503
    %506 = vset.pattern.permute.xlu0 2
    %507 = vperm.xlu0 %506, %v42
    %v508 = vpop.permute.xlu0 %507
    %510 = vset.pattern.permute.xlu0 2
    %511 = vperm.xlu0 %510, %v43
    %v512 = vpop.permute.xlu0 %511
    %514 = vset.pattern.permute.xlu0 2
    %515 = vperm.xlu0 %514, %v44
    %v516 = vpop.permute.xlu0 %515
    %518 = vset.pattern.permute.xlu0 2
    %519 = vperm.xlu0 %518, %v45
    %v520 = vpop.permute.xlu0 %519
    %522 = vset.pattern.permute.xlu0 2
    %523 = vperm.xlu0 %522, %v46
    %v524 = vpop.permute.xlu0 %523
    %526 = vset.pattern.permute.xlu0 2
    %527 = vperm.xlu0 %526, %v47
    %v528 = vpop.permute.xlu0 %527
    %530 = vset.pattern.permute.xlu0 2
    %531 = vperm.xlu0 %530, %v48
    %v532 = vpop.permute.xlu0 %531
    %534 = vset.pattern.permute.xlu0 2
    %535 = vperm.xlu0 %534, %v49
    %v536 = vpop.permute.xlu0 %535
    %538 = vset.pattern.permute.xlu0 2
    %539 = vperm.xlu0 %538, %v50
    %v540 = vpop.permute.xlu0 %539
    %542 = vset.pattern.permute.xlu0 2
    %543 = vperm.xlu0 %542, %v51
    %v544 = vpop.permute.xlu0 %543
    %546 = vset.pattern.permute.xlu0 2
    %547 = vperm.xlu0 %546, %v52
    %v548 = vpop.permute.xlu0 %547
    %550 = vset.pattern.permute.xlu0 2
    %551 = vperm.xlu0 %550, %v53
    %v552 = vpop.permute.xlu0 %551
    %554 = vset.pattern.permute.xlu0 2
    %555 = vperm.xlu0 %554, %v54
    %v556 = vpop.permute.xlu0 %555
    %558 = vset.pattern.permute.xlu0 2
    %559 = vperm.xlu0 %558, %v55
    %v560 = vpop.permute.xlu0 %559
    %562 = vset.pattern.permute.xlu0 2
    %563 = vperm.xlu0 %562, %v56
    %v564 = vpop.permute.xlu0 %563
    %566 = vset.pattern.permute.xlu0 2
    %567 = vperm.xlu0 %566, %v57
    %v568 = vpop.permute.xlu0 %567
    %570 = vset.pattern.permute.xlu0 2
    %571 = vperm.xlu0 %570, %v58
    %v572 = vpop.permute.xlu0 %571
    %v574 = vperm.slane %v59, 2
    %v575 = vmul.f32 %v448, %v574
    %v576 = vmul.f32 %v452, %v574
    %v577 = vmul.f32 %v456, %v574
    %v578 = vmul.f32 %v460, %v574
    %v579 = vmul.f32 %v464, %v574
    %v580 = vmul.f32 %v468, %v574
    %v581 = vmul.f32 %v472, %v574
    %v582 = vmul.f32 %v476, %v574
    %v583 = vmul.f32 %v480, %v574
    %v584 = vmul.f32 %v484, %v574
    %v585 = vmul.f32 %v488, %v574
    %v586 = vmul.f32 %v492, %v574
    %v587 = vmul.f32 %v496, %v574
    %v588 = vmul.f32 %v500, %v574
    %v589 = vmul.f32 %v504, %v574
    %v590 = vmul.f32 %v508, %v574
    %v591 = vmul.f32 %v512, %v574
    %v592 = vmul.f32 %v516, %v574
    %v593 = vmul.f32 %v520, %v574
    %v594 = vmul.f32 %v524, %v574
    %v595 = vmul.f32 %v528, %v574
    %v596 = vmul.f32 %v532, %v574
    %v597 = vmul.f32 %v536, %v574
    %v598 = vmul.f32 %v540, %v574
    %v599 = vmul.f32 %v544, %v574
    %v600 = vmul.f32 %v548, %v574
    %v601 = vmul.f32 %v552, %v574
    %v602 = vmul.f32 %v556, %v574
    %v603 = vmul.f32 %v560, %v574
    %v604 = vmul.f32 %v564, %v574
    %v605 = vmul.f32 %v568, %v574
    %v606 = vmul.f32 %v572, %v574
    %v607 = vadd.f32 %v414, %v575
    %v608 = vadd.f32 %v415, %v576
    %v609 = vadd.f32 %v416, %v577
    %v610 = vadd.f32 %v417, %v578
    %v611 = vadd.f32 %v418, %v579
    %v612 = vadd.f32 %v419, %v580
    %v613 = vadd.f32 %v420, %v581
    %v614 = vadd.f32 %v421, %v582
    %v615 = vadd.f32 %v422, %v583
    %v616 = vadd.f32 %v423, %v584
    %v617 = vadd.f32 %v424, %v585
    %v618 = vadd.f32 %v425, %v586
    %v619 = vadd.f32 %v426, %v587
    %v620 = vadd.f32 %v427, %v588
    %v621 = vadd.f32 %v428, %v589
    %v622 = vadd.f32 %v429, %v590
    %v623 = vadd.f32 %v430, %v591
    %v624 = vadd.f32 %v431, %v592
    %v625 = vadd.f32 %v432, %v593
    %v626 = vadd.f32 %v433, %v594
    %v627 = vadd.f32 %v434, %v595
    %v628 = vadd.f32 %v435, %v596
    %v629 = vadd.f32 %v436, %v597
    %v630 = vadd.f32 %v437, %v598
    %v631 = vadd.f32 %v438, %v599
    %v632 = vadd.f32 %v439, %v600
    %v633 = vadd.f32 %v440, %v601
    %v634 = vadd.f32 %v441, %v602
    %v635 = vadd.f32 %v442, %v603
    %v636 = vadd.f32 %v443, %v604
    %v637 = vadd.f32 %v444, %v605
    %v638 = vadd.f32 %v445, %v606
    %v639 = vld [vmem:[%s6] sm:$0x1]
    %v641 = vperm.slane %v639, 0
    %v643 = vadd.f32 %v607, %v641
    %v644 = vadd.f32 %v608, %v641
    %v645 = vadd.f32 %v609, %v641
    %v646 = vadd.f32 %v610, %v641
    %v647 = vadd.f32 %v611, %v641
    %v648 = vadd.f32 %v612, %v641
    %v649 = vadd.f32 %v613, %v641
    %v650 = vadd.f32 %v614, %v641
    %v651 = vadd.f32 %v615, %v641
    %v652 = vadd.f32 %v616, %v641
    %v653 = vadd.f32 %v617, %v641
    %v654 = vadd.f32 %v618, %v641
    %v655 = vadd.f32 %v619, %v641
    %v656 = vadd.f32 %v620, %v641
    %v657 = vadd.f32 %v621, %v641
    %v658 = vadd.f32 %v622, %v641
    %v659 = vadd.f32 %v623, %v641
    %v660 = vadd.f32 %v624, %v641
    %v661 = vadd.f32 %v625, %v641
    %v662 = vadd.f32 %v626, %v641
    %v663 = vadd.f32 %v627, %v641
    %v664 = vadd.f32 %v628, %v641
    %v665 = vadd.f32 %v629, %v641
    %v666 = vadd.f32 %v630, %v641
    %v667 = vadd.f32 %v631, %v641
    %v668 = vadd.f32 %v632, %v641
    %v669 = vadd.f32 %v633, %v641
    %v670 = vadd.f32 %v634, %v641
    %v671 = vadd.f32 %v635, %v641
    %v672 = vadd.f32 %v636, %v641
    %v673 = vadd.f32 %v637, %v641
    %v674 = vadd.f32 %v638, %v641
    %v675 = vld [vmem:[%s6 + $0x1] sm:$0x1]
    %v676 = vld [vmem:[%s6 + $0x2] sm:$0x1]
    %vm677 = vcmask 523264
    %v678 = vsel %vm677, %v643, 0.0
    %679 = vadd.xlane.f32.xlu0 %v678
    %v680 = vpop.xlane.xlu0 %679
    %v681 = vsel %vm677, %v644, 0.0
    %682 = vadd.xlane.f32.xlu0 %v681
    %v683 = vpop.xlane.xlu0 %682
    %v684 = vsel %vm677, %v645, 0.0
    %685 = vadd.xlane.f32.xlu0 %v684
    %v686 = vpop.xlane.xlu0 %685
    %v687 = vsel %vm677, %v646, 0.0
    %688 = vadd.xlane.f32.xlu0 %v687
    %v689 = vpop.xlane.xlu0 %688
    %v690 = vsel %vm677, %v647, 0.0
    %691 = vadd.xlane.f32.xlu0 %v690
    %v692 = vpop.xlane.xlu0 %691
    %v693 = vsel %vm677, %v648, 0.0
    %694 = vadd.xlane.f32.xlu0 %v693
    %v695 = vpop.xlane.xlu0 %694
    %v696 = vsel %vm677, %v649, 0.0
    %697 = vadd.xlane.f32.xlu0 %v696
    %v698 = vpop.xlane.xlu0 %697
    %v699 = vsel %vm677, %v650, 0.0
    %700 = vadd.xlane.f32.xlu0 %v699
    %v701 = vpop.xlane.xlu0 %700
    %v702 = vsel %vm677, %v651, 0.0
    %703 = vadd.xlane.f32.xlu0 %v702
    %v704 = vpop.xlane.xlu0 %703
    %v705 = vsel %vm677, %v652, 0.0
    %706 = vadd.xlane.f32.xlu0 %v705
    %v707 = vpop.xlane.xlu0 %706
    %v708 = vsel %vm677, %v653, 0.0
    %709 = vadd.xlane.f32.xlu0 %v708
    %v710 = vpop.xlane.xlu0 %709
    %v711 = vsel %vm677, %v654, 0.0
    %712 = vadd.xlane.f32.xlu0 %v711
    %v713 = vpop.xlane.xlu0 %712
    %v714 = vsel %vm677, %v655, 0.0
    %715 = vadd.xlane.f32.xlu0 %v714
    %v716 = vpop.xlane.xlu0 %715
    %v717 = vsel %vm677, %v656, 0.0
    %718 = vadd.xlane.f32.xlu0 %v717
    %v719 = vpop.xlane.xlu0 %718
    %v720 = vsel %vm677, %v657, 0.0
    %721 = vadd.xlane.f32.xlu0 %v720
    %v722 = vpop.xlane.xlu0 %721
    %v723 = vsel %vm677, %v658, 0.0
    %724 = vadd.xlane.f32.xlu0 %v723
    %v725 = vpop.xlane.xlu0 %724
    %v726 = vsel %vm677, %v659, 0.0
    %727 = vadd.xlane.f32.xlu0 %v726
    %v728 = vpop.xlane.xlu0 %727
    %v729 = vsel %vm677, %v660, 0.0
    %730 = vadd.xlane.f32.xlu0 %v729
    %v731 = vpop.xlane.xlu0 %730
    %v732 = vsel %vm677, %v661, 0.0
    %733 = vadd.xlane.f32.xlu0 %v732
    %v734 = vpop.xlane.xlu0 %733
    %v735 = vsel %vm677, %v662, 0.0
    %736 = vadd.xlane.f32.xlu0 %v735
    %v737 = vpop.xlane.xlu0 %736
    %v738 = vsel %vm677, %v663, 0.0
    %739 = vadd.xlane.f32.xlu0 %v738
    %v740 = vpop.xlane.xlu0 %739
    %v741 = vsel %vm677, %v664, 0.0
    %742 = vadd.xlane.f32.xlu0 %v741
    %v743 = vpop.xlane.xlu0 %742
    %v744 = vsel %vm677, %v665, 0.0
    %745 = vadd.xlane.f32.xlu0 %v744
    %v746 = vpop.xlane.xlu0 %745
    %v747 = vsel %vm677, %v666, 0.0
    %748 = vadd.xlane.f32.xlu0 %v747
    %v749 = vpop.xlane.xlu0 %748
    %v750 = vsel %vm677, %v667, 0.0
    %751 = vadd.xlane.f32.xlu0 %v750
    %v752 = vpop.xlane.xlu0 %751
    %v753 = vsel %vm677, %v668, 0.0
    %754 = vadd.xlane.f32.xlu0 %v753
    %v755 = vpop.xlane.xlu0 %754
    %v756 = vsel %vm677, %v669, 0.0
    %757 = vadd.xlane.f32.xlu0 %v756
    %v758 = vpop.xlane.xlu0 %757
    %v759 = vsel %vm677, %v670, 0.0
    %760 = vadd.xlane.f32.xlu0 %v759
    %v761 = vpop.xlane.xlu0 %760
    %v762 = vsel %vm677, %v671, 0.0
    %763 = vadd.xlane.f32.xlu0 %v762
    %v764 = vpop.xlane.xlu0 %763
    %v765 = vsel %vm677, %v672, 0.0
    %766 = vadd.xlane.f32.xlu0 %v765
    %v767 = vpop.xlane.xlu0 %766
    %v768 = vsel %vm677, %v673, 0.0
    %769 = vadd.xlane.f32.xlu0 %v768
    %v770 = vpop.xlane.xlu0 %769
    %v771 = vsel %vm677, %v674, 0.0
    %772 = vadd.xlane.f32.xlu0 %v771
    %v773 = vpop.xlane.xlu0 %772
    %v774 = vrcp.pop 64.0
    %v775 = vmul.f32 64.0, %v774
    %v776 = vsub.f32 1.0, %v775
    %v777 = vmul.f32 %v774, %v776
    %v778 = vadd.f32 %v774, %v777
    %vm779 = vweird.f32 %v774
    %v780 = vsel %vm779, %v774, %v778
    %v781 = vmul.f32 %v680, %v780
    %v782 = vmul.f32 %v683, %v780
    %v783 = vmul.f32 %v686, %v780
    %v784 = vmul.f32 %v689, %v780
    %v785 = vmul.f32 %v692, %v780
    %v786 = vmul.f32 %v695, %v780
    %v787 = vmul.f32 %v698, %v780
    %v788 = vmul.f32 %v701, %v780
    %v789 = vmul.f32 %v704, %v780
    %v790 = vmul.f32 %v707, %v780
    %v791 = vmul.f32 %v710, %v780
    %v792 = vmul.f32 %v713, %v780
    %v793 = vmul.f32 %v716, %v780
    %v794 = vmul.f32 %v719, %v780
    %v795 = vmul.f32 %v722, %v780
    %v796 = vmul.f32 %v725, %v780
    %v797 = vmul.f32 %v728, %v780
    %v798 = vmul.f32 %v731, %v780
    %v799 = vmul.f32 %v734, %v780
    %v800 = vmul.f32 %v737, %v780
    %v801 = vmul.f32 %v740, %v780
    %v802 = vmul.f32 %v743, %v780
    %v803 = vmul.f32 %v746, %v780
    %v804 = vmul.f32 %v749, %v780
    %v805 = vmul.f32 %v752, %v780
    %v806 = vmul.f32 %v755, %v780
    %v807 = vmul.f32 %v758, %v780
    %v808 = vmul.f32 %v761, %v780
    %v809 = vmul.f32 %v764, %v780
    %v810 = vmul.f32 %v767, %v780
    %v811 = vmul.f32 %v770, %v780
    %v812 = vmul.f32 %v773, %v780
    %v813 = vsub.f32 %v643, %v781
    %v814 = vsub.f32 %v644, %v782
    %v815 = vsub.f32 %v645, %v783
    %v816 = vsub.f32 %v646, %v784
    %v817 = vsub.f32 %v647, %v785
    %v818 = vsub.f32 %v648, %v786
    %v819 = vsub.f32 %v649, %v787
    %v820 = vsub.f32 %v650, %v788
    %v821 = vsub.f32 %v651, %v789
    %v822 = vsub.f32 %v652, %v790
    %v823 = vsub.f32 %v653, %v791
    %v824 = vsub.f32 %v654, %v792
    %v825 = vsub.f32 %v655, %v793
    %v826 = vsub.f32 %v656, %v794
    %v827 = vsub.f32 %v657, %v795
    %v828 = vsub.f32 %v658, %v796
    %v829 = vsub.f32 %v659, %v797
    %v830 = vsub.f32 %v660, %v798
    %v831 = vsub.f32 %v661, %v799
    %v832 = vsub.f32 %v662, %v800
    %v833 = vsub.f32 %v663, %v801
    %v834 = vsub.f32 %v664, %v802
    %v835 = vsub.f32 %v665, %v803
    %v836 = vsub.f32 %v666, %v804
    %v837 = vsub.f32 %v667, %v805
    %v838 = vsub.f32 %v668, %v806
    %v839 = vsub.f32 %v669, %v807
    %v840 = vsub.f32 %v670, %v808
    %v841 = vsub.f32 %v671, %v809
    %v842 = vsub.f32 %v672, %v810
    %v843 = vsub.f32 %v673, %v811
    %v844 = vsub.f32 %v674, %v812
    %v845 = vmul.f32 %v813, %v813
    %v846 = vmul.f32 %v814, %v814
    %v847 = vmul.f32 %v815, %v815
    %v848 = vmul.f32 %v816, %v816
    %v849 = vmul.f32 %v817, %v817
    %v850 = vmul.f32 %v818, %v818
    %v851 = vmul.f32 %v819, %v819
    %v852 = vmul.f32 %v820, %v820
    %v853 = vmul.f32 %v821, %v821
    %v854 = vmul.f32 %v822, %v822
    %v855 = vmul.f32 %v823, %v823
    %v856 = vmul.f32 %v824, %v824
    %v857 = vmul.f32 %v825, %v825
    %v858 = vmul.f32 %v826, %v826
    %v859 = vmul.f32 %v827, %v827
    %v860 = vmul.f32 %v828, %v828
    %v861 = vmul.f32 %v829, %v829
    %v862 = vmul.f32 %v830, %v830
    %v863 = vmul.f32 %v831, %v831
    %v864 = vmul.f32 %v832, %v832
    %v865 = vmul.f32 %v833, %v833
    %v866 = vmul.f32 %v834, %v834
    %v867 = vmul.f32 %v835, %v835
    %v868 = vmul.f32 %v836, %v836
    %v869 = vmul.f32 %v837, %v837
    %v870 = vmul.f32 %v838, %v838
    %v871 = vmul.f32 %v839, %v839
    %v872 = vmul.f32 %v840, %v840
    %v873 = vmul.f32 %v841, %v841
    %v874 = vmul.f32 %v842, %v842
    %v875 = vmul.f32 %v843, %v843
    %v876 = vmul.f32 %v844, %v844
    %v877 = vsel %vm677, %v845, 0.0
    %878 = vadd.xlane.f32.xlu0 %v877
    %v879 = vpop.xlane.xlu0 %878
    %v880 = vsel %vm677, %v846, 0.0
    %881 = vadd.xlane.f32.xlu0 %v880
    %v882 = vpop.xlane.xlu0 %881
    %v883 = vsel %vm677, %v847, 0.0
    %884 = vadd.xlane.f32.xlu0 %v883
    %v885 = vpop.xlane.xlu0 %884
    %v886 = vsel %vm677, %v848, 0.0
    %887 = vadd.xlane.f32.xlu0 %v886
    %v888 = vpop.xlane.xlu0 %887
    %v889 = vsel %vm677, %v849, 0.0
    %890 = vadd.xlane.f32.xlu0 %v889
    %v891 = vpop.xlane.xlu0 %890
    %v892 = vsel %vm677, %v850, 0.0
    %893 = vadd.xlane.f32.xlu0 %v892
    %v894 = vpop.xlane.xlu0 %893
    %v895 = vsel %vm677, %v851, 0.0
    %896 = vadd.xlane.f32.xlu0 %v895
    %v897 = vpop.xlane.xlu0 %896
    %v898 = vsel %vm677, %v852, 0.0
    %899 = vadd.xlane.f32.xlu0 %v898
    %v900 = vpop.xlane.xlu0 %899
    %v901 = vsel %vm677, %v853, 0.0
    %902 = vadd.xlane.f32.xlu0 %v901
    %v903 = vpop.xlane.xlu0 %902
    %v904 = vsel %vm677, %v854, 0.0
    %905 = vadd.xlane.f32.xlu0 %v904
    %v906 = vpop.xlane.xlu0 %905
    %v907 = vsel %vm677, %v855, 0.0
    %908 = vadd.xlane.f32.xlu0 %v907
    %v909 = vpop.xlane.xlu0 %908
    %v910 = vsel %vm677, %v856, 0.0
    %911 = vadd.xlane.f32.xlu0 %v910
    %v912 = vpop.xlane.xlu0 %911
    %v913 = vsel %vm677, %v857, 0.0
    %914 = vadd.xlane.f32.xlu0 %v913
    %v915 = vpop.xlane.xlu0 %914
    %v916 = vsel %vm677, %v858, 0.0
    %917 = vadd.xlane.f32.xlu0 %v916
    %v918 = vpop.xlane.xlu0 %917
    %v919 = vsel %vm677, %v859, 0.0
    %920 = vadd.xlane.f32.xlu0 %v919
    %v921 = vpop.xlane.xlu0 %920
    %v922 = vsel %vm677, %v860, 0.0
    %923 = vadd.xlane.f32.xlu0 %v922
    %v924 = vpop.xlane.xlu0 %923
    %v925 = vsel %vm677, %v861, 0.0
    %926 = vadd.xlane.f32.xlu0 %v925
    %v927 = vpop.xlane.xlu0 %926
    %v928 = vsel %vm677, %v862, 0.0
    %929 = vadd.xlane.f32.xlu0 %v928
    %v930 = vpop.xlane.xlu0 %929
    %v931 = vsel %vm677, %v863, 0.0
    %932 = vadd.xlane.f32.xlu0 %v931
    %v933 = vpop.xlane.xlu0 %932
    %v934 = vsel %vm677, %v864, 0.0
    %935 = vadd.xlane.f32.xlu0 %v934
    %v936 = vpop.xlane.xlu0 %935
    %v937 = vsel %vm677, %v865, 0.0
    %938 = vadd.xlane.f32.xlu0 %v937
    %v939 = vpop.xlane.xlu0 %938
    %v940 = vsel %vm677, %v866, 0.0
    %941 = vadd.xlane.f32.xlu0 %v940
    %v942 = vpop.xlane.xlu0 %941
    %v943 = vsel %vm677, %v867, 0.0
    %944 = vadd.xlane.f32.xlu0 %v943
    %v945 = vpop.xlane.xlu0 %944
    %v946 = vsel %vm677, %v868, 0.0
    %947 = vadd.xlane.f32.xlu0 %v946
    %v948 = vpop.xlane.xlu0 %947
    %v949 = vsel %vm677, %v869, 0.0
    %950 = vadd.xlane.f32.xlu0 %v949
    %v951 = vpop.xlane.xlu0 %950
    %v952 = vsel %vm677, %v870, 0.0
    %953 = vadd.xlane.f32.xlu0 %v952
    %v954 = vpop.xlane.xlu0 %953
    %v955 = vsel %vm677, %v871, 0.0
    %956 = vadd.xlane.f32.xlu0 %v955
    %v957 = vpop.xlane.xlu0 %956
    %v958 = vsel %vm677, %v872, 0.0
    %959 = vadd.xlane.f32.xlu0 %v958
    %v960 = vpop.xlane.xlu0 %959
    %v961 = vsel %vm677, %v873, 0.0
    %962 = vadd.xlane.f32.xlu0 %v961
    %v963 = vpop.xlane.xlu0 %962
    %v964 = vsel %vm677, %v874, 0.0
    %965 = vadd.xlane.f32.xlu0 %v964
    %v966 = vpop.xlane.xlu0 %965
    %v967 = vsel %vm677, %v875, 0.0
    %968 = vadd.xlane.f32.xlu0 %v967
    %v969 = vpop.xlane.xlu0 %968
    %v970 = vsel %vm677, %v876, 0.0
    %971 = vadd.xlane.f32.xlu0 %v970
    %v972 = vpop.xlane.xlu0 %971
    %v973 = vmul.f32 %v879, %v780
    %v974 = vmul.f32 %v882, %v780
    %v975 = vmul.f32 %v885, %v780
    %v976 = vmul.f32 %v888, %v780
    %v977 = vmul.f32 %v891, %v780
    %v978 = vmul.f32 %v894, %v780
    %v979 = vmul.f32 %v897, %v780
    %v980 = vmul.f32 %v900, %v780
    %v981 = vmul.f32 %v903, %v780
    %v982 = vmul.f32 %v906, %v780
    %v983 = vmul.f32 %v909, %v780
    %v984 = vmul.f32 %v912, %v780
    %v985 = vmul.f32 %v915, %v780
    %v986 = vmul.f32 %v918, %v780
    %v987 = vmul.f32 %v921, %v780
    %v988 = vmul.f32 %v924, %v780
    %v989 = vmul.f32 %v927, %v780
    %v990 = vmul.f32 %v930, %v780
    %v991 = vmul.f32 %v933, %v780
    %v992 = vmul.f32 %v936, %v780
    %v993 = vmul.f32 %v939, %v780
    %v994 = vmul.f32 %v942, %v780
    %v995 = vmul.f32 %v945, %v780
    %v996 = vmul.f32 %v948, %v780
    %v997 = vmul.f32 %v951, %v780
    %v998 = vmul.f32 %v954, %v780
    %v999 = vmul.f32 %v957, %v780
    %v1000 = vmul.f32 %v960, %v780
    %v1001 = vmul.f32 %v963, %v780
    %v1002 = vmul.f32 %v966, %v780
    %v1003 = vmul.f32 %v969, %v780
    %v1004 = vmul.f32 %v972, %v780
    %v1005 = vadd.f32 %v973, 1e-05
    %v1006 = vadd.f32 %v974, 1e-05
    %v1007 = vadd.f32 %v975, 1e-05
    %v1008 = vadd.f32 %v976, 1e-05
    %v1009 = vadd.f32 %v977, 1e-05
    %v1010 = vadd.f32 %v978, 1e-05
    %v1011 = vadd.f32 %v979, 1e-05
    %v1012 = vadd.f32 %v980, 1e-05
    %v1013 = vadd.f32 %v981, 1e-05
    %v1014 = vadd.f32 %v982, 1e-05
    %v1015 = vadd.f32 %v983, 1e-05
    %v1016 = vadd.f32 %v984, 1e-05
    %v1017 = vadd.f32 %v985, 1e-05
    %v1018 = vadd.f32 %v986, 1e-05
    %v1019 = vadd.f32 %v987, 1e-05
    %v1020 = vadd.f32 %v988, 1e-05
    %v1021 = vadd.f32 %v989, 1e-05
    %v1022 = vadd.f32 %v990, 1e-05
    %v1023 = vadd.f32 %v991, 1e-05
    %v1024 = vadd.f32 %v992, 1e-05
    %v1025 = vadd.f32 %v993, 1e-05
    %v1026 = vadd.f32 %v994, 1e-05
    %v1027 = vadd.f32 %v995, 1e-05
    %v1028 = vadd.f32 %v996, 1e-05
    %v1029 = vadd.f32 %v997, 1e-05
    %v1030 = vadd.f32 %v998, 1e-05
    %v1031 = vadd.f32 %v999, 1e-05
    %v1032 = vadd.f32 %v1000, 1e-05
    %v1033 = vadd.f32 %v1001, 1e-05
    %v1034 = vadd.f32 %v1002, 1e-05
    %v1035 = vadd.f32 %v1003, 1e-05
    %v1036 = vadd.f32 %v1004, 1e-05
    %v1037 = vrsqrt.pop %v1005
    %v1038 = vmul.f32 %v1037, %v1005
    %v1039 = vmul.f32 %v1038, %v1037
    %v1040 = vmul.f32 0.5, %v1039
    %v1041 = vsub.f32 1.5, %v1040
    %v1042 = vmul.f32 %v1037, %v1041
    %vm1043 = vweird.f32 %v1005
    %vm1044 = vweird.f32 %v1037
    %vm1045 = vmor %vm1043, %vm1044
    %v1046 = vsel %vm1045, %v1037, %v1042
    %v1047 = vrsqrt.pop %v1006
    %v1048 = vmul.f32 %v1047, %v1006
    %v1049 = vmul.f32 %v1048, %v1047
    %v1050 = vmul.f32 0.5, %v1049
    %v1051 = vsub.f32 1.5, %v1050
    %v1052 = vmul.f32 %v1047, %v1051
    %vm1053 = vweird.f32 %v1006
    %vm1054 = vweird.f32 %v1047
    %vm1055 = vmor %vm1053, %vm1054
    %v1056 = vsel %vm1055, %v1047, %v1052
    %v1057 = vrsqrt.pop %v1007
    %v1058 = vmul.f32 %v1057, %v1007
    %v1059 = vmul.f32 %v1058, %v1057
    %v1060 = vmul.f32 0.5, %v1059
    %v1061 = vsub.f32 1.5, %v1060
    %v1062 = vmul.f32 %v1057, %v1061
    %vm1063 = vweird.f32 %v1007
    %vm1064 = vweird.f32 %v1057
    %vm1065 = vmor %vm1063, %vm1064
    %v1066 = vsel %vm1065, %v1057, %v1062
    %v1067 = vrsqrt.pop %v1008
    %v1068 = vmul.f32 %v1067, %v1008
    %v1069 = vmul.f32 %v1068, %v1067
    %v1070 = vmul.f32 0.5, %v1069
    %v1071 = vsub.f32 1.5, %v1070
    %v1072 = vmul.f32 %v1067, %v1071
    %vm1073 = vweird.f32 %v1008
    %vm1074 = vweird.f32 %v1067
    %vm1075 = vmor %vm1073, %vm1074
    %v1076 = vsel %vm1075, %v1067, %v1072
    %v1077 = vrsqrt.pop %v1009
    %v1078 = vmul.f32 %v1077, %v1009
    %v1079 = vmul.f32 %v1078, %v1077
    %v1080 = vmul.f32 0.5, %v1079
    %v1081 = vsub.f32 1.5, %v1080
    %v1082 = vmul.f32 %v1077, %v1081
    %vm1083 = vweird.f32 %v1009
    %vm1084 = vweird.f32 %v1077
    %vm1085 = vmor %vm1083, %vm1084
    %v1086 = vsel %vm1085, %v1077, %v1082
    %v1087 = vrsqrt.pop %v1010
    %v1088 = vmul.f32 %v1087, %v1010
    %v1089 = vmul.f32 %v1088, %v1087
    %v1090 = vmul.f32 0.5, %v1089
    %v1091 = vsub.f32 1.5, %v1090
    %v1092 = vmul.f32 %v1087, %v1091
    %vm1093 = vweird.f32 %v1010
    %vm1094 = vweird.f32 %v1087
    %vm1095 = vmor %vm1093, %vm1094
    %v1096 = vsel %vm1095, %v1087, %v1092
    %v1097 = vrsqrt.pop %v1011
    %v1098 = vmul.f32 %v1097, %v1011
    %v1099 = vmul.f32 %v1098, %v1097
    %v1100 = vmul.f32 0.5, %v1099
    %v1101 = vsub.f32 1.5, %v1100
    %v1102 = vmul.f32 %v1097, %v1101
    %vm1103 = vweird.f32 %v1011
    %vm1104 = vweird.f32 %v1097
    %vm1105 = vmor %vm1103, %vm1104
    %v1106 = vsel %vm1105, %v1097, %v1102
    %v1107 = vrsqrt.pop %v1012
    %v1108 = vmul.f32 %v1107, %v1012
    %v1109 = vmul.f32 %v1108, %v1107
    %v1110 = vmul.f32 0.5, %v1109
    %v1111 = vsub.f32 1.5, %v1110
    %v1112 = vmul.f32 %v1107, %v1111
    %vm1113 = vweird.f32 %v1012
    %vm1114 = vweird.f32 %v1107
    %vm1115 = vmor %vm1113, %vm1114
    %v1116 = vsel %vm1115, %v1107, %v1112
    %v1117 = vrsqrt.pop %v1013
    %v1118 = vmul.f32 %v1117, %v1013
    %v1119 = vmul.f32 %v1118, %v1117
    %v1120 = vmul.f32 0.5, %v1119
    %v1121 = vsub.f32 1.5, %v1120
    %v1122 = vmul.f32 %v1117, %v1121
    %vm1123 = vweird.f32 %v1013
    %vm1124 = vweird.f32 %v1117
    %vm1125 = vmor %vm1123, %vm1124
    %v1126 = vsel %vm1125, %v1117, %v1122
    %v1127 = vrsqrt.pop %v1014
    %v1128 = vmul.f32 %v1127, %v1014
    %v1129 = vmul.f32 %v1128, %v1127
    %v1130 = vmul.f32 0.5, %v1129
    %v1131 = vsub.f32 1.5, %v1130
    %v1132 = vmul.f32 %v1127, %v1131
    %vm1133 = vweird.f32 %v1014
    %vm1134 = vweird.f32 %v1127
    %vm1135 = vmor %vm1133, %vm1134
    %v1136 = vsel %vm1135, %v1127, %v1132
    %v1137 = vrsqrt.pop %v1015
    %v1138 = vmul.f32 %v1137, %v1015
    %v1139 = vmul.f32 %v1138, %v1137
    %v1140 = vmul.f32 0.5, %v1139
    %v1141 = vsub.f32 1.5, %v1140
    %v1142 = vmul.f32 %v1137, %v1141
    %vm1143 = vweird.f32 %v1015
    %vm1144 = vweird.f32 %v1137
    %vm1145 = vmor %vm1143, %vm1144
    %v1146 = vsel %vm1145, %v1137, %v1142
    %v1147 = vrsqrt.pop %v1016
    %v1148 = vmul.f32 %v1147, %v1016
    %v1149 = vmul.f32 %v1148, %v1147
    %v1150 = vmul.f32 0.5, %v1149
    %v1151 = vsub.f32 1.5, %v1150
    %v1152 = vmul.f32 %v1147, %v1151
    %vm1153 = vweird.f32 %v1016
    %vm1154 = vweird.f32 %v1147
    %vm1155 = vmor %vm1153, %vm1154
    %v1156 = vsel %vm1155, %v1147, %v1152
    %v1157 = vrsqrt.pop %v1017
    %v1158 = vmul.f32 %v1157, %v1017
    %v1159 = vmul.f32 %v1158, %v1157
    %v1160 = vmul.f32 0.5, %v1159
    %v1161 = vsub.f32 1.5, %v1160
    %v1162 = vmul.f32 %v1157, %v1161
    %vm1163 = vweird.f32 %v1017
    %vm1164 = vweird.f32 %v1157
    %vm1165 = vmor %vm1163, %vm1164
    %v1166 = vsel %vm1165, %v1157, %v1162
    %v1167 = vrsqrt.pop %v1018
    %v1168 = vmul.f32 %v1167, %v1018
    %v1169 = vmul.f32 %v1168, %v1167
    %v1170 = vmul.f32 0.5, %v1169
    %v1171 = vsub.f32 1.5, %v1170
    %v1172 = vmul.f32 %v1167, %v1171
    %vm1173 = vweird.f32 %v1018
    %vm1174 = vweird.f32 %v1167
    %vm1175 = vmor %vm1173, %vm1174
    %v1176 = vsel %vm1175, %v1167, %v1172
    %v1177 = vrsqrt.pop %v1019
    %v1178 = vmul.f32 %v1177, %v1019
    %v1179 = vmul.f32 %v1178, %v1177
    %v1180 = vmul.f32 0.5, %v1179
    %v1181 = vsub.f32 1.5, %v1180
    %v1182 = vmul.f32 %v1177, %v1181
    %vm1183 = vweird.f32 %v1019
    %vm1184 = vweird.f32 %v1177
    %vm1185 = vmor %vm1183, %vm1184
    %v1186 = vsel %vm1185, %v1177, %v1182
    %v1187 = vrsqrt.pop %v1020
    %v1188 = vmul.f32 %v1187, %v1020
    %v1189 = vmul.f32 %v1188, %v1187
    %v1190 = vmul.f32 0.5, %v1189
    %v1191 = vsub.f32 1.5, %v1190
    %v1192 = vmul.f32 %v1187, %v1191
    %vm1193 = vweird.f32 %v1020
    %vm1194 = vweird.f32 %v1187
    %vm1195 = vmor %vm1193, %vm1194
    %v1196 = vsel %vm1195, %v1187, %v1192
    %v1197 = vrsqrt.pop %v1021
    %v1198 = vmul.f32 %v1197, %v1021
    %v1199 = vmul.f32 %v1198, %v1197
    %v1200 = vmul.f32 0.5, %v1199
    %v1201 = vsub.f32 1.5, %v1200
    %v1202 = vmul.f32 %v1197, %v1201
    %vm1203 = vweird.f32 %v1021
    %vm1204 = vweird.f32 %v1197
    %vm1205 = vmor %vm1203, %vm1204
    %v1206 = vsel %vm1205, %v1197, %v1202
    %v1207 = vrsqrt.pop %v1022
    %v1208 = vmul.f32 %v1207, %v1022
    %v1209 = vmul.f32 %v1208, %v1207
    %v1210 = vmul.f32 0.5, %v1209
    %v1211 = vsub.f32 1.5, %v1210
    %v1212 = vmul.f32 %v1207, %v1211
    %vm1213 = vweird.f32 %v1022
    %vm1214 = vweird.f32 %v1207
    %vm1215 = vmor %vm1213, %vm1214
    %v1216 = vsel %vm1215, %v1207, %v1212
    %v1217 = vrsqrt.pop %v1023
    %v1218 = vmul.f32 %v1217, %v1023
    %v1219 = vmul.f32 %v1218, %v1217
    %v1220 = vmul.f32 0.5, %v1219
    %v1221 = vsub.f32 1.5, %v1220
    %v1222 = vmul.f32 %v1217, %v1221
    %vm1223 = vweird.f32 %v1023
    %vm1224 = vweird.f32 %v1217
    %vm1225 = vmor %vm1223, %vm1224
    %v1226 = vsel %vm1225, %v1217, %v1222
    %v1227 = vrsqrt.pop %v1024
    %v1228 = vmul.f32 %v1227, %v1024
    %v1229 = vmul.f32 %v1228, %v1227
    %v1230 = vmul.f32 0.5, %v1229
    %v1231 = vsub.f32 1.5, %v1230
    %v1232 = vmul.f32 %v1227, %v1231
    %vm1233 = vweird.f32 %v1024
    %vm1234 = vweird.f32 %v1227
    %vm1235 = vmor %vm1233, %vm1234
    %v1236 = vsel %vm1235, %v1227, %v1232
    %v1237 = vrsqrt.pop %v1025
    %v1238 = vmul.f32 %v1237, %v1025
    %v1239 = vmul.f32 %v1238, %v1237
    %v1240 = vmul.f32 0.5, %v1239
    %v1241 = vsub.f32 1.5, %v1240
    %v1242 = vmul.f32 %v1237, %v1241
    %vm1243 = vweird.f32 %v1025
    %vm1244 = vweird.f32 %v1237
    %vm1245 = vmor %vm1243, %vm1244
    %v1246 = vsel %vm1245, %v1237, %v1242
    %v1247 = vrsqrt.pop %v1026
    %v1248 = vmul.f32 %v1247, %v1026
    %v1249 = vmul.f32 %v1248, %v1247
    %v1250 = vmul.f32 0.5, %v1249
    %v1251 = vsub.f32 1.5, %v1250
    %v1252 = vmul.f32 %v1247, %v1251
    %vm1253 = vweird.f32 %v1026
    %vm1254 = vweird.f32 %v1247
    %vm1255 = vmor %vm1253, %vm1254
    %v1256 = vsel %vm1255, %v1247, %v1252
    %v1257 = vrsqrt.pop %v1027
    %v1258 = vmul.f32 %v1257, %v1027
    %v1259 = vmul.f32 %v1258, %v1257
    %v1260 = vmul.f32 0.5, %v1259
    %v1261 = vsub.f32 1.5, %v1260
    %v1262 = vmul.f32 %v1257, %v1261
    %vm1263 = vweird.f32 %v1027
    %vm1264 = vweird.f32 %v1257
    %vm1265 = vmor %vm1263, %vm1264
    %v1266 = vsel %vm1265, %v1257, %v1262
    %v1267 = vrsqrt.pop %v1028
    %v1268 = vmul.f32 %v1267, %v1028
    %v1269 = vmul.f32 %v1268, %v1267
    %v1270 = vmul.f32 0.5, %v1269
    %v1271 = vsub.f32 1.5, %v1270
    %v1272 = vmul.f32 %v1267, %v1271
    %vm1273 = vweird.f32 %v1028
    %vm1274 = vweird.f32 %v1267
    %vm1275 = vmor %vm1273, %vm1274
    %v1276 = vsel %vm1275, %v1267, %v1272
    %v1277 = vrsqrt.pop %v1029
    %v1278 = vmul.f32 %v1277, %v1029
    %v1279 = vmul.f32 %v1278, %v1277
    %v1280 = vmul.f32 0.5, %v1279
    %v1281 = vsub.f32 1.5, %v1280
    %v1282 = vmul.f32 %v1277, %v1281
    %vm1283 = vweird.f32 %v1029
    %vm1284 = vweird.f32 %v1277
    %vm1285 = vmor %vm1283, %vm1284
    %v1286 = vsel %vm1285, %v1277, %v1282
    %v1287 = vrsqrt.pop %v1030
    %v1288 = vmul.f32 %v1287, %v1030
    %v1289 = vmul.f32 %v1288, %v1287
    %v1290 = vmul.f32 0.5, %v1289
    %v1291 = vsub.f32 1.5, %v1290
    %v1292 = vmul.f32 %v1287, %v1291
    %vm1293 = vweird.f32 %v1030
    %vm1294 = vweird.f32 %v1287
    %vm1295 = vmor %vm1293, %vm1294
    %v1296 = vsel %vm1295, %v1287, %v1292
    %v1297 = vrsqrt.pop %v1031
    %v1298 = vmul.f32 %v1297, %v1031
    %v1299 = vmul.f32 %v1298, %v1297
    %v1300 = vmul.f32 0.5, %v1299
    %v1301 = vsub.f32 1.5, %v1300
    %v1302 = vmul.f32 %v1297, %v1301
    %vm1303 = vweird.f32 %v1031
    %vm1304 = vweird.f32 %v1297
    %vm1305 = vmor %vm1303, %vm1304
    %v1306 = vsel %vm1305, %v1297, %v1302
    %v1307 = vrsqrt.pop %v1032
    %v1308 = vmul.f32 %v1307, %v1032
    %v1309 = vmul.f32 %v1308, %v1307
    %v1310 = vmul.f32 0.5, %v1309
    %v1311 = vsub.f32 1.5, %v1310
    %v1312 = vmul.f32 %v1307, %v1311
    %vm1313 = vweird.f32 %v1032
    %vm1314 = vweird.f32 %v1307
    %vm1315 = vmor %vm1313, %vm1314
    %v1316 = vsel %vm1315, %v1307, %v1312
    %v1317 = vrsqrt.pop %v1033
    %v1318 = vmul.f32 %v1317, %v1033
    %v1319 = vmul.f32 %v1318, %v1317
    %v1320 = vmul.f32 0.5, %v1319
    %v1321 = vsub.f32 1.5, %v1320
    %v1322 = vmul.f32 %v1317, %v1321
    %vm1323 = vweird.f32 %v1033
    %vm1324 = vweird.f32 %v1317
    %vm1325 = vmor %vm1323, %vm1324
    %v1326 = vsel %vm1325, %v1317, %v1322
    %v1327 = vrsqrt.pop %v1034
    %v1328 = vmul.f32 %v1327, %v1034
    %v1329 = vmul.f32 %v1328, %v1327
    %v1330 = vmul.f32 0.5, %v1329
    %v1331 = vsub.f32 1.5, %v1330
    %v1332 = vmul.f32 %v1327, %v1331
    %vm1333 = vweird.f32 %v1034
    %vm1334 = vweird.f32 %v1327
    %vm1335 = vmor %vm1333, %vm1334
    %v1336 = vsel %vm1335, %v1327, %v1332
    %v1337 = vrsqrt.pop %v1035
    %v1338 = vmul.f32 %v1337, %v1035
    %v1339 = vmul.f32 %v1338, %v1337
    %v1340 = vmul.f32 0.5, %v1339
    %v1341 = vsub.f32 1.5, %v1340
    %v1342 = vmul.f32 %v1337, %v1341
    %vm1343 = vweird.f32 %v1035
    %vm1344 = vweird.f32 %v1337
    %vm1345 = vmor %vm1343, %vm1344
    %v1346 = vsel %vm1345, %v1337, %v1342
    %v1347 = vrsqrt.pop %v1036
    %v1348 = vmul.f32 %v1347, %v1036
    %v1349 = vmul.f32 %v1348, %v1347
    %v1350 = vmul.f32 0.5, %v1349
    %v1351 = vsub.f32 1.5, %v1350
    %v1352 = vmul.f32 %v1347, %v1351
    %vm1353 = vweird.f32 %v1036
    %vm1354 = vweird.f32 %v1347
    %vm1355 = vmor %vm1353, %vm1354
    %v1356 = vsel %vm1355, %v1347, %v1352
    %v1357 = vmul.f32 %v813, %v1046
    %v1358 = vmul.f32 %v814, %v1056
    %v1359 = vmul.f32 %v815, %v1066
    %v1360 = vmul.f32 %v816, %v1076
    %v1361 = vmul.f32 %v817, %v1086
    %v1362 = vmul.f32 %v818, %v1096
    %v1363 = vmul.f32 %v819, %v1106
    %v1364 = vmul.f32 %v820, %v1116
    %v1365 = vmul.f32 %v821, %v1126
    %v1366 = vmul.f32 %v822, %v1136
    %v1367 = vmul.f32 %v823, %v1146
    %v1368 = vmul.f32 %v824, %v1156
    %v1369 = vmul.f32 %v825, %v1166
    %v1370 = vmul.f32 %v826, %v1176
    %v1371 = vmul.f32 %v827, %v1186
    %v1372 = vmul.f32 %v828, %v1196
    %v1373 = vmul.f32 %v829, %v1206
    %v1374 = vmul.f32 %v830, %v1216
    %v1375 = vmul.f32 %v831, %v1226
    %v1376 = vmul.f32 %v832, %v1236
    %v1377 = vmul.f32 %v833, %v1246
    %v1378 = vmul.f32 %v834, %v1256
    %v1379 = vmul.f32 %v835, %v1266
    %v1380 = vmul.f32 %v836, %v1276
    %v1381 = vmul.f32 %v837, %v1286
    %v1382 = vmul.f32 %v838, %v1296
    %v1383 = vmul.f32 %v839, %v1306
    %v1384 = vmul.f32 %v840, %v1316
    %v1385 = vmul.f32 %v841, %v1326
    %v1386 = vmul.f32 %v842, %v1336
    %v1387 = vmul.f32 %v843, %v1346
    %v1388 = vmul.f32 %v844, %v1356
    %v1390 = vperm.slane %v675, 0
    %v1392 = vmul.f32 %v1357, %v1390
    %v1393 = vmul.f32 %v1358, %v1390
    %v1394 = vmul.f32 %v1359, %v1390
    %v1395 = vmul.f32 %v1360, %v1390
    %v1396 = vmul.f32 %v1361, %v1390
    %v1397 = vmul.f32 %v1362, %v1390
    %v1398 = vmul.f32 %v1363, %v1390
    %v1399 = vmul.f32 %v1364, %v1390
    %v1400 = vmul.f32 %v1365, %v1390
    %v1401 = vmul.f32 %v1366, %v1390
    %v1402 = vmul.f32 %v1367, %v1390
    %v1403 = vmul.f32 %v1368, %v1390
    %v1404 = vmul.f32 %v1369, %v1390
    %v1405 = vmul.f32 %v1370, %v1390
    %v1406 = vmul.f32 %v1371, %v1390
    %v1407 = vmul.f32 %v1372, %v1390
    %v1408 = vmul.f32 %v1373, %v1390
    %v1409 = vmul.f32 %v1374, %v1390
    %v1410 = vmul.f32 %v1375, %v1390
    %v1411 = vmul.f32 %v1376, %v1390
    %v1412 = vmul.f32 %v1377, %v1390
    %v1413 = vmul.f32 %v1378, %v1390
    %v1414 = vmul.f32 %v1379, %v1390
    %v1415 = vmul.f32 %v1380, %v1390
    %v1416 = vmul.f32 %v1381, %v1390
    %v1417 = vmul.f32 %v1382, %v1390
    %v1418 = vmul.f32 %v1383, %v1390
    %v1419 = vmul.f32 %v1384, %v1390
    %v1420 = vmul.f32 %v1385, %v1390
    %v1421 = vmul.f32 %v1386, %v1390
    %v1422 = vmul.f32 %v1387, %v1390
    %v1423 = vmul.f32 %v1388, %v1390
    %v1425 = vperm.slane %v676, 0
    %v1427 = vadd.f32 %v1392, %v1425
    %v1428 = vadd.f32 %v1393, %v1425
    %v1429 = vadd.f32 %v1394, %v1425
    %v1430 = vadd.f32 %v1395, %v1425
    %v1431 = vadd.f32 %v1396, %v1425
    %v1432 = vadd.f32 %v1397, %v1425
    %v1433 = vadd.f32 %v1398, %v1425
    %v1434 = vadd.f32 %v1399, %v1425
    %v1435 = vadd.f32 %v1400, %v1425
    %v1436 = vadd.f32 %v1401, %v1425
    %v1437 = vadd.f32 %v1402, %v1425
    %v1438 = vadd.f32 %v1403, %v1425
    %v1439 = vadd.f32 %v1404, %v1425
    %v1440 = vadd.f32 %v1405, %v1425
    %v1441 = vadd.f32 %v1406, %v1425
    %v1442 = vadd.f32 %v1407, %v1425
    %v1443 = vadd.f32 %v1408, %v1425
    %v1444 = vadd.f32 %v1409, %v1425
    %v1445 = vadd.f32 %v1410, %v1425
    %v1446 = vadd.f32 %v1411, %v1425
    %v1447 = vadd.f32 %v1412, %v1425
    %v1448 = vadd.f32 %v1413, %v1425
    %v1449 = vadd.f32 %v1414, %v1425
    %v1450 = vadd.f32 %v1415, %v1425
    %v1451 = vadd.f32 %v1416, %v1425
    %v1452 = vadd.f32 %v1417, %v1425
    %v1453 = vadd.f32 %v1418, %v1425
    %v1454 = vadd.f32 %v1419, %v1425
    %v1455 = vadd.f32 %v1420, %v1425
    %v1456 = vadd.f32 %v1421, %v1425
    %v1457 = vadd.f32 %v1422, %v1425
    %v1458 = vadd.f32 %v1423, %v1425
    %v1459 = vmul.f32 %v1427, 0.5
    %v1460 = vmul.f32 %v1428, 0.5
    %v1461 = vmul.f32 %v1429, 0.5
    %v1462 = vmul.f32 %v1430, 0.5
    %v1463 = vmul.f32 %v1431, 0.5
    %v1464 = vmul.f32 %v1432, 0.5
    %v1465 = vmul.f32 %v1433, 0.5
    %v1466 = vmul.f32 %v1434, 0.5
    %v1467 = vmul.f32 %v1435, 0.5
    %v1468 = vmul.f32 %v1436, 0.5
    %v1469 = vmul.f32 %v1437, 0.5
    %v1470 = vmul.f32 %v1438, 0.5
    %v1471 = vmul.f32 %v1439, 0.5
    %v1472 = vmul.f32 %v1440, 0.5
    %v1473 = vmul.f32 %v1441, 0.5
    %v1474 = vmul.f32 %v1442, 0.5
    %v1475 = vmul.f32 %v1443, 0.5
    %v1476 = vmul.f32 %v1444, 0.5
    %v1477 = vmul.f32 %v1445, 0.5
    %v1478 = vmul.f32 %v1446, 0.5
    %v1479 = vmul.f32 %v1447, 0.5
    %v1480 = vmul.f32 %v1448, 0.5
    %v1481 = vmul.f32 %v1449, 0.5
    %v1482 = vmul.f32 %v1450, 0.5
    %v1483 = vmul.f32 %v1451, 0.5
    %v1484 = vmul.f32 %v1452, 0.5
    %v1485 = vmul.f32 %v1453, 0.5
    %v1486 = vmul.f32 %v1454, 0.5
    %v1487 = vmul.f32 %v1455, 0.5
    %v1488 = vmul.f32 %v1456, 0.5
    %v1489 = vmul.f32 %v1457, 0.5
    %v1490 = vmul.f32 %v1458, 0.5
    %v1491 = vmul.f32 %v1427, 0.044715
    %v1492 = vmul.f32 %v1428, 0.044715
    %v1493 = vmul.f32 %v1429, 0.044715
    %v1494 = vmul.f32 %v1430, 0.044715
    %v1495 = vmul.f32 %v1431, 0.044715
    %v1496 = vmul.f32 %v1432, 0.044715
    %v1497 = vmul.f32 %v1433, 0.044715
    %v1498 = vmul.f32 %v1434, 0.044715
    %v1499 = vmul.f32 %v1435, 0.044715
    %v1500 = vmul.f32 %v1436, 0.044715
    %v1501 = vmul.f32 %v1437, 0.044715
    %v1502 = vmul.f32 %v1438, 0.044715
    %v1503 = vmul.f32 %v1439, 0.044715
    %v1504 = vmul.f32 %v1440, 0.044715
    %v1505 = vmul.f32 %v1441, 0.044715
    %v1506 = vmul.f32 %v1442, 0.044715
    %v1507 = vmul.f32 %v1443, 0.044715
    %v1508 = vmul.f32 %v1444, 0.044715
    %v1509 = vmul.f32 %v1445, 0.044715
    %v1510 = vmul.f32 %v1446, 0.044715
    %v1511 = vmul.f32 %v1447, 0.044715
    %v1512 = vmul.f32 %v1448, 0.044715
    %v1513 = vmul.f32 %v1449, 0.044715
    %v1514 = vmul.f32 %v1450, 0.044715
    %v1515 = vmul.f32 %v1451, 0.044715
    %v1516 = vmul.f32 %v1452, 0.044715
    %v1517 = vmul.f32 %v1453, 0.044715
    %v1518 = vmul.f32 %v1454, 0.044715
    %v1519 = vmul.f32 %v1455, 0.044715
    %v1520 = vmul.f32 %v1456, 0.044715
    %v1521 = vmul.f32 %v1457, 0.044715
    %v1522 = vmul.f32 %v1458, 0.044715
    %v1523 = vmul.f32 %v1491, %v1427
    %v1524 = vmul.f32 %v1492, %v1428
    %v1525 = vmul.f32 %v1493, %v1429
    %v1526 = vmul.f32 %v1494, %v1430
    %v1527 = vmul.f32 %v1495, %v1431
    %v1528 = vmul.f32 %v1496, %v1432
    %v1529 = vmul.f32 %v1497, %v1433
    %v1530 = vmul.f32 %v1498, %v1434
    %v1531 = vmul.f32 %v1499, %v1435
    %v1532 = vmul.f32 %v1500, %v1436
    %v1533 = vmul.f32 %v1501, %v1437
    %v1534 = vmul.f32 %v1502, %v1438
    %v1535 = vmul.f32 %v1503, %v1439
    %v1536 = vmul.f32 %v1504, %v1440
    %v1537 = vmul.f32 %v1505, %v1441
    %v1538 = vmul.f32 %v1506, %v1442
    %v1539 = vmul.f32 %v1507, %v1443
    %v1540 = vmul.f32 %v1508, %v1444
    %v1541 = vmul.f32 %v1509, %v1445
    %v1542 = vmul.f32 %v1510, %v1446
    %v1543 = vmul.f32 %v1511, %v1447
    %v1544 = vmul.f32 %v1512, %v1448
    %v1545 = vmul.f32 %v1513, %v1449
    %v1546 = vmul.f32 %v1514, %v1450
    %v1547 = vmul.f32 %v1515, %v1451
    %v1548 = vmul.f32 %v1516, %v1452
    %v1549 = vmul.f32 %v1517, %v1453
    %v1550 = vmul.f32 %v1518, %v1454
    %v1551 = vmul.f32 %v1519, %v1455
    %v1552 = vmul.f32 %v1520, %v1456
    %v1553 = vmul.f32 %v1521, %v1457
    %v1554 = vmul.f32 %v1522, %v1458
    %v1555 = vmul.f32 %v1523, %v1427
    %v1556 = vmul.f32 %v1524, %v1428
    %v1557 = vmul.f32 %v1525, %v1429
    %v1558 = vmul.f32 %v1526, %v1430
    %v1559 = vmul.f32 %v1527, %v1431
    %v1560 = vmul.f32 %v1528, %v1432
    %v1561 = vmul.f32 %v1529, %v1433
    %v1562 = vmul.f32 %v1530, %v1434
    %v1563 = vmul.f32 %v1531, %v1435
    %v1564 = vmul.f32 %v1532, %v1436
    %v1565 = vmul.f32 %v1533, %v1437
    %v1566 = vmul.f32 %v1534, %v1438
    %v1567 = vmul.f32 %v1535, %v1439
    %v1568 = vmul.f32 %v1536, %v1440
    %v1569 = vmul.f32 %v1537, %v1441
    %v1570 = vmul.f32 %v1538, %v1442
    %v1571 = vmul.f32 %v1539, %v1443
    %v1572 = vmul.f32 %v1540, %v1444
    %v1573 = vmul.f32 %v1541, %v1445
    %v1574 = vmul.f32 %v1542, %v1446
    %v1575 = vmul.f32 %v1543, %v1447
    %v1576 = vmul.f32 %v1544, %v1448
    %v1577 = vmul.f32 %v1545, %v1449
    %v1578 = vmul.f32 %v1546, %v1450
    %v1579 = vmul.f32 %v1547, %v1451
    %v1580 = vmul.f32 %v1548, %v1452
    %v1581 = vmul.f32 %v1549, %v1453
    %v1582 = vmul.f32 %v1550, %v1454
    %v1583 = vmul.f32 %v1551, %v1455
    %v1584 = vmul.f32 %v1552, %v1456
    %v1585 = vmul.f32 %v1553, %v1457
    %v1586 = vmul.f32 %v1554, %v1458
    %v1587 = vadd.f32 %v1427, %v1555
    %v1588 = vadd.f32 %v1428, %v1556
    %v1589 = vadd.f32 %v1429, %v1557
    %v1590 = vadd.f32 %v1430, %v1558
    %v1591 = vadd.f32 %v1431, %v1559
    %v1592 = vadd.f32 %v1432, %v1560
    %v1593 = vadd.f32 %v1433, %v1561
    %v1594 = vadd.f32 %v1434, %v1562
    %v1595 = vadd.f32 %v1435, %v1563
    %v1596 = vadd.f32 %v1436, %v1564
    %v1597 = vadd.f32 %v1437, %v1565
    %v1598 = vadd.f32 %v1438, %v1566
    %v1599 = vadd.f32 %v1439, %v1567
    %v1600 = vadd.f32 %v1440, %v1568
    %v1601 = vadd.f32 %v1441, %v1569
    %v1602 = vadd.f32 %v1442, %v1570
    %v1603 = vadd.f32 %v1443, %v1571
    %v1604 = vadd.f32 %v1444, %v1572
    %v1605 = vadd.f32 %v1445, %v1573
    %v1606 = vadd.f32 %v1446, %v1574
    %v1607 = vadd.f32 %v1447, %v1575
    %v1608 = vadd.f32 %v1448, %v1576
    %v1609 = vadd.f32 %v1449, %v1577
    %v1610 = vadd.f32 %v1450, %v1578
    %v1611 = vadd.f32 %v1451, %v1579
    %v1612 = vadd.f32 %v1452, %v1580
    %v1613 = vadd.f32 %v1453, %v1581
    %v1614 = vadd.f32 %v1454, %v1582
    %v1615 = vadd.f32 %v1455, %v1583
    %v1616 = vadd.f32 %v1456, %v1584
    %v1617 = vadd.f32 %v1457, %v1585
    %v1618 = vadd.f32 %v1458, %v1586
    %v1619 = vmul.f32 %v1587, 0.7978846
    %v1620 = vmul.f32 %v1588, 0.7978846
    %v1621 = vmul.f32 %v1589, 0.7978846
    %v1622 = vmul.f32 %v1590, 0.7978846
    %v1623 = vmul.f32 %v1591, 0.7978846
    %v1624 = vmul.f32 %v1592, 0.7978846
    %v1625 = vmul.f32 %v1593, 0.7978846
    %v1626 = vmul.f32 %v1594, 0.7978846
    %v1627 = vmul.f32 %v1595, 0.7978846
    %v1628 = vmul.f32 %v1596, 0.7978846
    %v1629 = vmul.f32 %v1597, 0.7978846
    %v1630 = vmul.f32 %v1598, 0.7978846
    %v1631 = vmul.f32 %v1599, 0.7978846
    %v1632 = vmul.f32 %v1600, 0.7978846
    %v1633 = vmul.f32 %v1601, 0.7978846
    %v1634 = vmul.f32 %v1602, 0.7978846
    %v1635 = vmul.f32 %v1603, 0.7978846
    %v1636 = vmul.f32 %v1604, 0.7978846
    %v1637 = vmul.f32 %v1605, 0.7978846
    %v1638 = vmul.f32 %v1606, 0.7978846
    %v1639 = vmul.f32 %v1607, 0.7978846
    %v1640 = vmul.f32 %v1608, 0.7978846
    %v1641 = vmul.f32 %v1609, 0.7978846
    %v1642 = vmul.f32 %v1610, 0.7978846
    %v1643 = vmul.f32 %v1611, 0.7978846
    %v1644 = vmul.f32 %v1612, 0.7978846
    %v1645 = vmul.f32 %v1613, 0.7978846
    %v1646 = vmul.f32 %v1614, 0.7978846
    %v1647 = vmul.f32 %v1615, 0.7978846
    %v1648 = vmul.f32 %v1616, 0.7978846
    %v1649 = vmul.f32 %v1617, 0.7978846
    %v1650 = vmul.f32 %v1618, 0.7978846
    %v1651 = vtanh.pop %v1619
    %v1652 = vtanh.pop %v1620
    %v1653 = vtanh.pop %v1621
    %v1654 = vtanh.pop %v1622
    %v1655 = vtanh.pop %v1623
    %v1656 = vtanh.pop %v1624
    %v1657 = vtanh.pop %v1625
    %v1658 = vtanh.pop %v1626
    %v1659 = vtanh.pop %v1627
    %v1660 = vtanh.pop %v1628
    %v1661 = vtanh.pop %v1629
    %v1662 = vtanh.pop %v1630
    %v1663 = vtanh.pop %v1631
    %v1664 = vtanh.pop %v1632
    %v1665 = vtanh.pop %v1633
    %v1666 = vtanh.pop %v1634
    %v1667 = vtanh.pop %v1635
    %v1668 = vtanh.pop %v1636
    %v1669 = vtanh.pop %v1637
    %v1670 = vtanh.pop %v1638
    %v1671 = vtanh.pop %v1639
    %v1672 = vtanh.pop %v1640
    %v1673 = vtanh.pop %v1641
    %v1674 = vtanh.pop %v1642
    %v1675 = vtanh.pop %v1643
    %v1676 = vtanh.pop %v1644
    %v1677 = vtanh.pop %v1645
    %v1678 = vtanh.pop %v1646
    %v1679 = vtanh.pop %v1647
    %v1680 = vtanh.pop %v1648
    %v1681 = vtanh.pop %v1649
    %v1682 = vtanh.pop %v1650
    %v1683 = vadd.f32 %v1651, 1.0
    %v1684 = vadd.f32 %v1652, 1.0
    %v1685 = vadd.f32 %v1653, 1.0
    %v1686 = vadd.f32 %v1654, 1.0
    %v1687 = vadd.f32 %v1655, 1.0
    %v1688 = vadd.f32 %v1656, 1.0
    %v1689 = vadd.f32 %v1657, 1.0
    %v1690 = vadd.f32 %v1658, 1.0
    %v1691 = vadd.f32 %v1659, 1.0
    %v1692 = vadd.f32 %v1660, 1.0
    %v1693 = vadd.f32 %v1661, 1.0
    %v1694 = vadd.f32 %v1662, 1.0
    %v1695 = vadd.f32 %v1663, 1.0
    %v1696 = vadd.f32 %v1664, 1.0
    %v1697 = vadd.f32 %v1665, 1.0
    %v1698 = vadd.f32 %v1666, 1.0
    %v1699 = vadd.f32 %v1667, 1.0
    %v1700 = vadd.f32 %v1668, 1.0
    %v1701 = vadd.f32 %v1669, 1.0
    %v1702 = vadd.f32 %v1670, 1.0
    %v1703 = vadd.f32 %v1671, 1.0
    %v1704 = vadd.f32 %v1672, 1.0
    %v1705 = vadd.f32 %v1673, 1.0
    %v1706 = vadd.f32 %v1674, 1.0
    %v1707 = vadd.f32 %v1675, 1.0
    %v1708 = vadd.f32 %v1676, 1.0
    %v1709 = vadd.f32 %v1677, 1.0
    %v1710 = vadd.f32 %v1678, 1.0
    %v1711 = vadd.f32 %v1679, 1.0
    %v1712 = vadd.f32 %v1680, 1.0
    %v1713 = vadd.f32 %v1681, 1.0
    %v1714 = vadd.f32 %v1682, 1.0
    %v1715 = vmul.f32 %v1459, %v1683
    %v1716 = vmul.f32 %v1460, %v1684
    %v1717 = vmul.f32 %v1461, %v1685
    %v1718 = vmul.f32 %v1462, %v1686
    %v1719 = vmul.f32 %v1463, %v1687
    %v1720 = vmul.f32 %v1464, %v1688
    %v1721 = vmul.f32 %v1465, %v1689
    %v1722 = vmul.f32 %v1466, %v1690
    %v1723 = vmul.f32 %v1467, %v1691
    %v1724 = vmul.f32 %v1468, %v1692
    %v1725 = vmul.f32 %v1469, %v1693
    %v1726 = vmul.f32 %v1470, %v1694
    %v1727 = vmul.f32 %v1471, %v1695
    %v1728 = vmul.f32 %v1472, %v1696
    %v1729 = vmul.f32 %v1473, %v1697
    %v1730 = vmul.f32 %v1474, %v1698
    %v1731 = vmul.f32 %v1475, %v1699
    %v1732 = vmul.f32 %v1476, %v1700
    %v1733 = vmul.f32 %v1477, %v1701
    %v1734 = vmul.f32 %v1478, %v1702
    %v1735 = vmul.f32 %v1479, %v1703
    %v1736 = vmul.f32 %v1480, %v1704
    %v1737 = vmul.f32 %v1481, %v1705
    %v1738 = vmul.f32 %v1482, %v1706
    %v1739 = vmul.f32 %v1483, %v1707
    %v1740 = vmul.f32 %v1484, %v1708
    %v1741 = vmul.f32 %v1485, %v1709
    %v1742 = vmul.f32 %v1486, %v1710
    %v1743 = vmul.f32 %v1487, %v1711
    %v1744 = vmul.f32 %v1488, %v1712
    %v1745 = vmul.f32 %v1489, %v1713
    %v1746 = vmul.f32 %v1490, %v1714
    %v1747 = vld [vmem:[%s3] sm:$0xff]
    %v1748 = vld [vmem:[%s3 + $0x8] sm:$0xff]
    %v1749 = vld [vmem:[%s3 + $0x10] sm:$0xff]
    %v1750 = vld [vmem:[%s3 + $0x18] sm:$0xff]
    %v1751 = vld [vmem:[%s3 + $0x20] sm:$0xff]
    %v1752 = vld [vmem:[%s3 + $0x28] sm:$0xff]
    %v1753 = vld [vmem:[%s3 + $0x30] sm:$0xff]
    %v1754 = vld [vmem:[%s3 + $0x38] sm:$0xff]
    %v1755 = vld [vmem:[%s6 + $0x3] sm:$0x1]
    %v1757 = vperm.slane %v1755, 0
    %v1760 = vsel %vm677, %v1715, 0
    %v1763 = vsel %vm677, %v1716, 0
    %v1766 = vsel %vm677, %v1717, 0
    %v1769 = vsel %vm677, %v1718, 0
    %v1772 = vsel %vm677, %v1719, 0
    %v1775 = vsel %vm677, %v1720, 0
    %v1778 = vsel %vm677, %v1721, 0
    %v1781 = vsel %vm677, %v1722, 0
    %v1784 = vsel %vm677, %v1723, 0
    %v1787 = vsel %vm677, %v1724, 0
    %v1790 = vsel %vm677, %v1725, 0
    %v1793 = vsel %vm677, %v1726, 0
    %v1796 = vsel %vm677, %v1727, 0
    %v1799 = vsel %vm677, %v1728, 0
    %v1802 = vsel %vm677, %v1729, 0
    %v1805 = vsel %vm677, %v1730, 0
    %v1808 = vsel %vm677, %v1731, 0
    %v1811 = vsel %vm677, %v1732, 0
    %v1814 = vsel %vm677, %v1733, 0
    %v1817 = vsel %vm677, %v1734, 0
    %v1820 = vsel %vm677, %v1735, 0
    %v1823 = vsel %vm677, %v1736, 0
    %v1826 = vsel %vm677, %v1737, 0
    %v1829 = vsel %vm677, %v1738, 0
    %v1832 = vsel %vm677, %v1739, 0
    %v1835 = vsel %vm677, %v1740, 0
    %v1838 = vsel %vm677, %v1741, 0
    %v1841 = vsel %vm677, %v1742, 0
    %v1844 = vsel %vm677, %v1743, 0
    %v1847 = vsel %vm677, %v1744, 0
    %v1850 = vsel %vm677, %v1745, 0
    %v1853 = vsel %vm677, %v1746, 0
    %1855 = vmatpush.msra.mxu0 0.0
    %1856 = vmatpush.msra.mxu0 0.0
    %1857 = vmatpush.msra.mxu0 0.0
    %1858 = vmatpush.msra.mxu0 0.0
    %1859 = vmatpush.msra.mxu0 0.0
    %1860 = vmatpush.msra.mxu0 0.0
    %1861 = vmatpush.msra.mxu0 0.0
    %1862 = vmatpush.msra.mxu0 0.0
    %1863 = vmatpush.msra.mxu0 %v1754
    %1864 = vmatpush.msra.mxu0 %v1753
    %1865 = vmatpush.msra.mxu0 %v1752
    %1866 = vmatpush.msra.mxu0 %v1751
    %1867 = vmatpush.msra.mxu0 %v1750
    %1868 = vmatpush.msra.mxu0 %v1749
    %1869 = vmatpush.msra.mxu0 %v1748
    %1870 = vmatpush.msra.mxu0 %v1747
    %1871 = vmatmul.f32.gmra.mxu0 %v1760
    %v1872 = vpop.f32.mrf.mxu0
    %v1873 = vadd.f32 %v1757, %v1872
    %1874 = vmatmul.f32.gmra.mxu0 %v1763
    %v1875 = vpop.f32.mrf.mxu0
    %v1876 = vadd.f32 %v1757, %v1875
    %1877 = vmatmul.f32.gmra.mxu0 %v1766
    %v1878 = vpop.f32.mrf.mxu0
    %v1879 = vadd.f32 %v1757, %v1878
    %1880 = vmatmul.f32.gmra.mxu0 %v1769
    %v1881 = vpop.f32.mrf.mxu0
    %v1882 = vadd.f32 %v1757, %v1881
    %1883 = vmatmul.f32.gmra.mxu0 %v1772
    %v1884 = vpop.f32.mrf.mxu0
    %v1885 = vadd.f32 %v1757, %v1884
    %1886 = vmatmul.f32.gmra.mxu0 %v1775
    %v1887 = vpop.f32.mrf.mxu0
    %v1888 = vadd.f32 %v1757, %v1887
    %1889 = vmatmul.f32.gmra.mxu0 %v1778
    %v1890 = vpop.f32.mrf.mxu0
    %v1891 = vadd.f32 %v1757, %v1890
    %1892 = vmatmul.f32.gmra.mxu0 %v1781
    %v1893 = vpop.f32.mrf.mxu0
    %v1894 = vadd.f32 %v1757, %v1893
    %1895 = vmatmul.f32.gmra.mxu0 %v1784
    %v1896 = vpop.f32.mrf.mxu0
    %v1897 = vadd.f32 %v1757, %v1896
    %1898 = vmatmul.f32.gmra.mxu0 %v1787
    %v1899 = vpop.f32.mrf.mxu0
    %v1900 = vadd.f32 %v1757, %v1899
    %1901 = vmatmul.f32.gmra.mxu0 %v1790
    %v1902 = vpop.f32.mrf.mxu0
    %v1903 = vadd.f32 %v1757, %v1902
    %1904 = vmatmul.f32.gmra.mxu0 %v1793
    %v1905 = vpop.f32.mrf.mxu0
    %v1906 = vadd.f32 %v1757, %v1905
    %1907 = vmatmul.f32.gmra.mxu0 %v1796
    %v1908 = vpop.f32.mrf.mxu0
    %v1909 = vadd.f32 %v1757, %v1908
    %1910 = vmatmul.f32.gmra.mxu0 %v1799
    %v1911 = vpop.f32.mrf.mxu0
    %v1912 = vadd.f32 %v1757, %v1911
    %1913 = vmatmul.f32.gmra.mxu0 %v1802
    %v1914 = vpop.f32.mrf.mxu0
    %v1915 = vadd.f32 %v1757, %v1914
    %1916 = vmatmul.f32.gmra.mxu0 %v1805
    %v1917 = vpop.f32.mrf.mxu0
    %v1918 = vadd.f32 %v1757, %v1917
    %1919 = vmatmul.f32.gmra.mxu0 %v1808
    %v1920 = vpop.f32.mrf.mxu0
    %v1921 = vadd.f32 %v1757, %v1920
    %1922 = vmatmul.f32.gmra.mxu0 %v1811
    %v1923 = vpop.f32.mrf.mxu0
    %v1924 = vadd.f32 %v1757, %v1923
    %1925 = vmatmul.f32.gmra.mxu0 %v1814
    %v1926 = vpop.f32.mrf.mxu0
    %v1927 = vadd.f32 %v1757, %v1926
    %1928 = vmatmul.f32.gmra.mxu0 %v1817
    %v1929 = vpop.f32.mrf.mxu0
    %v1930 = vadd.f32 %v1757, %v1929
    %1931 = vmatmul.f32.gmra.mxu0 %v1820
    %v1932 = vpop.f32.mrf.mxu0
    %v1933 = vadd.f32 %v1757, %v1932
    %1934 = vmatmul.f32.gmra.mxu0 %v1823
    %v1935 = vpop.f32.mrf.mxu0
    %v1936 = vadd.f32 %v1757, %v1935
    %1937 = vmatmul.f32.gmra.mxu0 %v1826
    %v1938 = vpop.f32.mrf.mxu0
    %v1939 = vadd.f32 %v1757, %v1938
    %1940 = vmatmul.f32.gmra.mxu0 %v1829
    %v1941 = vpop.f32.mrf.mxu0
    %v1942 = vadd.f32 %v1757, %v1941
    %1943 = vmatmul.f32.gmra.mxu0 %v1832
    %v1944 = vpop.f32.mrf.mxu0
    %v1945 = vadd.f32 %v1757, %v1944
    %1946 = vmatmul.f32.gmra.mxu0 %v1835
    %v1947 = vpop.f32.mrf.mxu0
    %v1948 = vadd.f32 %v1757, %v1947
    %1949 = vmatmul.f32.gmra.mxu0 %v1838
    %v1950 = vpop.f32.mrf.mxu0
    %v1951 = vadd.f32 %v1757, %v1950
    %1952 = vmatmul.f32.gmra.mxu0 %v1841
    %v1953 = vpop.f32.mrf.mxu0
    %v1954 = vadd.f32 %v1757, %v1953
    %1955 = vmatmul.f32.gmra.mxu0 %v1844
    %v1956 = vpop.f32.mrf.mxu0
    %v1957 = vadd.f32 %v1757, %v1956
    %1958 = vmatmul.f32.gmra.mxu0 %v1847
    %v1959 = vpop.f32.mrf.mxu0
    %v1960 = vadd.f32 %v1757, %v1959
    %1961 = vmatmul.f32.gmra.mxu0 %v1850
    %v1962 = vpop.f32.mrf.mxu0
    %v1963 = vadd.f32 %v1757, %v1962
    %1964 = vmatmul.f32.gmra.mxu0 %v1853
    %v1965 = vpop.f32.mrf.mxu0
    %v1966 = vadd.f32 %v1757, %v1965
    %1967 = vdwg.mxu0
    %v1968 = vld [vmem:[%s6 + $0x4] sm:$0x1]
    %v1969 = vld [vmem:[%s6 + $0x5] sm:$0x1]
    %1970 = vadd.xlane.f32.xlu0 %v1873
    %v1971 = vpop.xlane.xlu0 %1970
    %1972 = vadd.xlane.f32.xlu0 %v1876
    %v1973 = vpop.xlane.xlu0 %1972
    %1974 = vadd.xlane.f32.xlu0 %v1879
    %v1975 = vpop.xlane.xlu0 %1974
    %1976 = vadd.xlane.f32.xlu0 %v1882
    %v1977 = vpop.xlane.xlu0 %1976
    %1978 = vadd.xlane.f32.xlu0 %v1885
    %v1979 = vpop.xlane.xlu0 %1978
    %1980 = vadd.xlane.f32.xlu0 %v1888
    %v1981 = vpop.xlane.xlu0 %1980
    %1982 = vadd.xlane.f32.xlu0 %v1891
    %v1983 = vpop.xlane.xlu0 %1982
    %1984 = vadd.xlane.f32.xlu0 %v1894
    %v1985 = vpop.xlane.xlu0 %1984
    %1986 = vadd.xlane.f32.xlu0 %v1897
    %v1987 = vpop.xlane.xlu0 %1986
    %1988 = vadd.xlane.f32.xlu0 %v1900
    %v1989 = vpop.xlane.xlu0 %1988
    %1990 = vadd.xlane.f32.xlu0 %v1903
    %v1991 = vpop.xlane.xlu0 %1990
    %1992 = vadd.xlane.f32.xlu0 %v1906
    %v1993 = vpop.xlane.xlu0 %1992
    %1994 = vadd.xlane.f32.xlu0 %v1909
    %v1995 = vpop.xlane.xlu0 %1994
    %1996 = vadd.xlane.f32.xlu0 %v1912
    %v1997 = vpop.xlane.xlu0 %1996
    %1998 = vadd.xlane.f32.xlu0 %v1915
    %v1999 = vpop.xlane.xlu0 %1998
    %2000 = vadd.xlane.f32.xlu0 %v1918
    %v2001 = vpop.xlane.xlu0 %2000
    %2002 = vadd.xlane.f32.xlu0 %v1921
    %v2003 = vpop.xlane.xlu0 %2002
    %2004 = vadd.xlane.f32.xlu0 %v1924
    %v2005 = vpop.xlane.xlu0 %2004
    %2006 = vadd.xlane.f32.xlu0 %v1927
    %v2007 = vpop.xlane.xlu0 %2006
    %2008 = vadd.xlane.f32.xlu0 %v1930
    %v2009 = vpop.xlane.xlu0 %2008
    %2010 = vadd.xlane.f32.xlu0 %v1933
    %v2011 = vpop.xlane.xlu0 %2010
    %2012 = vadd.xlane.f32.xlu0 %v1936
    %v2013 = vpop.xlane.xlu0 %2012
    %2014 = vadd.xlane.f32.xlu0 %v1939
    %v2015 = vpop.xlane.xlu0 %2014
    %2016 = vadd.xlane.f32.xlu0 %v1942
    %v2017 = vpop.xlane.xlu0 %2016
    %2018 = vadd.xlane.f32.xlu0 %v1945
    %v2019 = vpop.xlane.xlu0 %2018
    %2020 = vadd.xlane.f32.xlu0 %v1948
    %v2021 = vpop.xlane.xlu0 %2020
    %2022 = vadd.xlane.f32.xlu0 %v1951
    %v2023 = vpop.xlane.xlu0 %2022
    %2024 = vadd.xlane.f32.xlu0 %v1954
    %v2025 = vpop.xlane.xlu0 %2024
    %2026 = vadd.xlane.f32.xlu0 %v1957
    %v2027 = vpop.xlane.xlu0 %2026
    %2028 = vadd.xlane.f32.xlu0 %v1960
    %v2029 = vpop.xlane.xlu0 %2028
    %2030 = vadd.xlane.f32.xlu0 %v1963
    %v2031 = vpop.xlane.xlu0 %2030
    %2032 = vadd.xlane.f32.xlu0 %v1966
    %v2033 = vpop.xlane.xlu0 %2032
    %v2034 = vrcp.pop 128.0
    %v2035 = vmul.f32 128.0, %v2034
    %v2036 = vsub.f32 1.0, %v2035
    %v2037 = vmul.f32 %v2034, %v2036
    %v2038 = vadd.f32 %v2034, %v2037
    %vm2039 = vweird.f32 %v2034
    %v2040 = vsel %vm2039, %v2034, %v2038
    %v2041 = vmul.f32 %v1971, %v2040
    %v2042 = vmul.f32 %v1973, %v2040
    %v2043 = vmul.f32 %v1975, %v2040
    %v2044 = vmul.f32 %v1977, %v2040
    %v2045 = vmul.f32 %v1979, %v2040
    %v2046 = vmul.f32 %v1981, %v2040
    %v2047 = vmul.f32 %v1983, %v2040
    %v2048 = vmul.f32 %v1985, %v2040
    %v2049 = vmul.f32 %v1987, %v2040
    %v2050 = vmul.f32 %v1989, %v2040
    %v2051 = vmul.f32 %v1991, %v2040
    %v2052 = vmul.f32 %v1993, %v2040
    %v2053 = vmul.f32 %v1995, %v2040
    %v2054 = vmul.f32 %v1997, %v2040
    %v2055 = vmul.f32 %v1999, %v2040
    %v2056 = vmul.f32 %v2001, %v2040
    %v2057 = vmul.f32 %v2003, %v2040
    %v2058 = vmul.f32 %v2005, %v2040
    %v2059 = vmul.f32 %v2007, %v2040
    %v2060 = vmul.f32 %v2009, %v2040
    %v2061 = vmul.f32 %v2011, %v2040
    %v2062 = vmul.f32 %v2013, %v2040
    %v2063 = vmul.f32 %v2015, %v2040
    %v2064 = vmul.f32 %v2017, %v2040
    %v2065 = vmul.f32 %v2019, %v2040
    %v2066 = vmul.f32 %v2021, %v2040
    %v2067 = vmul.f32 %v2023, %v2040
    %v2068 = vmul.f32 %v2025, %v2040
    %v2069 = vmul.f32 %v2027, %v2040
    %v2070 = vmul.f32 %v2029, %v2040
    %v2071 = vmul.f32 %v2031, %v2040
    %v2072 = vmul.f32 %v2033, %v2040
    %v2073 = vsub.f32 %v1873, %v2041
    %v2074 = vsub.f32 %v1876, %v2042
    %v2075 = vsub.f32 %v1879, %v2043
    %v2076 = vsub.f32 %v1882, %v2044
    %v2077 = vsub.f32 %v1885, %v2045
    %v2078 = vsub.f32 %v1888, %v2046
    %v2079 = vsub.f32 %v1891, %v2047
    %v2080 = vsub.f32 %v1894, %v2048
    %v2081 = vsub.f32 %v1897, %v2049
    %v2082 = vsub.f32 %v1900, %v2050
    %v2083 = vsub.f32 %v1903, %v2051
    %v2084 = vsub.f32 %v1906, %v2052
    %v2085 = vsub.f32 %v1909, %v2053
    %v2086 = vsub.f32 %v1912, %v2054
    %v2087 = vsub.f32 %v1915, %v2055
    %v2088 = vsub.f32 %v1918, %v2056
    %v2089 = vsub.f32 %v1921, %v2057
    %v2090 = vsub.f32 %v1924, %v2058
    %v2091 = vsub.f32 %v1927, %v2059
    %v2092 = vsub.f32 %v1930, %v2060
    %v2093 = vsub.f32 %v1933, %v2061
    %v2094 = vsub.f32 %v1936, %v2062
    %v2095 = vsub.f32 %v1939, %v2063
    %v2096 = vsub.f32 %v1942, %v2064
    %v2097 = vsub.f32 %v1945, %v2065
    %v2098 = vsub.f32 %v1948, %v2066
    %v2099 = vsub.f32 %v1951, %v2067
    %v2100 = vsub.f32 %v1954, %v2068
    %v2101 = vsub.f32 %v1957, %v2069
    %v2102 = vsub.f32 %v1960, %v2070
    %v2103 = vsub.f32 %v1963, %v2071
    %v2104 = vsub.f32 %v1966, %v2072
    %v2105 = vmul.f32 %v2073, %v2073
    %v2106 = vmul.f32 %v2074, %v2074
    %v2107 = vmul.f32 %v2075, %v2075
    %v2108 = vmul.f32 %v2076, %v2076
    %v2109 = vmul.f32 %v2077, %v2077
    %v2110 = vmul.f32 %v2078, %v2078
    %v2111 = vmul.f32 %v2079, %v2079
    %v2112 = vmul.f32 %v2080, %v2080
    %v2113 = vmul.f32 %v2081, %v2081
    %v2114 = vmul.f32 %v2082, %v2082
    %v2115 = vmul.f32 %v2083, %v2083
    %v2116 = vmul.f32 %v2084, %v2084
    %v2117 = vmul.f32 %v2085, %v2085
    %v2118 = vmul.f32 %v2086, %v2086
    %v2119 = vmul.f32 %v2087, %v2087
    %v2120 = vmul.f32 %v2088, %v2088
    %v2121 = vmul.f32 %v2089, %v2089
    %v2122 = vmul.f32 %v2090, %v2090
    %v2123 = vmul.f32 %v2091, %v2091
    %v2124 = vmul.f32 %v2092, %v2092
    %v2125 = vmul.f32 %v2093, %v2093
    %v2126 = vmul.f32 %v2094, %v2094
    %v2127 = vmul.f32 %v2095, %v2095
    %v2128 = vmul.f32 %v2096, %v2096
    %v2129 = vmul.f32 %v2097, %v2097
    %v2130 = vmul.f32 %v2098, %v2098
    %v2131 = vmul.f32 %v2099, %v2099
    %v2132 = vmul.f32 %v2100, %v2100
    %v2133 = vmul.f32 %v2101, %v2101
    %v2134 = vmul.f32 %v2102, %v2102
    %v2135 = vmul.f32 %v2103, %v2103
    %v2136 = vmul.f32 %v2104, %v2104
    %2137 = vadd.xlane.f32.xlu0 %v2105
    %v2138 = vpop.xlane.xlu0 %2137
    %2139 = vadd.xlane.f32.xlu0 %v2106
    %v2140 = vpop.xlane.xlu0 %2139
    %2141 = vadd.xlane.f32.xlu0 %v2107
    %v2142 = vpop.xlane.xlu0 %2141
    %2143 = vadd.xlane.f32.xlu0 %v2108
    %v2144 = vpop.xlane.xlu0 %2143
    %2145 = vadd.xlane.f32.xlu0 %v2109
    %v2146 = vpop.xlane.xlu0 %2145
    %2147 = vadd.xlane.f32.xlu0 %v2110
    %v2148 = vpop.xlane.xlu0 %2147
    %2149 = vadd.xlane.f32.xlu0 %v2111
    %v2150 = vpop.xlane.xlu0 %2149
    %2151 = vadd.xlane.f32.xlu0 %v2112
    %v2152 = vpop.xlane.xlu0 %2151
    %2153 = vadd.xlane.f32.xlu0 %v2113
    %v2154 = vpop.xlane.xlu0 %2153
    %2155 = vadd.xlane.f32.xlu0 %v2114
    %v2156 = vpop.xlane.xlu0 %2155
    %2157 = vadd.xlane.f32.xlu0 %v2115
    %v2158 = vpop.xlane.xlu0 %2157
    %2159 = vadd.xlane.f32.xlu0 %v2116
    %v2160 = vpop.xlane.xlu0 %2159
    %2161 = vadd.xlane.f32.xlu0 %v2117
    %v2162 = vpop.xlane.xlu0 %2161
    %2163 = vadd.xlane.f32.xlu0 %v2118
    %v2164 = vpop.xlane.xlu0 %2163
    %2165 = vadd.xlane.f32.xlu0 %v2119
    %v2166 = vpop.xlane.xlu0 %2165
    %2167 = vadd.xlane.f32.xlu0 %v2120
    %v2168 = vpop.xlane.xlu0 %2167
    %2169 = vadd.xlane.f32.xlu0 %v2121
    %v2170 = vpop.xlane.xlu0 %2169
    %2171 = vadd.xlane.f32.xlu0 %v2122
    %v2172 = vpop.xlane.xlu0 %2171
    %2173 = vadd.xlane.f32.xlu0 %v2123
    %v2174 = vpop.xlane.xlu0 %2173
    %2175 = vadd.xlane.f32.xlu0 %v2124
    %v2176 = vpop.xlane.xlu0 %2175
    %2177 = vadd.xlane.f32.xlu0 %v2125
    %v2178 = vpop.xlane.xlu0 %2177
    %2179 = vadd.xlane.f32.xlu0 %v2126
    %v2180 = vpop.xlane.xlu0 %2179
    %2181 = vadd.xlane.f32.xlu0 %v2127
    %v2182 = vpop.xlane.xlu0 %2181
    %2183 = vadd.xlane.f32.xlu0 %v2128
    %v2184 = vpop.xlane.xlu0 %2183
    %2185 = vadd.xlane.f32.xlu0 %v2129
    %v2186 = vpop.xlane.xlu0 %2185
    %2187 = vadd.xlane.f32.xlu0 %v2130
    %v2188 = vpop.xlane.xlu0 %2187
    %2189 = vadd.xlane.f32.xlu0 %v2131
    %v2190 = vpop.xlane.xlu0 %2189
    %2191 = vadd.xlane.f32.xlu0 %v2132
    %v2192 = vpop.xlane.xlu0 %2191
    %2193 = vadd.xlane.f32.xlu0 %v2133
    %v2194 = vpop.xlane.xlu0 %2193
    %2195 = vadd.xlane.f32.xlu0 %v2134
    %v2196 = vpop.xlane.xlu0 %2195
    %2197 = vadd.xlane.f32.xlu0 %v2135
    %v2198 = vpop.xlane.xlu0 %2197
    %2199 = vadd.xlane.f32.xlu0 %v2136
    %v2200 = vpop.xlane.xlu0 %2199
    %v2201 = vmul.f32 %v2138, %v2040
    %v2202 = vmul.f32 %v2140, %v2040
    %v2203 = vmul.f32 %v2142, %v2040
    %v2204 = vmul.f32 %v2144, %v2040
    %v2205 = vmul.f32 %v2146, %v2040
    %v2206 = vmul.f32 %v2148, %v2040
    %v2207 = vmul.f32 %v2150, %v2040
    %v2208 = vmul.f32 %v2152, %v2040
    %v2209 = vmul.f32 %v2154, %v2040
    %v2210 = vmul.f32 %v2156, %v2040
    %v2211 = vmul.f32 %v2158, %v2040
    %v2212 = vmul.f32 %v2160, %v2040
    %v2213 = vmul.f32 %v2162, %v2040
    %v2214 = vmul.f32 %v2164, %v2040
    %v2215 = vmul.f32 %v2166, %v2040
    %v2216 = vmul.f32 %v2168, %v2040
    %v2217 = vmul.f32 %v2170, %v2040
    %v2218 = vmul.f32 %v2172, %v2040
    %v2219 = vmul.f32 %v2174, %v2040
    %v2220 = vmul.f32 %v2176, %v2040
    %v2221 = vmul.f32 %v2178, %v2040
    %v2222 = vmul.f32 %v2180, %v2040
    %v2223 = vmul.f32 %v2182, %v2040
    %v2224 = vmul.f32 %v2184, %v2040
    %v2225 = vmul.f32 %v2186, %v2040
    %v2226 = vmul.f32 %v2188, %v2040
    %v2227 = vmul.f32 %v2190, %v2040
    %v2228 = vmul.f32 %v2192, %v2040
    %v2229 = vmul.f32 %v2194, %v2040
    %v2230 = vmul.f32 %v2196, %v2040
    %v2231 = vmul.f32 %v2198, %v2040
    %v2232 = vmul.f32 %v2200, %v2040
    %v2233 = vadd.f32 %v2201, 1e-05
    %v2234 = vadd.f32 %v2202, 1e-05
    %v2235 = vadd.f32 %v2203, 1e-05
    %v2236 = vadd.f32 %v2204, 1e-05
    %v2237 = vadd.f32 %v2205, 1e-05
    %v2238 = vadd.f32 %v2206, 1e-05
    %v2239 = vadd.f32 %v2207, 1e-05
    %v2240 = vadd.f32 %v2208, 1e-05
    %v2241 = vadd.f32 %v2209, 1e-05
    %v2242 = vadd.f32 %v2210, 1e-05
    %v2243 = vadd.f32 %v2211, 1e-05
    %v2244 = vadd.f32 %v2212, 1e-05
    %v2245 = vadd.f32 %v2213, 1e-05
    %v2246 = vadd.f32 %v2214, 1e-05
    %v2247 = vadd.f32 %v2215, 1e-05
    %v2248 = vadd.f32 %v2216, 1e-05
    %v2249 = vadd.f32 %v2217, 1e-05
    %v2250 = vadd.f32 %v2218, 1e-05
    %v2251 = vadd.f32 %v2219, 1e-05
    %v2252 = vadd.f32 %v2220, 1e-05
    %v2253 = vadd.f32 %v2221, 1e-05
    %v2254 = vadd.f32 %v2222, 1e-05
    %v2255 = vadd.f32 %v2223, 1e-05
    %v2256 = vadd.f32 %v2224, 1e-05
    %v2257 = vadd.f32 %v2225, 1e-05
    %v2258 = vadd.f32 %v2226, 1e-05
    %v2259 = vadd.f32 %v2227, 1e-05
    %v2260 = vadd.f32 %v2228, 1e-05
    %v2261 = vadd.f32 %v2229, 1e-05
    %v2262 = vadd.f32 %v2230, 1e-05
    %v2263 = vadd.f32 %v2231, 1e-05
    %v2264 = vadd.f32 %v2232, 1e-05
    %v2265 = vrsqrt.pop %v2233
    %v2266 = vmul.f32 %v2265, %v2233
    %v2267 = vmul.f32 %v2266, %v2265
    %v2268 = vmul.f32 0.5, %v2267
    %v2269 = vsub.f32 1.5, %v2268
    %v2270 = vmul.f32 %v2265, %v2269
    %vm2271 = vweird.f32 %v2233
    %vm2272 = vweird.f32 %v2265
    %vm2273 = vmor %vm2271, %vm2272
    %v2274 = vsel %vm2273, %v2265, %v2270
    %v2275 = vrsqrt.pop %v2234
    %v2276 = vmul.f32 %v2275, %v2234
    %v2277 = vmul.f32 %v2276, %v2275
    %v2278 = vmul.f32 0.5, %v2277
    %v2279 = vsub.f32 1.5, %v2278
    %v2280 = vmul.f32 %v2275, %v2279
    %vm2281 = vweird.f32 %v2234
    %vm2282 = vweird.f32 %v2275
    %vm2283 = vmor %vm2281, %vm2282
    %v2284 = vsel %vm2283, %v2275, %v2280
    %v2285 = vrsqrt.pop %v2235
    %v2286 = vmul.f32 %v2285, %v2235
    %v2287 = vmul.f32 %v2286, %v2285
    %v2288 = vmul.f32 0.5, %v2287
    %v2289 = vsub.f32 1.5, %v2288
    %v2290 = vmul.f32 %v2285, %v2289
    %vm2291 = vweird.f32 %v2235
    %vm2292 = vweird.f32 %v2285
    %vm2293 = vmor %vm2291, %vm2292
    %v2294 = vsel %vm2293, %v2285, %v2290
    %v2295 = vrsqrt.pop %v2236
    %v2296 = vmul.f32 %v2295, %v2236
    %v2297 = vmul.f32 %v2296, %v2295
    %v2298 = vmul.f32 0.5, %v2297
    %v2299 = vsub.f32 1.5, %v2298
    %v2300 = vmul.f32 %v2295, %v2299
    %vm2301 = vweird.f32 %v2236
    %vm2302 = vweird.f32 %v2295
    %vm2303 = vmor %vm2301, %vm2302
    %v2304 = vsel %vm2303, %v2295, %v2300
    %v2305 = vrsqrt.pop %v2237
    %v2306 = vmul.f32 %v2305, %v2237
    %v2307 = vmul.f32 %v2306, %v2305
    %v2308 = vmul.f32 0.5, %v2307
    %v2309 = vsub.f32 1.5, %v2308
    %v2310 = vmul.f32 %v2305, %v2309
    %vm2311 = vweird.f32 %v2237
    %vm2312 = vweird.f32 %v2305
    %vm2313 = vmor %vm2311, %vm2312
    %v2314 = vsel %vm2313, %v2305, %v2310
    %v2315 = vrsqrt.pop %v2238
    %v2316 = vmul.f32 %v2315, %v2238
    %v2317 = vmul.f32 %v2316, %v2315
    %v2318 = vmul.f32 0.5, %v2317
    %v2319 = vsub.f32 1.5, %v2318
    %v2320 = vmul.f32 %v2315, %v2319
    %vm2321 = vweird.f32 %v2238
    %vm2322 = vweird.f32 %v2315
    %vm2323 = vmor %vm2321, %vm2322
    %v2324 = vsel %vm2323, %v2315, %v2320
    %v2325 = vrsqrt.pop %v2239
    %v2326 = vmul.f32 %v2325, %v2239
    %v2327 = vmul.f32 %v2326, %v2325
    %v2328 = vmul.f32 0.5, %v2327
    %v2329 = vsub.f32 1.5, %v2328
    %v2330 = vmul.f32 %v2325, %v2329
    %vm2331 = vweird.f32 %v2239
    %vm2332 = vweird.f32 %v2325
    %vm2333 = vmor %vm2331, %vm2332
    %v2334 = vsel %vm2333, %v2325, %v2330
    %v2335 = vrsqrt.pop %v2240
    %v2336 = vmul.f32 %v2335, %v2240
    %v2337 = vmul.f32 %v2336, %v2335
    %v2338 = vmul.f32 0.5, %v2337
    %v2339 = vsub.f32 1.5, %v2338
    %v2340 = vmul.f32 %v2335, %v2339
    %vm2341 = vweird.f32 %v2240
    %vm2342 = vweird.f32 %v2335
    %vm2343 = vmor %vm2341, %vm2342
    %v2344 = vsel %vm2343, %v2335, %v2340
    %v2345 = vrsqrt.pop %v2241
    %v2346 = vmul.f32 %v2345, %v2241
    %v2347 = vmul.f32 %v2346, %v2345
    %v2348 = vmul.f32 0.5, %v2347
    %v2349 = vsub.f32 1.5, %v2348
    %v2350 = vmul.f32 %v2345, %v2349
    %vm2351 = vweird.f32 %v2241
    %vm2352 = vweird.f32 %v2345
    %vm2353 = vmor %vm2351, %vm2352
    %v2354 = vsel %vm2353, %v2345, %v2350
    %v2355 = vrsqrt.pop %v2242
    %v2356 = vmul.f32 %v2355, %v2242
    %v2357 = vmul.f32 %v2356, %v2355
    %v2358 = vmul.f32 0.5, %v2357
    %v2359 = vsub.f32 1.5, %v2358
    %v2360 = vmul.f32 %v2355, %v2359
    %vm2361 = vweird.f32 %v2242
    %vm2362 = vweird.f32 %v2355
    %vm2363 = vmor %vm2361, %vm2362
    %v2364 = vsel %vm2363, %v2355, %v2360
    %v2365 = vrsqrt.pop %v2243
    %v2366 = vmul.f32 %v2365, %v2243
    %v2367 = vmul.f32 %v2366, %v2365
    %v2368 = vmul.f32 0.5, %v2367
    %v2369 = vsub.f32 1.5, %v2368
    %v2370 = vmul.f32 %v2365, %v2369
    %vm2371 = vweird.f32 %v2243
    %vm2372 = vweird.f32 %v2365
    %vm2373 = vmor %vm2371, %vm2372
    %v2374 = vsel %vm2373, %v2365, %v2370
    %v2375 = vrsqrt.pop %v2244
    %v2376 = vmul.f32 %v2375, %v2244
    %v2377 = vmul.f32 %v2376, %v2375
    %v2378 = vmul.f32 0.5, %v2377
    %v2379 = vsub.f32 1.5, %v2378
    %v2380 = vmul.f32 %v2375, %v2379
    %vm2381 = vweird.f32 %v2244
    %vm2382 = vweird.f32 %v2375
    %vm2383 = vmor %vm2381, %vm2382
    %v2384 = vsel %vm2383, %v2375, %v2380
    %v2385 = vrsqrt.pop %v2245
    %v2386 = vmul.f32 %v2385, %v2245
    %v2387 = vmul.f32 %v2386, %v2385
    %v2388 = vmul.f32 0.5, %v2387
    %v2389 = vsub.f32 1.5, %v2388
    %v2390 = vmul.f32 %v2385, %v2389
    %vm2391 = vweird.f32 %v2245
    %vm2392 = vweird.f32 %v2385
    %vm2393 = vmor %vm2391, %vm2392
    %v2394 = vsel %vm2393, %v2385, %v2390
    %v2395 = vrsqrt.pop %v2246
    %v2396 = vmul.f32 %v2395, %v2246
    %v2397 = vmul.f32 %v2396, %v2395
    %v2398 = vmul.f32 0.5, %v2397
    %v2399 = vsub.f32 1.5, %v2398
    %v2400 = vmul.f32 %v2395, %v2399
    %vm2401 = vweird.f32 %v2246
    %vm2402 = vweird.f32 %v2395
    %vm2403 = vmor %vm2401, %vm2402
    %v2404 = vsel %vm2403, %v2395, %v2400
    %v2405 = vrsqrt.pop %v2247
    %v2406 = vmul.f32 %v2405, %v2247
    %v2407 = vmul.f32 %v2406, %v2405
    %v2408 = vmul.f32 0.5, %v2407
    %v2409 = vsub.f32 1.5, %v2408
    %v2410 = vmul.f32 %v2405, %v2409
    %vm2411 = vweird.f32 %v2247
    %vm2412 = vweird.f32 %v2405
    %vm2413 = vmor %vm2411, %vm2412
    %v2414 = vsel %vm2413, %v2405, %v2410
    %v2415 = vrsqrt.pop %v2248
    %v2416 = vmul.f32 %v2415, %v2248
    %v2417 = vmul.f32 %v2416, %v2415
    %v2418 = vmul.f32 0.5, %v2417
    %v2419 = vsub.f32 1.5, %v2418
    %v2420 = vmul.f32 %v2415, %v2419
    %vm2421 = vweird.f32 %v2248
    %vm2422 = vweird.f32 %v2415
    %vm2423 = vmor %vm2421, %vm2422
    %v2424 = vsel %vm2423, %v2415, %v2420
    %v2425 = vrsqrt.pop %v2249
    %v2426 = vmul.f32 %v2425, %v2249
    %v2427 = vmul.f32 %v2426, %v2425
    %v2428 = vmul.f32 0.5, %v2427
    %v2429 = vsub.f32 1.5, %v2428
    %v2430 = vmul.f32 %v2425, %v2429
    %vm2431 = vweird.f32 %v2249
    %vm2432 = vweird.f32 %v2425
    %vm2433 = vmor %vm2431, %vm2432
    %v2434 = vsel %vm2433, %v2425, %v2430
    %v2435 = vrsqrt.pop %v2250
    %v2436 = vmul.f32 %v2435, %v2250
    %v2437 = vmul.f32 %v2436, %v2435
    %v2438 = vmul.f32 0.5, %v2437
    %v2439 = vsub.f32 1.5, %v2438
    %v2440 = vmul.f32 %v2435, %v2439
    %vm2441 = vweird.f32 %v2250
    %vm2442 = vweird.f32 %v2435
    %vm2443 = vmor %vm2441, %vm2442
    %v2444 = vsel %vm2443, %v2435, %v2440
    %v2445 = vrsqrt.pop %v2251
    %v2446 = vmul.f32 %v2445, %v2251
    %v2447 = vmul.f32 %v2446, %v2445
    %v2448 = vmul.f32 0.5, %v2447
    %v2449 = vsub.f32 1.5, %v2448
    %v2450 = vmul.f32 %v2445, %v2449
    %vm2451 = vweird.f32 %v2251
    %vm2452 = vweird.f32 %v2445
    %vm2453 = vmor %vm2451, %vm2452
    %v2454 = vsel %vm2453, %v2445, %v2450
    %v2455 = vrsqrt.pop %v2252
    %v2456 = vmul.f32 %v2455, %v2252
    %v2457 = vmul.f32 %v2456, %v2455
    %v2458 = vmul.f32 0.5, %v2457
    %v2459 = vsub.f32 1.5, %v2458
    %v2460 = vmul.f32 %v2455, %v2459
    %vm2461 = vweird.f32 %v2252
    %vm2462 = vweird.f32 %v2455
    %vm2463 = vmor %vm2461, %vm2462
    %v2464 = vsel %vm2463, %v2455, %v2460
    %v2465 = vrsqrt.pop %v2253
    %v2466 = vmul.f32 %v2465, %v2253
    %v2467 = vmul.f32 %v2466, %v2465
    %v2468 = vmul.f32 0.5, %v2467
    %v2469 = vsub.f32 1.5, %v2468
    %v2470 = vmul.f32 %v2465, %v2469
    %vm2471 = vweird.f32 %v2253
    %vm2472 = vweird.f32 %v2465
    %vm2473 = vmor %vm2471, %vm2472
    %v2474 = vsel %vm2473, %v2465, %v2470
    %v2475 = vrsqrt.pop %v2254
    %v2476 = vmul.f32 %v2475, %v2254
    %v2477 = vmul.f32 %v2476, %v2475
    %v2478 = vmul.f32 0.5, %v2477
    %v2479 = vsub.f32 1.5, %v2478
    %v2480 = vmul.f32 %v2475, %v2479
    %vm2481 = vweird.f32 %v2254
    %vm2482 = vweird.f32 %v2475
    %vm2483 = vmor %vm2481, %vm2482
    %v2484 = vsel %vm2483, %v2475, %v2480
    %v2485 = vrsqrt.pop %v2255
    %v2486 = vmul.f32 %v2485, %v2255
    %v2487 = vmul.f32 %v2486, %v2485
    %v2488 = vmul.f32 0.5, %v2487
    %v2489 = vsub.f32 1.5, %v2488
    %v2490 = vmul.f32 %v2485, %v2489
    %vm2491 = vweird.f32 %v2255
    %vm2492 = vweird.f32 %v2485
    %vm2493 = vmor %vm2491, %vm2492
    %v2494 = vsel %vm2493, %v2485, %v2490
    %v2495 = vrsqrt.pop %v2256
    %v2496 = vmul.f32 %v2495, %v2256
    %v2497 = vmul.f32 %v2496, %v2495
    %v2498 = vmul.f32 0.5, %v2497
    %v2499 = vsub.f32 1.5, %v2498
    %v2500 = vmul.f32 %v2495, %v2499
    %vm2501 = vweird.f32 %v2256
    %vm2502 = vweird.f32 %v2495
    %vm2503 = vmor %vm2501, %vm2502
    %v2504 = vsel %vm2503, %v2495, %v2500
    %v2505 = vrsqrt.pop %v2257
    %v2506 = vmul.f32 %v2505, %v2257
    %v2507 = vmul.f32 %v2506, %v2505
    %v2508 = vmul.f32 0.5, %v2507
    %v2509 = vsub.f32 1.5, %v2508
    %v2510 = vmul.f32 %v2505, %v2509
    %vm2511 = vweird.f32 %v2257
    %vm2512 = vweird.f32 %v2505
    %vm2513 = vmor %vm2511, %vm2512
    %v2514 = vsel %vm2513, %v2505, %v2510
    %v2515 = vrsqrt.pop %v2258
    %v2516 = vmul.f32 %v2515, %v2258
    %v2517 = vmul.f32 %v2516, %v2515
    %v2518 = vmul.f32 0.5, %v2517
    %v2519 = vsub.f32 1.5, %v2518
    %v2520 = vmul.f32 %v2515, %v2519
    %vm2521 = vweird.f32 %v2258
    %vm2522 = vweird.f32 %v2515
    %vm2523 = vmor %vm2521, %vm2522
    %v2524 = vsel %vm2523, %v2515, %v2520
    %v2525 = vrsqrt.pop %v2259
    %v2526 = vmul.f32 %v2525, %v2259
    %v2527 = vmul.f32 %v2526, %v2525
    %v2528 = vmul.f32 0.5, %v2527
    %v2529 = vsub.f32 1.5, %v2528
    %v2530 = vmul.f32 %v2525, %v2529
    %vm2531 = vweird.f32 %v2259
    %vm2532 = vweird.f32 %v2525
    %vm2533 = vmor %vm2531, %vm2532
    %v2534 = vsel %vm2533, %v2525, %v2530
    %v2535 = vrsqrt.pop %v2260
    %v2536 = vmul.f32 %v2535, %v2260
    %v2537 = vmul.f32 %v2536, %v2535
    %v2538 = vmul.f32 0.5, %v2537
    %v2539 = vsub.f32 1.5, %v2538
    %v2540 = vmul.f32 %v2535, %v2539
    %vm2541 = vweird.f32 %v2260
    %vm2542 = vweird.f32 %v2535
    %vm2543 = vmor %vm2541, %vm2542
    %v2544 = vsel %vm2543, %v2535, %v2540
    %v2545 = vrsqrt.pop %v2261
    %v2546 = vmul.f32 %v2545, %v2261
    %v2547 = vmul.f32 %v2546, %v2545
    %v2548 = vmul.f32 0.5, %v2547
    %v2549 = vsub.f32 1.5, %v2548
    %v2550 = vmul.f32 %v2545, %v2549
    %vm2551 = vweird.f32 %v2261
    %vm2552 = vweird.f32 %v2545
    %vm2553 = vmor %vm2551, %vm2552
    %v2554 = vsel %vm2553, %v2545, %v2550
    %v2555 = vrsqrt.pop %v2262
    %v2556 = vmul.f32 %v2555, %v2262
    %v2557 = vmul.f32 %v2556, %v2555
    %v2558 = vmul.f32 0.5, %v2557
    %v2559 = vsub.f32 1.5, %v2558
    %v2560 = vmul.f32 %v2555, %v2559
    %vm2561 = vweird.f32 %v2262
    %vm2562 = vweird.f32 %v2555
    %vm2563 = vmor %vm2561, %vm2562
    %v2564 = vsel %vm2563, %v2555, %v2560
    %v2565 = vrsqrt.pop %v2263
    %v2566 = vmul.f32 %v2565, %v2263
    %v2567 = vmul.f32 %v2566, %v2565
    %v2568 = vmul.f32 0.5, %v2567
    %v2569 = vsub.f32 1.5, %v2568
    %v2570 = vmul.f32 %v2565, %v2569
    %vm2571 = vweird.f32 %v2263
    %vm2572 = vweird.f32 %v2565
    %vm2573 = vmor %vm2571, %vm2572
    %v2574 = vsel %vm2573, %v2565, %v2570
    %v2575 = vrsqrt.pop %v2264
    %v2576 = vmul.f32 %v2575, %v2264
    %v2577 = vmul.f32 %v2576, %v2575
    %v2578 = vmul.f32 0.5, %v2577
    %v2579 = vsub.f32 1.5, %v2578
    %v2580 = vmul.f32 %v2575, %v2579
    %vm2581 = vweird.f32 %v2264
    %vm2582 = vweird.f32 %v2575
    %vm2583 = vmor %vm2581, %vm2582
    %v2584 = vsel %vm2583, %v2575, %v2580
    %v2585 = vmul.f32 %v2073, %v2274
    %v2586 = vmul.f32 %v2074, %v2284
    %v2587 = vmul.f32 %v2075, %v2294
    %v2588 = vmul.f32 %v2076, %v2304
    %v2589 = vmul.f32 %v2077, %v2314
    %v2590 = vmul.f32 %v2078, %v2324
    %v2591 = vmul.f32 %v2079, %v2334
    %v2592 = vmul.f32 %v2080, %v2344
    %v2593 = vmul.f32 %v2081, %v2354
    %v2594 = vmul.f32 %v2082, %v2364
    %v2595 = vmul.f32 %v2083, %v2374
    %v2596 = vmul.f32 %v2084, %v2384
    %v2597 = vmul.f32 %v2085, %v2394
    %v2598 = vmul.f32 %v2086, %v2404
    %v2599 = vmul.f32 %v2087, %v2414
    %v2600 = vmul.f32 %v2088, %v2424
    %v2601 = vmul.f32 %v2089, %v2434
    %v2602 = vmul.f32 %v2090, %v2444
    %v2603 = vmul.f32 %v2091, %v2454
    %v2604 = vmul.f32 %v2092, %v2464
    %v2605 = vmul.f32 %v2093, %v2474
    %v2606 = vmul.f32 %v2094, %v2484
    %v2607 = vmul.f32 %v2095, %v2494
    %v2608 = vmul.f32 %v2096, %v2504
    %v2609 = vmul.f32 %v2097, %v2514
    %v2610 = vmul.f32 %v2098, %v2524
    %v2611 = vmul.f32 %v2099, %v2534
    %v2612 = vmul.f32 %v2100, %v2544
    %v2613 = vmul.f32 %v2101, %v2554
    %v2614 = vmul.f32 %v2102, %v2564
    %v2615 = vmul.f32 %v2103, %v2574
    %v2616 = vmul.f32 %v2104, %v2584
    %v2618 = vperm.slane %v1968, 0
    %v2620 = vmul.f32 %v2585, %v2618
    %v2621 = vmul.f32 %v2586, %v2618
    %v2622 = vmul.f32 %v2587, %v2618
    %v2623 = vmul.f32 %v2588, %v2618
    %v2624 = vmul.f32 %v2589, %v2618
    %v2625 = vmul.f32 %v2590, %v2618
    %v2626 = vmul.f32 %v2591, %v2618
    %v2627 = vmul.f32 %v2592, %v2618
    %v2628 = vmul.f32 %v2593, %v2618
    %v2629 = vmul.f32 %v2594, %v2618
    %v2630 = vmul.f32 %v2595, %v2618
    %v2631 = vmul.f32 %v2596, %v2618
    %v2632 = vmul.f32 %v2597, %v2618
    %v2633 = vmul.f32 %v2598, %v2618
    %v2634 = vmul.f32 %v2599, %v2618
    %v2635 = vmul.f32 %v2600, %v2618
    %v2636 = vmul.f32 %v2601, %v2618
    %v2637 = vmul.f32 %v2602, %v2618
    %v2638 = vmul.f32 %v2603, %v2618
    %v2639 = vmul.f32 %v2604, %v2618
    %v2640 = vmul.f32 %v2605, %v2618
    %v2641 = vmul.f32 %v2606, %v2618
    %v2642 = vmul.f32 %v2607, %v2618
    %v2643 = vmul.f32 %v2608, %v2618
    %v2644 = vmul.f32 %v2609, %v2618
    %v2645 = vmul.f32 %v2610, %v2618
    %v2646 = vmul.f32 %v2611, %v2618
    %v2647 = vmul.f32 %v2612, %v2618
    %v2648 = vmul.f32 %v2613, %v2618
    %v2649 = vmul.f32 %v2614, %v2618
    %v2650 = vmul.f32 %v2615, %v2618
    %v2651 = vmul.f32 %v2616, %v2618
    %v2653 = vperm.slane %v1969, 0
    %v2655 = vadd.f32 %v2620, %v2653
    %v2656 = vadd.f32 %v2621, %v2653
    %v2657 = vadd.f32 %v2622, %v2653
    %v2658 = vadd.f32 %v2623, %v2653
    %v2659 = vadd.f32 %v2624, %v2653
    %v2660 = vadd.f32 %v2625, %v2653
    %v2661 = vadd.f32 %v2626, %v2653
    %v2662 = vadd.f32 %v2627, %v2653
    %v2663 = vadd.f32 %v2628, %v2653
    %v2664 = vadd.f32 %v2629, %v2653
    %v2665 = vadd.f32 %v2630, %v2653
    %v2666 = vadd.f32 %v2631, %v2653
    %v2667 = vadd.f32 %v2632, %v2653
    %v2668 = vadd.f32 %v2633, %v2653
    %v2669 = vadd.f32 %v2634, %v2653
    %v2670 = vadd.f32 %v2635, %v2653
    %v2671 = vadd.f32 %v2636, %v2653
    %v2672 = vadd.f32 %v2637, %v2653
    %v2673 = vadd.f32 %v2638, %v2653
    %v2674 = vadd.f32 %v2639, %v2653
    %v2675 = vadd.f32 %v2640, %v2653
    %v2676 = vadd.f32 %v2641, %v2653
    %v2677 = vadd.f32 %v2642, %v2653
    %v2678 = vadd.f32 %v2643, %v2653
    %v2679 = vadd.f32 %v2644, %v2653
    %v2680 = vadd.f32 %v2645, %v2653
    %v2681 = vadd.f32 %v2646, %v2653
    %v2682 = vadd.f32 %v2647, %v2653
    %v2683 = vadd.f32 %v2648, %v2653
    %v2684 = vadd.f32 %v2649, %v2653
    %v2685 = vadd.f32 %v2650, %v2653
    %v2686 = vadd.f32 %v2651, %v2653
    %v2687 = vmul.f32 %v2655, 0.5
    %v2688 = vmul.f32 %v2656, 0.5
    %v2689 = vmul.f32 %v2657, 0.5
    %v2690 = vmul.f32 %v2658, 0.5
    %v2691 = vmul.f32 %v2659, 0.5
    %v2692 = vmul.f32 %v2660, 0.5
    %v2693 = vmul.f32 %v2661, 0.5
    %v2694 = vmul.f32 %v2662, 0.5
    %v2695 = vmul.f32 %v2663, 0.5
    %v2696 = vmul.f32 %v2664, 0.5
    %v2697 = vmul.f32 %v2665, 0.5
    %v2698 = vmul.f32 %v2666, 0.5
    %v2699 = vmul.f32 %v2667, 0.5
    %v2700 = vmul.f32 %v2668, 0.5
    %v2701 = vmul.f32 %v2669, 0.5
    %v2702 = vmul.f32 %v2670, 0.5
    %v2703 = vmul.f32 %v2671, 0.5
    %v2704 = vmul.f32 %v2672, 0.5
    %v2705 = vmul.f32 %v2673, 0.5
    %v2706 = vmul.f32 %v2674, 0.5
    %v2707 = vmul.f32 %v2675, 0.5
    %v2708 = vmul.f32 %v2676, 0.5
    %v2709 = vmul.f32 %v2677, 0.5
    %v2710 = vmul.f32 %v2678, 0.5
    %v2711 = vmul.f32 %v2679, 0.5
    %v2712 = vmul.f32 %v2680, 0.5
    %v2713 = vmul.f32 %v2681, 0.5
    %v2714 = vmul.f32 %v2682, 0.5
    %v2715 = vmul.f32 %v2683, 0.5
    %v2716 = vmul.f32 %v2684, 0.5
    %v2717 = vmul.f32 %v2685, 0.5
    %v2718 = vmul.f32 %v2686, 0.5
    %v2719 = vmul.f32 %v2655, 0.044715
    %v2720 = vmul.f32 %v2656, 0.044715
    %v2721 = vmul.f32 %v2657, 0.044715
    %v2722 = vmul.f32 %v2658, 0.044715
    %v2723 = vmul.f32 %v2659, 0.044715
    %v2724 = vmul.f32 %v2660, 0.044715
    %v2725 = vmul.f32 %v2661, 0.044715
    %v2726 = vmul.f32 %v2662, 0.044715
    %v2727 = vmul.f32 %v2663, 0.044715
    %v2728 = vmul.f32 %v2664, 0.044715
    %v2729 = vmul.f32 %v2665, 0.044715
    %v2730 = vmul.f32 %v2666, 0.044715
    %v2731 = vmul.f32 %v2667, 0.044715
    %v2732 = vmul.f32 %v2668, 0.044715
    %v2733 = vmul.f32 %v2669, 0.044715
    %v2734 = vmul.f32 %v2670, 0.044715
    %v2735 = vmul.f32 %v2671, 0.044715
    %v2736 = vmul.f32 %v2672, 0.044715
    %v2737 = vmul.f32 %v2673, 0.044715
    %v2738 = vmul.f32 %v2674, 0.044715
    %v2739 = vmul.f32 %v2675, 0.044715
    %v2740 = vmul.f32 %v2676, 0.044715
    %v2741 = vmul.f32 %v2677, 0.044715
    %v2742 = vmul.f32 %v2678, 0.044715
    %v2743 = vmul.f32 %v2679, 0.044715
    %v2744 = vmul.f32 %v2680, 0.044715
    %v2745 = vmul.f32 %v2681, 0.044715
    %v2746 = vmul.f32 %v2682, 0.044715
    %v2747 = vmul.f32 %v2683, 0.044715
    %v2748 = vmul.f32 %v2684, 0.044715
    %v2749 = vmul.f32 %v2685, 0.044715
    %v2750 = vmul.f32 %v2686, 0.044715
    %v2751 = vmul.f32 %v2719, %v2655
    %v2752 = vmul.f32 %v2720, %v2656
    %v2753 = vmul.f32 %v2721, %v2657
    %v2754 = vmul.f32 %v2722, %v2658
    %v2755 = vmul.f32 %v2723, %v2659
    %v2756 = vmul.f32 %v2724, %v2660
    %v2757 = vmul.f32 %v2725, %v2661
    %v2758 = vmul.f32 %v2726, %v2662
    %v2759 = vmul.f32 %v2727, %v2663
    %v2760 = vmul.f32 %v2728, %v2664
    %v2761 = vmul.f32 %v2729, %v2665
    %v2762 = vmul.f32 %v2730, %v2666
    %v2763 = vmul.f32 %v2731, %v2667
    %v2764 = vmul.f32 %v2732, %v2668
    %v2765 = vmul.f32 %v2733, %v2669
    %v2766 = vmul.f32 %v2734, %v2670
    %v2767 = vmul.f32 %v2735, %v2671
    %v2768 = vmul.f32 %v2736, %v2672
    %v2769 = vmul.f32 %v2737, %v2673
    %v2770 = vmul.f32 %v2738, %v2674
    %v2771 = vmul.f32 %v2739, %v2675
    %v2772 = vmul.f32 %v2740, %v2676
    %v2773 = vmul.f32 %v2741, %v2677
    %v2774 = vmul.f32 %v2742, %v2678
    %v2775 = vmul.f32 %v2743, %v2679
    %v2776 = vmul.f32 %v2744, %v2680
    %v2777 = vmul.f32 %v2745, %v2681
    %v2778 = vmul.f32 %v2746, %v2682
    %v2779 = vmul.f32 %v2747, %v2683
    %v2780 = vmul.f32 %v2748, %v2684
    %v2781 = vmul.f32 %v2749, %v2685
    %v2782 = vmul.f32 %v2750, %v2686
    %v2783 = vmul.f32 %v2751, %v2655
    %v2784 = vmul.f32 %v2752, %v2656
    %v2785 = vmul.f32 %v2753, %v2657
    %v2786 = vmul.f32 %v2754, %v2658
    %v2787 = vmul.f32 %v2755, %v2659
    %v2788 = vmul.f32 %v2756, %v2660
    %v2789 = vmul.f32 %v2757, %v2661
    %v2790 = vmul.f32 %v2758, %v2662
    %v2791 = vmul.f32 %v2759, %v2663
    %v2792 = vmul.f32 %v2760, %v2664
    %v2793 = vmul.f32 %v2761, %v2665
    %v2794 = vmul.f32 %v2762, %v2666
    %v2795 = vmul.f32 %v2763, %v2667
    %v2796 = vmul.f32 %v2764, %v2668
    %v2797 = vmul.f32 %v2765, %v2669
    %v2798 = vmul.f32 %v2766, %v2670
    %v2799 = vmul.f32 %v2767, %v2671
    %v2800 = vmul.f32 %v2768, %v2672
    %v2801 = vmul.f32 %v2769, %v2673
    %v2802 = vmul.f32 %v2770, %v2674
    %v2803 = vmul.f32 %v2771, %v2675
    %v2804 = vmul.f32 %v2772, %v2676
    %v2805 = vmul.f32 %v2773, %v2677
    %v2806 = vmul.f32 %v2774, %v2678
    %v2807 = vmul.f32 %v2775, %v2679
    %v2808 = vmul.f32 %v2776, %v2680
    %v2809 = vmul.f32 %v2777, %v2681
    %v2810 = vmul.f32 %v2778, %v2682
    %v2811 = vmul.f32 %v2779, %v2683
    %v2812 = vmul.f32 %v2780, %v2684
    %v2813 = vmul.f32 %v2781, %v2685
    %v2814 = vmul.f32 %v2782, %v2686
    %v2815 = vadd.f32 %v2655, %v2783
    %v2816 = vadd.f32 %v2656, %v2784
    %v2817 = vadd.f32 %v2657, %v2785
    %v2818 = vadd.f32 %v2658, %v2786
    %v2819 = vadd.f32 %v2659, %v2787
    %v2820 = vadd.f32 %v2660, %v2788
    %v2821 = vadd.f32 %v2661, %v2789
    %v2822 = vadd.f32 %v2662, %v2790
    %v2823 = vadd.f32 %v2663, %v2791
    %v2824 = vadd.f32 %v2664, %v2792
    %v2825 = vadd.f32 %v2665, %v2793
    %v2826 = vadd.f32 %v2666, %v2794
    %v2827 = vadd.f32 %v2667, %v2795
    %v2828 = vadd.f32 %v2668, %v2796
    %v2829 = vadd.f32 %v2669, %v2797
    %v2830 = vadd.f32 %v2670, %v2798
    %v2831 = vadd.f32 %v2671, %v2799
    %v2832 = vadd.f32 %v2672, %v2800
    %v2833 = vadd.f32 %v2673, %v2801
    %v2834 = vadd.f32 %v2674, %v2802
    %v2835 = vadd.f32 %v2675, %v2803
    %v2836 = vadd.f32 %v2676, %v2804
    %v2837 = vadd.f32 %v2677, %v2805
    %v2838 = vadd.f32 %v2678, %v2806
    %v2839 = vadd.f32 %v2679, %v2807
    %v2840 = vadd.f32 %v2680, %v2808
    %v2841 = vadd.f32 %v2681, %v2809
    %v2842 = vadd.f32 %v2682, %v2810
    %v2843 = vadd.f32 %v2683, %v2811
    %v2844 = vadd.f32 %v2684, %v2812
    %v2845 = vadd.f32 %v2685, %v2813
    %v2846 = vadd.f32 %v2686, %v2814
    %v2847 = vmul.f32 %v2815, 0.7978846
    %v2848 = vmul.f32 %v2816, 0.7978846
    %v2849 = vmul.f32 %v2817, 0.7978846
    %v2850 = vmul.f32 %v2818, 0.7978846
    %v2851 = vmul.f32 %v2819, 0.7978846
    %v2852 = vmul.f32 %v2820, 0.7978846
    %v2853 = vmul.f32 %v2821, 0.7978846
    %v2854 = vmul.f32 %v2822, 0.7978846
    %v2855 = vmul.f32 %v2823, 0.7978846
    %v2856 = vmul.f32 %v2824, 0.7978846
    %v2857 = vmul.f32 %v2825, 0.7978846
    %v2858 = vmul.f32 %v2826, 0.7978846
    %v2859 = vmul.f32 %v2827, 0.7978846
    %v2860 = vmul.f32 %v2828, 0.7978846
    %v2861 = vmul.f32 %v2829, 0.7978846
    %v2862 = vmul.f32 %v2830, 0.7978846
    %v2863 = vmul.f32 %v2831, 0.7978846
    %v2864 = vmul.f32 %v2832, 0.7978846
    %v2865 = vmul.f32 %v2833, 0.7978846
    %v2866 = vmul.f32 %v2834, 0.7978846
    %v2867 = vmul.f32 %v2835, 0.7978846
    %v2868 = vmul.f32 %v2836, 0.7978846
    %v2869 = vmul.f32 %v2837, 0.7978846
    %v2870 = vmul.f32 %v2838, 0.7978846
    %v2871 = vmul.f32 %v2839, 0.7978846
    %v2872 = vmul.f32 %v2840, 0.7978846
    %v2873 = vmul.f32 %v2841, 0.7978846
    %v2874 = vmul.f32 %v2842, 0.7978846
    %v2875 = vmul.f32 %v2843, 0.7978846
    %v2876 = vmul.f32 %v2844, 0.7978846
    %v2877 = vmul.f32 %v2845, 0.7978846
    %v2878 = vmul.f32 %v2846, 0.7978846
    %v2879 = vtanh.pop %v2847
    %v2880 = vtanh.pop %v2848
    %v2881 = vtanh.pop %v2849
    %v2882 = vtanh.pop %v2850
    %v2883 = vtanh.pop %v2851
    %v2884 = vtanh.pop %v2852
    %v2885 = vtanh.pop %v2853
    %v2886 = vtanh.pop %v2854
    %v2887 = vtanh.pop %v2855
    %v2888 = vtanh.pop %v2856
    %v2889 = vtanh.pop %v2857
    %v2890 = vtanh.pop %v2858
    %v2891 = vtanh.pop %v2859
    %v2892 = vtanh.pop %v2860
    %v2893 = vtanh.pop %v2861
    %v2894 = vtanh.pop %v2862
    %v2895 = vtanh.pop %v2863
    %v2896 = vtanh.pop %v2864
    %v2897 = vtanh.pop %v2865
    %v2898 = vtanh.pop %v2866
    %v2899 = vtanh.pop %v2867
    %v2900 = vtanh.pop %v2868
    %v2901 = vtanh.pop %v2869
    %v2902 = vtanh.pop %v2870
    %v2903 = vtanh.pop %v2871
    %v2904 = vtanh.pop %v2872
    %v2905 = vtanh.pop %v2873
    %v2906 = vtanh.pop %v2874
    %v2907 = vtanh.pop %v2875
    %v2908 = vtanh.pop %v2876
    %v2909 = vtanh.pop %v2877
    %v2910 = vtanh.pop %v2878
    %v2911 = vadd.f32 %v2879, 1.0
    %v2912 = vadd.f32 %v2880, 1.0
    %v2913 = vadd.f32 %v2881, 1.0
    %v2914 = vadd.f32 %v2882, 1.0
    %v2915 = vadd.f32 %v2883, 1.0
    %v2916 = vadd.f32 %v2884, 1.0
    %v2917 = vadd.f32 %v2885, 1.0
    %v2918 = vadd.f32 %v2886, 1.0
    %v2919 = vadd.f32 %v2887, 1.0
    %v2920 = vadd.f32 %v2888, 1.0
    %v2921 = vadd.f32 %v2889, 1.0
    %v2922 = vadd.f32 %v2890, 1.0
    %v2923 = vadd.f32 %v2891, 1.0
    %v2924 = vadd.f32 %v2892, 1.0
    %v2925 = vadd.f32 %v2893, 1.0
    %v2926 = vadd.f32 %v2894, 1.0
    %v2927 = vadd.f32 %v2895, 1.0
    %v2928 = vadd.f32 %v2896, 1.0
    %v2929 = vadd.f32 %v2897, 1.0
    %v2930 = vadd.f32 %v2898, 1.0
    %v2931 = vadd.f32 %v2899, 1.0
    %v2932 = vadd.f32 %v2900, 1.0
    %v2933 = vadd.f32 %v2901, 1.0
    %v2934 = vadd.f32 %v2902, 1.0
    %v2935 = vadd.f32 %v2903, 1.0
    %v2936 = vadd.f32 %v2904, 1.0
    %v2937 = vadd.f32 %v2905, 1.0
    %v2938 = vadd.f32 %v2906, 1.0
    %v2939 = vadd.f32 %v2907, 1.0
    %v2940 = vadd.f32 %v2908, 1.0
    %v2941 = vadd.f32 %v2909, 1.0
    %v2942 = vadd.f32 %v2910, 1.0
    %v2943 = vmul.f32 %v2687, %v2911
    %v2944 = vmul.f32 %v2688, %v2912
    %v2945 = vmul.f32 %v2689, %v2913
    %v2946 = vmul.f32 %v2690, %v2914
    %v2947 = vmul.f32 %v2691, %v2915
    %v2948 = vmul.f32 %v2692, %v2916
    %v2949 = vmul.f32 %v2693, %v2917
    %v2950 = vmul.f32 %v2694, %v2918
    %v2951 = vmul.f32 %v2695, %v2919
    %v2952 = vmul.f32 %v2696, %v2920
    %v2953 = vmul.f32 %v2697, %v2921
    %v2954 = vmul.f32 %v2698, %v2922
    %v2955 = vmul.f32 %v2699, %v2923
    %v2956 = vmul.f32 %v2700, %v2924
    %v2957 = vmul.f32 %v2701, %v2925
    %v2958 = vmul.f32 %v2702, %v2926
    %v2959 = vmul.f32 %v2703, %v2927
    %v2960 = vmul.f32 %v2704, %v2928
    %v2961 = vmul.f32 %v2705, %v2929
    %v2962 = vmul.f32 %v2706, %v2930
    %v2963 = vmul.f32 %v2707, %v2931
    %v2964 = vmul.f32 %v2708, %v2932
    %v2965 = vmul.f32 %v2709, %v2933
    %v2966 = vmul.f32 %v2710, %v2934
    %v2967 = vmul.f32 %v2711, %v2935
    %v2968 = vmul.f32 %v2712, %v2936
    %v2969 = vmul.f32 %v2713, %v2937
    %v2970 = vmul.f32 %v2714, %v2938
    %v2971 = vmul.f32 %v2715, %v2939
    %v2972 = vmul.f32 %v2716, %v2940
    %v2973 = vmul.f32 %v2717, %v2941
    %v2974 = vmul.f32 %v2718, %v2942
    %v2975 = vld [vmem:[%s4] sm:$0xff]
    %v2976 = vld [vmem:[%s4 + $0x8] sm:$0xff]
    %v2977 = vld [vmem:[%s4 + $0x10] sm:$0xff]
    %v2978 = vld [vmem:[%s4 + $0x18] sm:$0xff]
    %v2979 = vld [vmem:[%s4 + $0x20] sm:$0xff]
    %v2980 = vld [vmem:[%s4 + $0x28] sm:$0xff]
    %v2981 = vld [vmem:[%s4 + $0x30] sm:$0xff]
    %v2982 = vld [vmem:[%s4 + $0x38] sm:$0xff]
    %v2983 = vld [vmem:[%s4 + $0x40] sm:$0xff]
    %v2984 = vld [vmem:[%s4 + $0x48] sm:$0xff]
    %v2985 = vld [vmem:[%s4 + $0x50] sm:$0xff]
    %v2986 = vld [vmem:[%s4 + $0x58] sm:$0xff]
    %v2987 = vld [vmem:[%s4 + $0x60] sm:$0xff]
    %v2988 = vld [vmem:[%s4 + $0x68] sm:$0xff]
    %v2989 = vld [vmem:[%s4 + $0x70] sm:$0xff]
    %v2990 = vld [vmem:[%s4 + $0x78] sm:$0xff]
    %v2991 = vld [vmem:[%s4 + $0x80] sm:$0xff]
    %v2992 = vld [vmem:[%s4 + $0x88] sm:$0xff]
    %v2993 = vld [vmem:[%s4 + $0x90] sm:$0xff]
    %v2994 = vld [vmem:[%s4 + $0x98] sm:$0xff]
    %v2995 = vld [vmem:[%s4 + $0xa0] sm:$0xff]
    %v2996 = vld [vmem:[%s4 + $0xa8] sm:$0xff]
    %v2997 = vld [vmem:[%s4 + $0xb0] sm:$0xff]
    %v2998 = vld [vmem:[%s4 + $0xb8] sm:$0xff]
    %v2999 = vld [vmem:[%s4 + $0xc0] sm:$0xff]
    %v3000 = vld [vmem:[%s4 + $0xc8] sm:$0xff]
    %v3001 = vld [vmem:[%s4 + $0xd0] sm:$0xff]
    %v3002 = vld [vmem:[%s4 + $0xd8] sm:$0xff]
    %v3003 = vld [vmem:[%s4 + $0xe0] sm:$0xff]
    %v3004 = vld [vmem:[%s4 + $0xe8] sm:$0xff]
    %v3005 = vld [vmem:[%s4 + $0xf0] sm:$0xff]
    %v3006 = vld [vmem:[%s4 + $0xf8] sm:$0xff]
    %v3007 = vld [vmem:[%s6 + $0x6] sm:$0x3]
    %v3009 = vperm.slane %v3007, 0
    %v3010 = vperm.slane %v3007, 1
    %3013 = vmatpush.msra.mxu0 %v3005
    %3014 = vmatpush.msra.mxu0 %v3003
    %3015 = vmatpush.msra.mxu0 %v3001
    %3016 = vmatpush.msra.mxu0 %v2999
    %3017 = vmatpush.msra.mxu0 %v2997
    %3018 = vmatpush.msra.mxu0 %v2995
    %3019 = vmatpush.msra.mxu0 %v2993
    %3020 = vmatpush.msra.mxu0 %v2991
    %3021 = vmatpush.msra.mxu0 %v2989
    %3022 = vmatpush.msra.mxu0 %v2987
    %3023 = vmatpush.msra.mxu0 %v2985
    %3024 = vmatpush.msra.mxu0 %v2983
    %3025 = vmatpush.msra.mxu0 %v2981
    %3026 = vmatpush.msra.mxu0 %v2979
    %3027 = vmatpush.msra.mxu0 %v2977
    %3028 = vmatpush.msra.mxu0 %v2975
    %3029 = vmatmul.f32.gmra.mxu0 %v2943
    %v3030 = vpop.f32.mrf.mxu0
    %v3031 = vadd.f32 %v3009, %v3030
    %3032 = vmatmul.f32.gmra.mxu0 %v2944
    %v3033 = vpop.f32.mrf.mxu0
    %v3034 = vadd.f32 %v3009, %v3033
    %3035 = vmatmul.f32.gmra.mxu0 %v2945
    %v3036 = vpop.f32.mrf.mxu0
    %v3037 = vadd.f32 %v3009, %v3036
    %3038 = vmatmul.f32.gmra.mxu0 %v2946
    %v3039 = vpop.f32.mrf.mxu0
    %v3040 = vadd.f32 %v3009, %v3039
    %3041 = vmatmul.f32.gmra.mxu0 %v2947
    %v3042 = vpop.f32.mrf.mxu0
    %v3043 = vadd.f32 %v3009, %v3042
    %3044 = vmatmul.f32.gmra.mxu0 %v2948
    %v3045 = vpop.f32.mrf.mxu0
    %v3046 = vadd.f32 %v3009, %v3045
    %3047 = vmatmul.f32.gmra.mxu0 %v2949
    %v3048 = vpop.f32.mrf.mxu0
    %v3049 = vadd.f32 %v3009, %v3048
    %3050 = vmatmul.f32.gmra.mxu0 %v2950
    %v3051 = vpop.f32.mrf.mxu0
    %v3052 = vadd.f32 %v3009, %v3051
    %3053 = vmatmul.f32.gmra.mxu0 %v2951
    %v3054 = vpop.f32.mrf.mxu0
    %v3055 = vadd.f32 %v3009, %v3054
    %3056 = vmatmul.f32.gmra.mxu0 %v2952
    %v3057 = vpop.f32.mrf.mxu0
    %v3058 = vadd.f32 %v3009, %v3057
    %3059 = vmatmul.f32.gmra.mxu0 %v2953
    %v3060 = vpop.f32.mrf.mxu0
    %v3061 = vadd.f32 %v3009, %v3060
    %3062 = vmatmul.f32.gmra.mxu0 %v2954
    %v3063 = vpop.f32.mrf.mxu0
    %v3064 = vadd.f32 %v3009, %v3063
    %3065 = vmatmul.f32.gmra.mxu0 %v2955
    %v3066 = vpop.f32.mrf.mxu0
    %v3067 = vadd.f32 %v3009, %v3066
    %3068 = vmatmul.f32.gmra.mxu0 %v2956
    %v3069 = vpop.f32.mrf.mxu0
    %v3070 = vadd.f32 %v3009, %v3069
    %3071 = vmatmul.f32.gmra.mxu0 %v2957
    %v3072 = vpop.f32.mrf.mxu0
    %v3073 = vadd.f32 %v3009, %v3072
    %3074 = vmatmul.f32.gmra.mxu0 %v2958
    %v3075 = vpop.f32.mrf.mxu0
    %v3076 = vadd.f32 %v3009, %v3075
    %3077 = vmatmul.f32.gmra.mxu0 %v2959
    %v3078 = vpop.f32.mrf.mxu0
    %v3079 = vadd.f32 %v3009, %v3078
    %3080 = vmatmul.f32.gmra.mxu0 %v2960
    %v3081 = vpop.f32.mrf.mxu0
    %v3082 = vadd.f32 %v3009, %v3081
    %3083 = vmatmul.f32.gmra.mxu0 %v2961
    %v3084 = vpop.f32.mrf.mxu0
    %v3085 = vadd.f32 %v3009, %v3084
    %3086 = vmatmul.f32.gmra.mxu0 %v2962
    %v3087 = vpop.f32.mrf.mxu0
    %v3088 = vadd.f32 %v3009, %v3087
    %3089 = vmatmul.f32.gmra.mxu0 %v2963
    %v3090 = vpop.f32.mrf.mxu0
    %v3091 = vadd.f32 %v3009, %v3090
    %3092 = vmatmul.f32.gmra.mxu0 %v2964
    %v3093 = vpop.f32.mrf.mxu0
    %v3094 = vadd.f32 %v3009, %v3093
    %3095 = vmatmul.f32.gmra.mxu0 %v2965
    %v3096 = vpop.f32.mrf.mxu0
    %v3097 = vadd.f32 %v3009, %v3096
    %3098 = vmatmul.f32.gmra.mxu0 %v2966
    %v3099 = vpop.f32.mrf.mxu0
    %v3100 = vadd.f32 %v3009, %v3099
    %3101 = vmatmul.f32.gmra.mxu0 %v2967
    %v3102 = vpop.f32.mrf.mxu0
    %v3103 = vadd.f32 %v3009, %v3102
    %3104 = vmatmul.f32.gmra.mxu0 %v2968
    %v3105 = vpop.f32.mrf.mxu0
    %v3106 = vadd.f32 %v3009, %v3105
    %3107 = vmatmul.f32.gmra.mxu0 %v2969
    %v3108 = vpop.f32.mrf.mxu0
    %v3109 = vadd.f32 %v3009, %v3108
    %3110 = vmatmul.f32.gmra.mxu0 %v2970
    %v3111 = vpop.f32.mrf.mxu0
    %v3112 = vadd.f32 %v3009, %v3111
    %3113 = vmatmul.f32.gmra.mxu0 %v2971
    %v3114 = vpop.f32.mrf.mxu0
    %v3115 = vadd.f32 %v3009, %v3114
    %3116 = vmatmul.f32.gmra.mxu0 %v2972
    %v3117 = vpop.f32.mrf.mxu0
    %v3118 = vadd.f32 %v3009, %v3117
    %3119 = vmatmul.f32.gmra.mxu0 %v2973
    %v3120 = vpop.f32.mrf.mxu0
    %v3121 = vadd.f32 %v3009, %v3120
    %3122 = vmatmul.f32.gmra.mxu0 %v2974
    %v3123 = vpop.f32.mrf.mxu0
    %v3124 = vadd.f32 %v3009, %v3123
    %3125 = vdwg.mxu0
    %3126 = vmatpush.msra.mxu0 %v3006
    %3127 = vmatpush.msra.mxu0 %v3004
    %3128 = vmatpush.msra.mxu0 %v3002
    %3129 = vmatpush.msra.mxu0 %v3000
    %3130 = vmatpush.msra.mxu0 %v2998
    %3131 = vmatpush.msra.mxu0 %v2996
    %3132 = vmatpush.msra.mxu0 %v2994
    %3133 = vmatpush.msra.mxu0 %v2992
    %3134 = vmatpush.msra.mxu0 %v2990
    %3135 = vmatpush.msra.mxu0 %v2988
    %3136 = vmatpush.msra.mxu0 %v2986
    %3137 = vmatpush.msra.mxu0 %v2984
    %3138 = vmatpush.msra.mxu0 %v2982
    %3139 = vmatpush.msra.mxu0 %v2980
    %3140 = vmatpush.msra.mxu0 %v2978
    %3141 = vmatpush.msra.mxu0 %v2976
    %3142 = vmatmul.f32.gmra.mxu0 %v2943
    %v3143 = vpop.f32.mrf.mxu0
    %v3144 = vadd.f32 %v3010, %v3143
    %3145 = vmatmul.f32.gmra.mxu0 %v2944
    %v3146 = vpop.f32.mrf.mxu0
    %v3147 = vadd.f32 %v3010, %v3146
    %3148 = vmatmul.f32.gmra.mxu0 %v2945
    %v3149 = vpop.f32.mrf.mxu0
    %v3150 = vadd.f32 %v3010, %v3149
    %3151 = vmatmul.f32.gmra.mxu0 %v2946
    %v3152 = vpop.f32.mrf.mxu0
    %v3153 = vadd.f32 %v3010, %v3152
    %3154 = vmatmul.f32.gmra.mxu0 %v2947
    %v3155 = vpop.f32.mrf.mxu0
    %v3156 = vadd.f32 %v3010, %v3155
    %3157 = vmatmul.f32.gmra.mxu0 %v2948
    %v3158 = vpop.f32.mrf.mxu0
    %v3159 = vadd.f32 %v3010, %v3158
    %3160 = vmatmul.f32.gmra.mxu0 %v2949
    %v3161 = vpop.f32.mrf.mxu0
    %v3162 = vadd.f32 %v3010, %v3161
    %3163 = vmatmul.f32.gmra.mxu0 %v2950
    %v3164 = vpop.f32.mrf.mxu0
    %v3165 = vadd.f32 %v3010, %v3164
    %3166 = vmatmul.f32.gmra.mxu0 %v2951
    %v3167 = vpop.f32.mrf.mxu0
    %v3168 = vadd.f32 %v3010, %v3167
    %3169 = vmatmul.f32.gmra.mxu0 %v2952
    %v3170 = vpop.f32.mrf.mxu0
    %v3171 = vadd.f32 %v3010, %v3170
    %3172 = vmatmul.f32.gmra.mxu0 %v2953
    %v3173 = vpop.f32.mrf.mxu0
    %v3174 = vadd.f32 %v3010, %v3173
    %3175 = vmatmul.f32.gmra.mxu0 %v2954
    %v3176 = vpop.f32.mrf.mxu0
    %v3177 = vadd.f32 %v3010, %v3176
    %3178 = vmatmul.f32.gmra.mxu0 %v2955
    %v3179 = vpop.f32.mrf.mxu0
    %v3180 = vadd.f32 %v3010, %v3179
    %3181 = vmatmul.f32.gmra.mxu0 %v2956
    %v3182 = vpop.f32.mrf.mxu0
    %v3183 = vadd.f32 %v3010, %v3182
    %3184 = vmatmul.f32.gmra.mxu0 %v2957
    %v3185 = vpop.f32.mrf.mxu0
    %v3186 = vadd.f32 %v3010, %v3185
    %3187 = vmatmul.f32.gmra.mxu0 %v2958
    %v3188 = vpop.f32.mrf.mxu0
    %v3189 = vadd.f32 %v3010, %v3188
    %3190 = vmatmul.f32.gmra.mxu0 %v2959
    %v3191 = vpop.f32.mrf.mxu0
    %v3192 = vadd.f32 %v3010, %v3191
    %3193 = vmatmul.f32.gmra.mxu0 %v2960
    %v3194 = vpop.f32.mrf.mxu0
    %v3195 = vadd.f32 %v3010, %v3194
    %3196 = vmatmul.f32.gmra.mxu0 %v2961
    %v3197 = vpop.f32.mrf.mxu0
    %v3198 = vadd.f32 %v3010, %v3197
    %3199 = vmatmul.f32.gmra.mxu0 %v2962
    %v3200 = vpop.f32.mrf.mxu0
    %v3201 = vadd.f32 %v3010, %v3200
    %3202 = vmatmul.f32.gmra.mxu0 %v2963
    %v3203 = vpop.f32.mrf.mxu0
    %v3204 = vadd.f32 %v3010, %v3203
    %3205 = vmatmul.f32.gmra.mxu0 %v2964
    %v3206 = vpop.f32.mrf.mxu0
    %v3207 = vadd.f32 %v3010, %v3206
    %3208 = vmatmul.f32.gmra.mxu0 %v2965
    %v3209 = vpop.f32.mrf.mxu0
    %v3210 = vadd.f32 %v3010, %v3209
    %3211 = vmatmul.f32.gmra.mxu0 %v2966
    %v3212 = vpop.f32.mrf.mxu0
    %v3213 = vadd.f32 %v3010, %v3212
    %3214 = vmatmul.f32.gmra.mxu0 %v2967
    %v3215 = vpop.f32.mrf.mxu0
    %v3216 = vadd.f32 %v3010, %v3215
    %3217 = vmatmul.f32.gmra.mxu0 %v2968
    %v3218 = vpop.f32.mrf.mxu0
    %v3219 = vadd.f32 %v3010, %v3218
    %3220 = vmatmul.f32.gmra.mxu0 %v2969
    %v3221 = vpop.f32.mrf.mxu0
    %v3222 = vadd.f32 %v3010, %v3221
    %3223 = vmatmul.f32.gmra.mxu0 %v2970
    %v3224 = vpop.f32.mrf.mxu0
    %v3225 = vadd.f32 %v3010, %v3224
    %3226 = vmatmul.f32.gmra.mxu0 %v2971
    %v3227 = vpop.f32.mrf.mxu0
    %v3228 = vadd.f32 %v3010, %v3227
    %3229 = vmatmul.f32.gmra.mxu0 %v2972
    %v3230 = vpop.f32.mrf.mxu0
    %v3231 = vadd.f32 %v3010, %v3230
    %3232 = vmatmul.f32.gmra.mxu0 %v2973
    %v3233 = vpop.f32.mrf.mxu0
    %v3234 = vadd.f32 %v3010, %v3233
    %3235 = vmatmul.f32.gmra.mxu0 %v2974
    %v3236 = vpop.f32.mrf.mxu0
    %v3237 = vadd.f32 %v3010, %v3236
    %3238 = vdwg.mxu0
    %v3239 = vld [vmem:[%s6 + $0x8] sm:$0x3]
    %v3240 = vld [vmem:[%s6 + $0xa] sm:$0x3]
    %v3241 = vadd.f32 %v3031, %v3144
    %3242 = vadd.xlane.f32.xlu0 %v3241
    %v3243 = vpop.xlane.xlu0 %3242
    %v3244 = vadd.f32 %v3034, %v3147
    %3245 = vadd.xlane.f32.xlu0 %v3244
    %v3246 = vpop.xlane.xlu0 %3245
    %v3247 = vadd.f32 %v3037, %v3150
    %3248 = vadd.xlane.f32.xlu0 %v3247
    %v3249 = vpop.xlane.xlu0 %3248
    %v3250 = vadd.f32 %v3040, %v3153
    %3251 = vadd.xlane.f32.xlu0 %v3250
    %v3252 = vpop.xlane.xlu0 %3251
    %v3253 = vadd.f32 %v3043, %v3156
    %3254 = vadd.xlane.f32.xlu0 %v3253
    %v3255 = vpop.xlane.xlu0 %3254
    %v3256 = vadd.f32 %v3046, %v3159
    %3257 = vadd.xlane.f32.xlu0 %v3256
    %v3258 = vpop.xlane.xlu0 %3257
    %v3259 = vadd.f32 %v3049, %v3162
    %3260 = vadd.xlane.f32.xlu0 %v3259
    %v3261 = vpop.xlane.xlu0 %3260
    %v3262 = vadd.f32 %v3052, %v3165
    %3263 = vadd.xlane.f32.xlu0 %v3262
    %v3264 = vpop.xlane.xlu0 %3263
    %v3265 = vadd.f32 %v3055, %v3168
    %3266 = vadd.xlane.f32.xlu0 %v3265
    %v3267 = vpop.xlane.xlu0 %3266
    %v3268 = vadd.f32 %v3058, %v3171
    %3269 = vadd.xlane.f32.xlu0 %v3268
    %v3270 = vpop.xlane.xlu0 %3269
    %v3271 = vadd.f32 %v3061, %v3174
    %3272 = vadd.xlane.f32.xlu0 %v3271
    %v3273 = vpop.xlane.xlu0 %3272
    %v3274 = vadd.f32 %v3064, %v3177
    %3275 = vadd.xlane.f32.xlu0 %v3274
    %v3276 = vpop.xlane.xlu0 %3275
    %v3277 = vadd.f32 %v3067, %v3180
    %3278 = vadd.xlane.f32.xlu0 %v3277
    %v3279 = vpop.xlane.xlu0 %3278
    %v3280 = vadd.f32 %v3070, %v3183
    %3281 = vadd.xlane.f32.xlu0 %v3280
    %v3282 = vpop.xlane.xlu0 %3281
    %v3283 = vadd.f32 %v3073, %v3186
    %3284 = vadd.xlane.f32.xlu0 %v3283
    %v3285 = vpop.xlane.xlu0 %3284
    %v3286 = vadd.f32 %v3076, %v3189
    %3287 = vadd.xlane.f32.xlu0 %v3286
    %v3288 = vpop.xlane.xlu0 %3287
    %v3289 = vadd.f32 %v3079, %v3192
    %3290 = vadd.xlane.f32.xlu0 %v3289
    %v3291 = vpop.xlane.xlu0 %3290
    %v3292 = vadd.f32 %v3082, %v3195
    %3293 = vadd.xlane.f32.xlu0 %v3292
    %v3294 = vpop.xlane.xlu0 %3293
    %v3295 = vadd.f32 %v3085, %v3198
    %3296 = vadd.xlane.f32.xlu0 %v3295
    %v3297 = vpop.xlane.xlu0 %3296
    %v3298 = vadd.f32 %v3088, %v3201
    %3299 = vadd.xlane.f32.xlu0 %v3298
    %v3300 = vpop.xlane.xlu0 %3299
    %v3301 = vadd.f32 %v3091, %v3204
    %3302 = vadd.xlane.f32.xlu0 %v3301
    %v3303 = vpop.xlane.xlu0 %3302
    %v3304 = vadd.f32 %v3094, %v3207
    %3305 = vadd.xlane.f32.xlu0 %v3304
    %v3306 = vpop.xlane.xlu0 %3305
    %v3307 = vadd.f32 %v3097, %v3210
    %3308 = vadd.xlane.f32.xlu0 %v3307
    %v3309 = vpop.xlane.xlu0 %3308
    %v3310 = vadd.f32 %v3100, %v3213
    %3311 = vadd.xlane.f32.xlu0 %v3310
    %v3312 = vpop.xlane.xlu0 %3311
    %v3313 = vadd.f32 %v3103, %v3216
    %3314 = vadd.xlane.f32.xlu0 %v3313
    %v3315 = vpop.xlane.xlu0 %3314
    %v3316 = vadd.f32 %v3106, %v3219
    %3317 = vadd.xlane.f32.xlu0 %v3316
    %v3318 = vpop.xlane.xlu0 %3317
    %v3319 = vadd.f32 %v3109, %v3222
    %3320 = vadd.xlane.f32.xlu0 %v3319
    %v3321 = vpop.xlane.xlu0 %3320
    %v3322 = vadd.f32 %v3112, %v3225
    %3323 = vadd.xlane.f32.xlu0 %v3322
    %v3324 = vpop.xlane.xlu0 %3323
    %v3325 = vadd.f32 %v3115, %v3228
    %3326 = vadd.xlane.f32.xlu0 %v3325
    %v3327 = vpop.xlane.xlu0 %3326
    %v3328 = vadd.f32 %v3118, %v3231
    %3329 = vadd.xlane.f32.xlu0 %v3328
    %v3330 = vpop.xlane.xlu0 %3329
    %v3331 = vadd.f32 %v3121, %v3234
    %3332 = vadd.xlane.f32.xlu0 %v3331
    %v3333 = vpop.xlane.xlu0 %3332
    %v3334 = vadd.f32 %v3124, %v3237
    %3335 = vadd.xlane.f32.xlu0 %v3334
    %v3336 = vpop.xlane.xlu0 %3335
    %v3337 = vrcp.pop 256.0
    %v3338 = vmul.f32 256.0, %v3337
    %v3339 = vsub.f32 1.0, %v3338
    %v3340 = vmul.f32 %v3337, %v3339
    %v3341 = vadd.f32 %v3337, %v3340
    %vm3342 = vweird.f32 %v3337
    %v3343 = vsel %vm3342, %v3337, %v3341
    %v3344 = vmul.f32 %v3243, %v3343
    %v3345 = vmul.f32 %v3246, %v3343
    %v3346 = vmul.f32 %v3249, %v3343
    %v3347 = vmul.f32 %v3252, %v3343
    %v3348 = vmul.f32 %v3255, %v3343
    %v3349 = vmul.f32 %v3258, %v3343
    %v3350 = vmul.f32 %v3261, %v3343
    %v3351 = vmul.f32 %v3264, %v3343
    %v3352 = vmul.f32 %v3267, %v3343
    %v3353 = vmul.f32 %v3270, %v3343
    %v3354 = vmul.f32 %v3273, %v3343
    %v3355 = vmul.f32 %v3276, %v3343
    %v3356 = vmul.f32 %v3279, %v3343
    %v3357 = vmul.f32 %v3282, %v3343
    %v3358 = vmul.f32 %v3285, %v3343
    %v3359 = vmul.f32 %v3288, %v3343
    %v3360 = vmul.f32 %v3291, %v3343
    %v3361 = vmul.f32 %v3294, %v3343
    %v3362 = vmul.f32 %v3297, %v3343
    %v3363 = vmul.f32 %v3300, %v3343
    %v3364 = vmul.f32 %v3303, %v3343
    %v3365 = vmul.f32 %v3306, %v3343
    %v3366 = vmul.f32 %v3309, %v3343
    %v3367 = vmul.f32 %v3312, %v3343
    %v3368 = vmul.f32 %v3315, %v3343
    %v3369 = vmul.f32 %v3318, %v3343
    %v3370 = vmul.f32 %v3321, %v3343
    %v3371 = vmul.f32 %v3324, %v3343
    %v3372 = vmul.f32 %v3327, %v3343
    %v3373 = vmul.f32 %v3330, %v3343
    %v3374 = vmul.f32 %v3333, %v3343
    %v3375 = vmul.f32 %v3336, %v3343
    %v3376 = vsub.f32 %v3031, %v3344
    %v3377 = vsub.f32 %v3144, %v3344
    %v3378 = vsub.f32 %v3034, %v3345
    %v3379 = vsub.f32 %v3147, %v3345
    %v3380 = vsub.f32 %v3037, %v3346
    %v3381 = vsub.f32 %v3150, %v3346
    %v3382 = vsub.f32 %v3040, %v3347
    %v3383 = vsub.f32 %v3153, %v3347
    %v3384 = vsub.f32 %v3043, %v3348
    %v3385 = vsub.f32 %v3156, %v3348
    %v3386 = vsub.f32 %v3046, %v3349
    %v3387 = vsub.f32 %v3159, %v3349
    %v3388 = vsub.f32 %v3049, %v3350
    %v3389 = vsub.f32 %v3162, %v3350
    %v3390 = vsub.f32 %v3052, %v3351
    %v3391 = vsub.f32 %v3165, %v3351
    %v3392 = vsub.f32 %v3055, %v3352
    %v3393 = vsub.f32 %v3168, %v3352
    %v3394 = vsub.f32 %v3058, %v3353
    %v3395 = vsub.f32 %v3171, %v3353
    %v3396 = vsub.f32 %v3061, %v3354
    %v3397 = vsub.f32 %v3174, %v3354
    %v3398 = vsub.f32 %v3064, %v3355
    %v3399 = vsub.f32 %v3177, %v3355
    %v3400 = vsub.f32 %v3067, %v3356
    %v3401 = vsub.f32 %v3180, %v3356
    %v3402 = vsub.f32 %v3070, %v3357
    %v3403 = vsub.f32 %v3183, %v3357
    %v3404 = vsub.f32 %v3073, %v3358
    %v3405 = vsub.f32 %v3186, %v3358
    %v3406 = vsub.f32 %v3076, %v3359
    %v3407 = vsub.f32 %v3189, %v3359
    %v3408 = vsub.f32 %v3079, %v3360
    %v3409 = vsub.f32 %v3192, %v3360
    %v3410 = vsub.f32 %v3082, %v3361
    %v3411 = vsub.f32 %v3195, %v3361
    %v3412 = vsub.f32 %v3085, %v3362
    %v3413 = vsub.f32 %v3198, %v3362
    %v3414 = vsub.f32 %v3088, %v3363
    %v3415 = vsub.f32 %v3201, %v3363
    %v3416 = vsub.f32 %v3091, %v3364
    %v3417 = vsub.f32 %v3204, %v3364
    %v3418 = vsub.f32 %v3094, %v3365
    %v3419 = vsub.f32 %v3207, %v3365
    %v3420 = vsub.f32 %v3097, %v3366
    %v3421 = vsub.f32 %v3210, %v3366
    %v3422 = vsub.f32 %v3100, %v3367
    %v3423 = vsub.f32 %v3213, %v3367
    %v3424 = vsub.f32 %v3103, %v3368
    %v3425 = vsub.f32 %v3216, %v3368
    %v3426 = vsub.f32 %v3106, %v3369
    %v3427 = vsub.f32 %v3219, %v3369
    %v3428 = vsub.f32 %v3109, %v3370
    %v3429 = vsub.f32 %v3222, %v3370
    %v3430 = vsub.f32 %v3112, %v3371
    %v3431 = vsub.f32 %v3225, %v3371
    %v3432 = vsub.f32 %v3115, %v3372
    %v3433 = vsub.f32 %v3228, %v3372
    %v3434 = vsub.f32 %v3118, %v3373
    %v3435 = vsub.f32 %v3231, %v3373
    %v3436 = vsub.f32 %v3121, %v3374
    %v3437 = vsub.f32 %v3234, %v3374
    %v3438 = vsub.f32 %v3124, %v3375
    %v3439 = vsub.f32 %v3237, %v3375
    %v3440 = vmul.f32 %v3376, %v3376
    %v3441 = vmul.f32 %v3377, %v3377
    %v3442 = vmul.f32 %v3378, %v3378
    %v3443 = vmul.f32 %v3379, %v3379
    %v3444 = vmul.f32 %v3380, %v3380
    %v3445 = vmul.f32 %v3381, %v3381
    %v3446 = vmul.f32 %v3382, %v3382
    %v3447 = vmul.f32 %v3383, %v3383
    %v3448 = vmul.f32 %v3384, %v3384
    %v3449 = vmul.f32 %v3385, %v3385
    %v3450 = vmul.f32 %v3386, %v3386
    %v3451 = vmul.f32 %v3387, %v3387
    %v3452 = vmul.f32 %v3388, %v3388
    %v3453 = vmul.f32 %v3389, %v3389
    %v3454 = vmul.f32 %v3390, %v3390
    %v3455 = vmul.f32 %v3391, %v3391
    %v3456 = vmul.f32 %v3392, %v3392
    %v3457 = vmul.f32 %v3393, %v3393
    %v3458 = vmul.f32 %v3394, %v3394
    %v3459 = vmul.f32 %v3395, %v3395
    %v3460 = vmul.f32 %v3396, %v3396
    %v3461 = vmul.f32 %v3397, %v3397
    %v3462 = vmul.f32 %v3398, %v3398
    %v3463 = vmul.f32 %v3399, %v3399
    %v3464 = vmul.f32 %v3400, %v3400
    %v3465 = vmul.f32 %v3401, %v3401
    %v3466 = vmul.f32 %v3402, %v3402
    %v3467 = vmul.f32 %v3403, %v3403
    %v3468 = vmul.f32 %v3404, %v3404
    %v3469 = vmul.f32 %v3405, %v3405
    %v3470 = vmul.f32 %v3406, %v3406
    %v3471 = vmul.f32 %v3407, %v3407
    %v3472 = vmul.f32 %v3408, %v3408
    %v3473 = vmul.f32 %v3409, %v3409
    %v3474 = vmul.f32 %v3410, %v3410
    %v3475 = vmul.f32 %v3411, %v3411
    %v3476 = vmul.f32 %v3412, %v3412
    %v3477 = vmul.f32 %v3413, %v3413
    %v3478 = vmul.f32 %v3414, %v3414
    %v3479 = vmul.f32 %v3415, %v3415
    %v3480 = vmul.f32 %v3416, %v3416
    %v3481 = vmul.f32 %v3417, %v3417
    %v3482 = vmul.f32 %v3418, %v3418
    %v3483 = vmul.f32 %v3419, %v3419
    %v3484 = vmul.f32 %v3420, %v3420
    %v3485 = vmul.f32 %v3421, %v3421
    %v3486 = vmul.f32 %v3422, %v3422
    %v3487 = vmul.f32 %v3423, %v3423
    %v3488 = vmul.f32 %v3424, %v3424
    %v3489 = vmul.f32 %v3425, %v3425
    %v3490 = vmul.f32 %v3426, %v3426
    %v3491 = vmul.f32 %v3427, %v3427
    %v3492 = vmul.f32 %v3428, %v3428
    %v3493 = vmul.f32 %v3429, %v3429
    %v3494 = vmul.f32 %v3430, %v3430
    %v3495 = vmul.f32 %v3431, %v3431
    %v3496 = vmul.f32 %v3432, %v3432
    %v3497 = vmul.f32 %v3433, %v3433
    %v3498 = vmul.f32 %v3434, %v3434
    %v3499 = vmul.f32 %v3435, %v3435
    %v3500 = vmul.f32 %v3436, %v3436
    %v3501 = vmul.f32 %v3437, %v3437
    %v3502 = vmul.f32 %v3438, %v3438
    %v3503 = vmul.f32 %v3439, %v3439
    %v3504 = vadd.f32 %v3440, %v3441
    %3505 = vadd.xlane.f32.xlu0 %v3504
    %v3506 = vpop.xlane.xlu0 %3505
    %v3507 = vadd.f32 %v3442, %v3443
    %3508 = vadd.xlane.f32.xlu0 %v3507
    %v3509 = vpop.xlane.xlu0 %3508
    %v3510 = vadd.f32 %v3444, %v3445
    %3511 = vadd.xlane.f32.xlu0 %v3510
    %v3512 = vpop.xlane.xlu0 %3511
    %v3513 = vadd.f32 %v3446, %v3447
    %3514 = vadd.xlane.f32.xlu0 %v3513
    %v3515 = vpop.xlane.xlu0 %3514
    %v3516 = vadd.f32 %v3448, %v3449
    %3517 = vadd.xlane.f32.xlu0 %v3516
    %v3518 = vpop.xlane.xlu0 %3517
    %v3519 = vadd.f32 %v3450, %v3451
    %3520 = vadd.xlane.f32.xlu0 %v3519
    %v3521 = vpop.xlane.xlu0 %3520
    %v3522 = vadd.f32 %v3452, %v3453
    %3523 = vadd.xlane.f32.xlu0 %v3522
    %v3524 = vpop.xlane.xlu0 %3523
    %v3525 = vadd.f32 %v3454, %v3455
    %3526 = vadd.xlane.f32.xlu0 %v3525
    %v3527 = vpop.xlane.xlu0 %3526
    %v3528 = vadd.f32 %v3456, %v3457
    %3529 = vadd.xlane.f32.xlu0 %v3528
    %v3530 = vpop.xlane.xlu0 %3529
    %v3531 = vadd.f32 %v3458, %v3459
    %3532 = vadd.xlane.f32.xlu0 %v3531
    %v3533 = vpop.xlane.xlu0 %3532
    %v3534 = vadd.f32 %v3460, %v3461
    %3535 = vadd.xlane.f32.xlu0 %v3534
    %v3536 = vpop.xlane.xlu0 %3535
    %v3537 = vadd.f32 %v3462, %v3463
    %3538 = vadd.xlane.f32.xlu0 %v3537
    %v3539 = vpop.xlane.xlu0 %3538
    %v3540 = vadd.f32 %v3464, %v3465
    %3541 = vadd.xlane.f32.xlu0 %v3540
    %v3542 = vpop.xlane.xlu0 %3541
    %v3543 = vadd.f32 %v3466, %v3467
    %3544 = vadd.xlane.f32.xlu0 %v3543
    %v3545 = vpop.xlane.xlu0 %3544
    %v3546 = vadd.f32 %v3468, %v3469
    %3547 = vadd.xlane.f32.xlu0 %v3546
    %v3548 = vpop.xlane.xlu0 %3547
    %v3549 = vadd.f32 %v3470, %v3471
    %3550 = vadd.xlane.f32.xlu0 %v3549
    %v3551 = vpop.xlane.xlu0 %3550
    %v3552 = vadd.f32 %v3472, %v3473
    %3553 = vadd.xlane.f32.xlu0 %v3552
    %v3554 = vpop.xlane.xlu0 %3553
    %v3555 = vadd.f32 %v3474, %v3475
    %3556 = vadd.xlane.f32.xlu0 %v3555
    %v3557 = vpop.xlane.xlu0 %3556
    %v3558 = vadd.f32 %v3476, %v3477
    %3559 = vadd.xlane.f32.xlu0 %v3558
    %v3560 = vpop.xlane.xlu0 %3559
    %v3561 = vadd.f32 %v3478, %v3479
    %3562 = vadd.xlane.f32.xlu0 %v3561
    %v3563 = vpop.xlane.xlu0 %3562
    %v3564 = vadd.f32 %v3480, %v3481
    %3565 = vadd.xlane.f32.xlu0 %v3564
    %v3566 = vpop.xlane.xlu0 %3565
    %v3567 = vadd.f32 %v3482, %v3483
    %3568 = vadd.xlane.f32.xlu0 %v3567
    %v3569 = vpop.xlane.xlu0 %3568
    %v3570 = vadd.f32 %v3484, %v3485
    %3571 = vadd.xlane.f32.xlu0 %v3570
    %v3572 = vpop.xlane.xlu0 %3571
    %v3573 = vadd.f32 %v3486, %v3487
    %3574 = vadd.xlane.f32.xlu0 %v3573
    %v3575 = vpop.xlane.xlu0 %3574
    %v3576 = vadd.f32 %v3488, %v3489
    %3577 = vadd.xlane.f32.xlu0 %v3576
    %v3578 = vpop.xlane.xlu0 %3577
    %v3579 = vadd.f32 %v3490, %v3491
    %3580 = vadd.xlane.f32.xlu0 %v3579
    %v3581 = vpop.xlane.xlu0 %3580
    %v3582 = vadd.f32 %v3492, %v3493
    %3583 = vadd.xlane.f32.xlu0 %v3582
    %v3584 = vpop.xlane.xlu0 %3583
    %v3585 = vadd.f32 %v3494, %v3495
    %3586 = vadd.xlane.f32.xlu0 %v3585
    %v3587 = vpop.xlane.xlu0 %3586
    %v3588 = vadd.f32 %v3496, %v3497
    %3589 = vadd.xlane.f32.xlu0 %v3588
    %v3590 = vpop.xlane.xlu0 %3589
    %v3591 = vadd.f32 %v3498, %v3499
    %3592 = vadd.xlane.f32.xlu0 %v3591
    %v3593 = vpop.xlane.xlu0 %3592
    %v3594 = vadd.f32 %v3500, %v3501
    %3595 = vadd.xlane.f32.xlu0 %v3594
    %v3596 = vpop.xlane.xlu0 %3595
    %v3597 = vadd.f32 %v3502, %v3503
    %3598 = vadd.xlane.f32.xlu0 %v3597
    %v3599 = vpop.xlane.xlu0 %3598
    %v3600 = vmul.f32 %v3506, %v3343
    %v3601 = vmul.f32 %v3509, %v3343
    %v3602 = vmul.f32 %v3512, %v3343
    %v3603 = vmul.f32 %v3515, %v3343
    %v3604 = vmul.f32 %v3518, %v3343
    %v3605 = vmul.f32 %v3521, %v3343
    %v3606 = vmul.f32 %v3524, %v3343
    %v3607 = vmul.f32 %v3527, %v3343
    %v3608 = vmul.f32 %v3530, %v3343
    %v3609 = vmul.f32 %v3533, %v3343
    %v3610 = vmul.f32 %v3536, %v3343
    %v3611 = vmul.f32 %v3539, %v3343
    %v3612 = vmul.f32 %v3542, %v3343
    %v3613 = vmul.f32 %v3545, %v3343
    %v3614 = vmul.f32 %v3548, %v3343
    %v3615 = vmul.f32 %v3551, %v3343
    %v3616 = vmul.f32 %v3554, %v3343
    %v3617 = vmul.f32 %v3557, %v3343
    %v3618 = vmul.f32 %v3560, %v3343
    %v3619 = vmul.f32 %v3563, %v3343
    %v3620 = vmul.f32 %v3566, %v3343
    %v3621 = vmul.f32 %v3569, %v3343
    %v3622 = vmul.f32 %v3572, %v3343
    %v3623 = vmul.f32 %v3575, %v3343
    %v3624 = vmul.f32 %v3578, %v3343
    %v3625 = vmul.f32 %v3581, %v3343
    %v3626 = vmul.f32 %v3584, %v3343
    %v3627 = vmul.f32 %v3587, %v3343
    %v3628 = vmul.f32 %v3590, %v3343
    %v3629 = vmul.f32 %v3593, %v3343
    %v3630 = vmul.f32 %v3596, %v3343
    %v3631 = vmul.f32 %v3599, %v3343
    %v3632 = vadd.f32 %v3600, 1e-05
    %v3633 = vadd.f32 %v3601, 1e-05
    %v3634 = vadd.f32 %v3602, 1e-05
    %v3635 = vadd.f32 %v3603, 1e-05
    %v3636 = vadd.f32 %v3604, 1e-05
    %v3637 = vadd.f32 %v3605, 1e-05
    %v3638 = vadd.f32 %v3606, 1e-05
    %v3639 = vadd.f32 %v3607, 1e-05
    %v3640 = vadd.f32 %v3608, 1e-05
    %v3641 = vadd.f32 %v3609, 1e-05
    %v3642 = vadd.f32 %v3610, 1e-05
    %v3643 = vadd.f32 %v3611, 1e-05
    %v3644 = vadd.f32 %v3612, 1e-05
    %v3645 = vadd.f32 %v3613, 1e-05
    %v3646 = vadd.f32 %v3614, 1e-05
    %v3647 = vadd.f32 %v3615, 1e-05
    %v3648 = vadd.f32 %v3616, 1e-05
    %v3649 = vadd.f32 %v3617, 1e-05
    %v3650 = vadd.f32 %v3618, 1e-05
    %v3651 = vadd.f32 %v3619, 1e-05
    %v3652 = vadd.f32 %v3620, 1e-05
    %v3653 = vadd.f32 %v3621, 1e-05
    %v3654 = vadd.f32 %v3622, 1e-05
    %v3655 = vadd.f32 %v3623, 1e-05
    %v3656 = vadd.f32 %v3624, 1e-05
    %v3657 = vadd.f32 %v3625, 1e-05
    %v3658 = vadd.f32 %v3626, 1e-05
    %v3659 = vadd.f32 %v3627, 1e-05
    %v3660 = vadd.f32 %v3628, 1e-05
    %v3661 = vadd.f32 %v3629, 1e-05
    %v3662 = vadd.f32 %v3630, 1e-05
    %v3663 = vadd.f32 %v3631, 1e-05
    %v3664 = vrsqrt.pop %v3632
    %v3665 = vmul.f32 %v3664, %v3632
    %v3666 = vmul.f32 %v3665, %v3664
    %v3667 = vmul.f32 0.5, %v3666
    %v3668 = vsub.f32 1.5, %v3667
    %v3669 = vmul.f32 %v3664, %v3668
    %vm3670 = vweird.f32 %v3632
    %vm3671 = vweird.f32 %v3664
    %vm3672 = vmor %vm3670, %vm3671
    %v3673 = vsel %vm3672, %v3664, %v3669
    %v3674 = vrsqrt.pop %v3633
    %v3675 = vmul.f32 %v3674, %v3633
    %v3676 = vmul.f32 %v3675, %v3674
    %v3677 = vmul.f32 0.5, %v3676
    %v3678 = vsub.f32 1.5, %v3677
    %v3679 = vmul.f32 %v3674, %v3678
    %vm3680 = vweird.f32 %v3633
    %vm3681 = vweird.f32 %v3674
    %vm3682 = vmor %vm3680, %vm3681
    %v3683 = vsel %vm3682, %v3674, %v3679
    %v3684 = vrsqrt.pop %v3634
    %v3685 = vmul.f32 %v3684, %v3634
    %v3686 = vmul.f32 %v3685, %v3684
    %v3687 = vmul.f32 0.5, %v3686
    %v3688 = vsub.f32 1.5, %v3687
    %v3689 = vmul.f32 %v3684, %v3688
    %vm3690 = vweird.f32 %v3634
    %vm3691 = vweird.f32 %v3684
    %vm3692 = vmor %vm3690, %vm3691
    %v3693 = vsel %vm3692, %v3684, %v3689
    %v3694 = vrsqrt.pop %v3635
    %v3695 = vmul.f32 %v3694, %v3635
    %v3696 = vmul.f32 %v3695, %v3694
    %v3697 = vmul.f32 0.5, %v3696
    %v3698 = vsub.f32 1.5, %v3697
    %v3699 = vmul.f32 %v3694, %v3698
    %vm3700 = vweird.f32 %v3635
    %vm3701 = vweird.f32 %v3694
    %vm3702 = vmor %vm3700, %vm3701
    %v3703 = vsel %vm3702, %v3694, %v3699
    %v3704 = vrsqrt.pop %v3636
    %v3705 = vmul.f32 %v3704, %v3636
    %v3706 = vmul.f32 %v3705, %v3704
    %v3707 = vmul.f32 0.5, %v3706
    %v3708 = vsub.f32 1.5, %v3707
    %v3709 = vmul.f32 %v3704, %v3708
    %vm3710 = vweird.f32 %v3636
    %vm3711 = vweird.f32 %v3704
    %vm3712 = vmor %vm3710, %vm3711
    %v3713 = vsel %vm3712, %v3704, %v3709
    %v3714 = vrsqrt.pop %v3637
    %v3715 = vmul.f32 %v3714, %v3637
    %v3716 = vmul.f32 %v3715, %v3714
    %v3717 = vmul.f32 0.5, %v3716
    %v3718 = vsub.f32 1.5, %v3717
    %v3719 = vmul.f32 %v3714, %v3718
    %vm3720 = vweird.f32 %v3637
    %vm3721 = vweird.f32 %v3714
    %vm3722 = vmor %vm3720, %vm3721
    %v3723 = vsel %vm3722, %v3714, %v3719
    %v3724 = vrsqrt.pop %v3638
    %v3725 = vmul.f32 %v3724, %v3638
    %v3726 = vmul.f32 %v3725, %v3724
    %v3727 = vmul.f32 0.5, %v3726
    %v3728 = vsub.f32 1.5, %v3727
    %v3729 = vmul.f32 %v3724, %v3728
    %vm3730 = vweird.f32 %v3638
    %vm3731 = vweird.f32 %v3724
    %vm3732 = vmor %vm3730, %vm3731
    %v3733 = vsel %vm3732, %v3724, %v3729
    %v3734 = vrsqrt.pop %v3639
    %v3735 = vmul.f32 %v3734, %v3639
    %v3736 = vmul.f32 %v3735, %v3734
    %v3737 = vmul.f32 0.5, %v3736
    %v3738 = vsub.f32 1.5, %v3737
    %v3739 = vmul.f32 %v3734, %v3738
    %vm3740 = vweird.f32 %v3639
    %vm3741 = vweird.f32 %v3734
    %vm3742 = vmor %vm3740, %vm3741
    %v3743 = vsel %vm3742, %v3734, %v3739
    %v3744 = vrsqrt.pop %v3640
    %v3745 = vmul.f32 %v3744, %v3640
    %v3746 = vmul.f32 %v3745, %v3744
    %v3747 = vmul.f32 0.5, %v3746
    %v3748 = vsub.f32 1.5, %v3747
    %v3749 = vmul.f32 %v3744, %v3748
    %vm3750 = vweird.f32 %v3640
    %vm3751 = vweird.f32 %v3744
    %vm3752 = vmor %vm3750, %vm3751
    %v3753 = vsel %vm3752, %v3744, %v3749
    %v3754 = vrsqrt.pop %v3641
    %v3755 = vmul.f32 %v3754, %v3641
    %v3756 = vmul.f32 %v3755, %v3754
    %v3757 = vmul.f32 0.5, %v3756
    %v3758 = vsub.f32 1.5, %v3757
    %v3759 = vmul.f32 %v3754, %v3758
    %vm3760 = vweird.f32 %v3641
    %vm3761 = vweird.f32 %v3754
    %vm3762 = vmor %vm3760, %vm3761
    %v3763 = vsel %vm3762, %v3754, %v3759
    %v3764 = vrsqrt.pop %v3642
    %v3765 = vmul.f32 %v3764, %v3642
    %v3766 = vmul.f32 %v3765, %v3764
    %v3767 = vmul.f32 0.5, %v3766
    %v3768 = vsub.f32 1.5, %v3767
    %v3769 = vmul.f32 %v3764, %v3768
    %vm3770 = vweird.f32 %v3642
    %vm3771 = vweird.f32 %v3764
    %vm3772 = vmor %vm3770, %vm3771
    %v3773 = vsel %vm3772, %v3764, %v3769
    %v3774 = vrsqrt.pop %v3643
    %v3775 = vmul.f32 %v3774, %v3643
    %v3776 = vmul.f32 %v3775, %v3774
    %v3777 = vmul.f32 0.5, %v3776
    %v3778 = vsub.f32 1.5, %v3777
    %v3779 = vmul.f32 %v3774, %v3778
    %vm3780 = vweird.f32 %v3643
    %vm3781 = vweird.f32 %v3774
    %vm3782 = vmor %vm3780, %vm3781
    %v3783 = vsel %vm3782, %v3774, %v3779
    %v3784 = vrsqrt.pop %v3644
    %v3785 = vmul.f32 %v3784, %v3644
    %v3786 = vmul.f32 %v3785, %v3784
    %v3787 = vmul.f32 0.5, %v3786
    %v3788 = vsub.f32 1.5, %v3787
    %v3789 = vmul.f32 %v3784, %v3788
    %vm3790 = vweird.f32 %v3644
    %vm3791 = vweird.f32 %v3784
    %vm3792 = vmor %vm3790, %vm3791
    %v3793 = vsel %vm3792, %v3784, %v3789
    %v3794 = vrsqrt.pop %v3645
    %v3795 = vmul.f32 %v3794, %v3645
    %v3796 = vmul.f32 %v3795, %v3794
    %v3797 = vmul.f32 0.5, %v3796
    %v3798 = vsub.f32 1.5, %v3797
    %v3799 = vmul.f32 %v3794, %v3798
    %vm3800 = vweird.f32 %v3645
    %vm3801 = vweird.f32 %v3794
    %vm3802 = vmor %vm3800, %vm3801
    %v3803 = vsel %vm3802, %v3794, %v3799
    %v3804 = vrsqrt.pop %v3646
    %v3805 = vmul.f32 %v3804, %v3646
    %v3806 = vmul.f32 %v3805, %v3804
    %v3807 = vmul.f32 0.5, %v3806
    %v3808 = vsub.f32 1.5, %v3807
    %v3809 = vmul.f32 %v3804, %v3808
    %vm3810 = vweird.f32 %v3646
    %vm3811 = vweird.f32 %v3804
    %vm3812 = vmor %vm3810, %vm3811
    %v3813 = vsel %vm3812, %v3804, %v3809
    %v3814 = vrsqrt.pop %v3647
    %v3815 = vmul.f32 %v3814, %v3647
    %v3816 = vmul.f32 %v3815, %v3814
    %v3817 = vmul.f32 0.5, %v3816
    %v3818 = vsub.f32 1.5, %v3817
    %v3819 = vmul.f32 %v3814, %v3818
    %vm3820 = vweird.f32 %v3647
    %vm3821 = vweird.f32 %v3814
    %vm3822 = vmor %vm3820, %vm3821
    %v3823 = vsel %vm3822, %v3814, %v3819
    %v3824 = vrsqrt.pop %v3648
    %v3825 = vmul.f32 %v3824, %v3648
    %v3826 = vmul.f32 %v3825, %v3824
    %v3827 = vmul.f32 0.5, %v3826
    %v3828 = vsub.f32 1.5, %v3827
    %v3829 = vmul.f32 %v3824, %v3828
    %vm3830 = vweird.f32 %v3648
    %vm3831 = vweird.f32 %v3824
    %vm3832 = vmor %vm3830, %vm3831
    %v3833 = vsel %vm3832, %v3824, %v3829
    %v3834 = vrsqrt.pop %v3649
    %v3835 = vmul.f32 %v3834, %v3649
    %v3836 = vmul.f32 %v3835, %v3834
    %v3837 = vmul.f32 0.5, %v3836
    %v3838 = vsub.f32 1.5, %v3837
    %v3839 = vmul.f32 %v3834, %v3838
    %vm3840 = vweird.f32 %v3649
    %vm3841 = vweird.f32 %v3834
    %vm3842 = vmor %vm3840, %vm3841
    %v3843 = vsel %vm3842, %v3834, %v3839
    %v3844 = vrsqrt.pop %v3650
    %v3845 = vmul.f32 %v3844, %v3650
    %v3846 = vmul.f32 %v3845, %v3844
    %v3847 = vmul.f32 0.5, %v3846
    %v3848 = vsub.f32 1.5, %v3847
    %v3849 = vmul.f32 %v3844, %v3848
    %vm3850 = vweird.f32 %v3650
    %vm3851 = vweird.f32 %v3844
    %vm3852 = vmor %vm3850, %vm3851
    %v3853 = vsel %vm3852, %v3844, %v3849
    %v3854 = vrsqrt.pop %v3651
    %v3855 = vmul.f32 %v3854, %v3651
    %v3856 = vmul.f32 %v3855, %v3854
    %v3857 = vmul.f32 0.5, %v3856
    %v3858 = vsub.f32 1.5, %v3857
    %v3859 = vmul.f32 %v3854, %v3858
    %vm3860 = vweird.f32 %v3651
    %vm3861 = vweird.f32 %v3854
    %vm3862 = vmor %vm3860, %vm3861
    %v3863 = vsel %vm3862, %v3854, %v3859
    %v3864 = vrsqrt.pop %v3652
    %v3865 = vmul.f32 %v3864, %v3652
    %v3866 = vmul.f32 %v3865, %v3864
    %v3867 = vmul.f32 0.5, %v3866
    %v3868 = vsub.f32 1.5, %v3867
    %v3869 = vmul.f32 %v3864, %v3868
    %vm3870 = vweird.f32 %v3652
    %vm3871 = vweird.f32 %v3864
    %vm3872 = vmor %vm3870, %vm3871
    %v3873 = vsel %vm3872, %v3864, %v3869
    %v3874 = vrsqrt.pop %v3653
    %v3875 = vmul.f32 %v3874, %v3653
    %v3876 = vmul.f32 %v3875, %v3874
    %v3877 = vmul.f32 0.5, %v3876
    %v3878 = vsub.f32 1.5, %v3877
    %v3879 = vmul.f32 %v3874, %v3878
    %vm3880 = vweird.f32 %v3653
    %vm3881 = vweird.f32 %v3874
    %vm3882 = vmor %vm3880, %vm3881
    %v3883 = vsel %vm3882, %v3874, %v3879
    %v3884 = vrsqrt.pop %v3654
    %v3885 = vmul.f32 %v3884, %v3654
    %v3886 = vmul.f32 %v3885, %v3884
    %v3887 = vmul.f32 0.5, %v3886
    %v3888 = vsub.f32 1.5, %v3887
    %v3889 = vmul.f32 %v3884, %v3888
    %vm3890 = vweird.f32 %v3654
    %vm3891 = vweird.f32 %v3884
    %vm3892 = vmor %vm3890, %vm3891
    %v3893 = vsel %vm3892, %v3884, %v3889
    %v3894 = vrsqrt.pop %v3655
    %v3895 = vmul.f32 %v3894, %v3655
    %v3896 = vmul.f32 %v3895, %v3894
    %v3897 = vmul.f32 0.5, %v3896
    %v3898 = vsub.f32 1.5, %v3897
    %v3899 = vmul.f32 %v3894, %v3898
    %vm3900 = vweird.f32 %v3655
    %vm3901 = vweird.f32 %v3894
    %vm3902 = vmor %vm3900, %vm3901
    %v3903 = vsel %vm3902, %v3894, %v3899
    %v3904 = vrsqrt.pop %v3656
    %v3905 = vmul.f32 %v3904, %v3656
    %v3906 = vmul.f32 %v3905, %v3904
    %v3907 = vmul.f32 0.5, %v3906
    %v3908 = vsub.f32 1.5, %v3907
    %v3909 = vmul.f32 %v3904, %v3908
    %vm3910 = vweird.f32 %v3656
    %vm3911 = vweird.f32 %v3904
    %vm3912 = vmor %vm3910, %vm3911
    %v3913 = vsel %vm3912, %v3904, %v3909
    %v3914 = vrsqrt.pop %v3657
    %v3915 = vmul.f32 %v3914, %v3657
    %v3916 = vmul.f32 %v3915, %v3914
    %v3917 = vmul.f32 0.5, %v3916
    %v3918 = vsub.f32 1.5, %v3917
    %v3919 = vmul.f32 %v3914, %v3918
    %vm3920 = vweird.f32 %v3657
    %vm3921 = vweird.f32 %v3914
    %vm3922 = vmor %vm3920, %vm3921
    %v3923 = vsel %vm3922, %v3914, %v3919
    %v3924 = vrsqrt.pop %v3658
    %v3925 = vmul.f32 %v3924, %v3658
    %v3926 = vmul.f32 %v3925, %v3924
    %v3927 = vmul.f32 0.5, %v3926
    %v3928 = vsub.f32 1.5, %v3927
    %v3929 = vmul.f32 %v3924, %v3928
    %vm3930 = vweird.f32 %v3658
    %vm3931 = vweird.f32 %v3924
    %vm3932 = vmor %vm3930, %vm3931
    %v3933 = vsel %vm3932, %v3924, %v3929
    %v3934 = vrsqrt.pop %v3659
    %v3935 = vmul.f32 %v3934, %v3659
    %v3936 = vmul.f32 %v3935, %v3934
    %v3937 = vmul.f32 0.5, %v3936
    %v3938 = vsub.f32 1.5, %v3937
    %v3939 = vmul.f32 %v3934, %v3938
    %vm3940 = vweird.f32 %v3659
    %vm3941 = vweird.f32 %v3934
    %vm3942 = vmor %vm3940, %vm3941
    %v3943 = vsel %vm3942, %v3934, %v3939
    %v3944 = vrsqrt.pop %v3660
    %v3945 = vmul.f32 %v3944, %v3660
    %v3946 = vmul.f32 %v3945, %v3944
    %v3947 = vmul.f32 0.5, %v3946
    %v3948 = vsub.f32 1.5, %v3947
    %v3949 = vmul.f32 %v3944, %v3948
    %vm3950 = vweird.f32 %v3660
    %vm3951 = vweird.f32 %v3944
    %vm3952 = vmor %vm3950, %vm3951
    %v3953 = vsel %vm3952, %v3944, %v3949
    %v3954 = vrsqrt.pop %v3661
    %v3955 = vmul.f32 %v3954, %v3661
    %v3956 = vmul.f32 %v3955, %v3954
    %v3957 = vmul.f32 0.5, %v3956
    %v3958 = vsub.f32 1.5, %v3957
    %v3959 = vmul.f32 %v3954, %v3958
    %vm3960 = vweird.f32 %v3661
    %vm3961 = vweird.f32 %v3954
    %vm3962 = vmor %vm3960, %vm3961
    %v3963 = vsel %vm3962, %v3954, %v3959
    %v3964 = vrsqrt.pop %v3662
    %v3965 = vmul.f32 %v3964, %v3662
    %v3966 = vmul.f32 %v3965, %v3964
    %v3967 = vmul.f32 0.5, %v3966
    %v3968 = vsub.f32 1.5, %v3967
    %v3969 = vmul.f32 %v3964, %v3968
    %vm3970 = vweird.f32 %v3662
    %vm3971 = vweird.f32 %v3964
    %vm3972 = vmor %vm3970, %vm3971
    %v3973 = vsel %vm3972, %v3964, %v3969
    %v3974 = vrsqrt.pop %v3663
    %v3975 = vmul.f32 %v3974, %v3663
    %v3976 = vmul.f32 %v3975, %v3974
    %v3977 = vmul.f32 0.5, %v3976
    %v3978 = vsub.f32 1.5, %v3977
    %v3979 = vmul.f32 %v3974, %v3978
    %vm3980 = vweird.f32 %v3663
    %vm3981 = vweird.f32 %v3974
    %vm3982 = vmor %vm3980, %vm3981
    %v3983 = vsel %vm3982, %v3974, %v3979
    %v3984 = vmul.f32 %v3376, %v3673
    %v3985 = vmul.f32 %v3377, %v3673
    %v3986 = vmul.f32 %v3378, %v3683
    %v3987 = vmul.f32 %v3379, %v3683
    %v3988 = vmul.f32 %v3380, %v3693
    %v3989 = vmul.f32 %v3381, %v3693
    %v3990 = vmul.f32 %v3382, %v3703
    %v3991 = vmul.f32 %v3383, %v3703
    %v3992 = vmul.f32 %v3384, %v3713
    %v3993 = vmul.f32 %v3385, %v3713
    %v3994 = vmul.f32 %v3386, %v3723
    %v3995 = vmul.f32 %v3387, %v3723
    %v3996 = vmul.f32 %v3388, %v3733
    %v3997 = vmul.f32 %v3389, %v3733
    %v3998 = vmul.f32 %v3390, %v3743
    %v3999 = vmul.f32 %v3391, %v3743
    %v4000 = vmul.f32 %v3392, %v3753
    %v4001 = vmul.f32 %v3393, %v3753
    %v4002 = vmul.f32 %v3394, %v3763
    %v4003 = vmul.f32 %v3395, %v3763
    %v4004 = vmul.f32 %v3396, %v3773
    %v4005 = vmul.f32 %v3397, %v3773
    %v4006 = vmul.f32 %v3398, %v3783
    %v4007 = vmul.f32 %v3399, %v3783
    %v4008 = vmul.f32 %v3400, %v3793
    %v4009 = vmul.f32 %v3401, %v3793
    %v4010 = vmul.f32 %v3402, %v3803
    %v4011 = vmul.f32 %v3403, %v3803
    %v4012 = vmul.f32 %v3404, %v3813
    %v4013 = vmul.f32 %v3405, %v3813
    %v4014 = vmul.f32 %v3406, %v3823
    %v4015 = vmul.f32 %v3407, %v3823
    %v4016 = vmul.f32 %v3408, %v3833
    %v4017 = vmul.f32 %v3409, %v3833
    %v4018 = vmul.f32 %v3410, %v3843
    %v4019 = vmul.f32 %v3411, %v3843
    %v4020 = vmul.f32 %v3412, %v3853
    %v4021 = vmul.f32 %v3413, %v3853
    %v4022 = vmul.f32 %v3414, %v3863
    %v4023 = vmul.f32 %v3415, %v3863
    %v4024 = vmul.f32 %v3416, %v3873
    %v4025 = vmul.f32 %v3417, %v3873
    %v4026 = vmul.f32 %v3418, %v3883
    %v4027 = vmul.f32 %v3419, %v3883
    %v4028 = vmul.f32 %v3420, %v3893
    %v4029 = vmul.f32 %v3421, %v3893
    %v4030 = vmul.f32 %v3422, %v3903
    %v4031 = vmul.f32 %v3423, %v3903
    %v4032 = vmul.f32 %v3424, %v3913
    %v4033 = vmul.f32 %v3425, %v3913
    %v4034 = vmul.f32 %v3426, %v3923
    %v4035 = vmul.f32 %v3427, %v3923
    %v4036 = vmul.f32 %v3428, %v3933
    %v4037 = vmul.f32 %v3429, %v3933
    %v4038 = vmul.f32 %v3430, %v3943
    %v4039 = vmul.f32 %v3431, %v3943
    %v4040 = vmul.f32 %v3432, %v3953
    %v4041 = vmul.f32 %v3433, %v3953
    %v4042 = vmul.f32 %v3434, %v3963
    %v4043 = vmul.f32 %v3435, %v3963
    %v4044 = vmul.f32 %v3436, %v3973
    %v4045 = vmul.f32 %v3437, %v3973
    %v4046 = vmul.f32 %v3438, %v3983
    %v4047 = vmul.f32 %v3439, %v3983
    %v4049 = vperm.slane %v3239, 0
    %v4050 = vperm.slane %v3239, 1
    %v4053 = vmul.f32 %v3984, %v4049
    %v4054 = vmul.f32 %v3985, %v4050
    %v4055 = vmul.f32 %v3986, %v4049
    %v4056 = vmul.f32 %v3987, %v4050
    %v4057 = vmul.f32 %v3988, %v4049
    %v4058 = vmul.f32 %v3989, %v4050
    %v4059 = vmul.f32 %v3990, %v4049
    %v4060 = vmul.f32 %v3991, %v4050
    %v4061 = vmul.f32 %v3992, %v4049
    %v4062 = vmul.f32 %v3993, %v4050
    %v4063 = vmul.f32 %v3994, %v4049
    %v4064 = vmul.f32 %v3995, %v4050
    %v4065 = vmul.f32 %v3996, %v4049
    %v4066 = vmul.f32 %v3997, %v4050
    %v4067 = vmul.f32 %v3998, %v4049
    %v4068 = vmul.f32 %v3999, %v4050
    %v4069 = vmul.f32 %v4000, %v4049
    %v4070 = vmul.f32 %v4001, %v4050
    %v4071 = vmul.f32 %v4002, %v4049
    %v4072 = vmul.f32 %v4003, %v4050
    %v4073 = vmul.f32 %v4004, %v4049
    %v4074 = vmul.f32 %v4005, %v4050
    %v4075 = vmul.f32 %v4006, %v4049
    %v4076 = vmul.f32 %v4007, %v4050
    %v4077 = vmul.f32 %v4008, %v4049
    %v4078 = vmul.f32 %v4009, %v4050
    %v4079 = vmul.f32 %v4010, %v4049
    %v4080 = vmul.f32 %v4011, %v4050
    %v4081 = vmul.f32 %v4012, %v4049
    %v4082 = vmul.f32 %v4013, %v4050
    %v4083 = vmul.f32 %v4014, %v4049
    %v4084 = vmul.f32 %v4015, %v4050
    %v4085 = vmul.f32 %v4016, %v4049
    %v4086 = vmul.f32 %v4017, %v4050
    %v4087 = vmul.f32 %v4018, %v4049
    %v4088 = vmul.f32 %v4019, %v4050
    %v4089 = vmul.f32 %v4020, %v4049
    %v4090 = vmul.f32 %v4021, %v4050
    %v4091 = vmul.f32 %v4022, %v4049
    %v4092 = vmul.f32 %v4023, %v4050
    %v4093 = vmul.f32 %v4024, %v4049
    %v4094 = vmul.f32 %v4025, %v4050
    %v4095 = vmul.f32 %v4026, %v4049
    %v4096 = vmul.f32 %v4027, %v4050
    %v4097 = vmul.f32 %v4028, %v4049
    %v4098 = vmul.f32 %v4029, %v4050
    %v4099 = vmul.f32 %v4030, %v4049
    %v4100 = vmul.f32 %v4031, %v4050
    %v4101 = vmul.f32 %v4032, %v4049
    %v4102 = vmul.f32 %v4033, %v4050
    %v4103 = vmul.f32 %v4034, %v4049
    %v4104 = vmul.f32 %v4035, %v4050
    %v4105 = vmul.f32 %v4036, %v4049
    %v4106 = vmul.f32 %v4037, %v4050
    %v4107 = vmul.f32 %v4038, %v4049
    %v4108 = vmul.f32 %v4039, %v4050
    %v4109 = vmul.f32 %v4040, %v4049
    %v4110 = vmul.f32 %v4041, %v4050
    %v4111 = vmul.f32 %v4042, %v4049
    %v4112 = vmul.f32 %v4043, %v4050
    %v4113 = vmul.f32 %v4044, %v4049
    %v4114 = vmul.f32 %v4045, %v4050
    %v4115 = vmul.f32 %v4046, %v4049
    %v4116 = vmul.f32 %v4047, %v4050
    %v4118 = vperm.slane %v3240, 0
    %v4119 = vperm.slane %v3240, 1
    %v4122 = vadd.f32 %v4053, %v4118
    %v4123 = vadd.f32 %v4054, %v4119
    %v4124 = vadd.f32 %v4055, %v4118
    %v4125 = vadd.f32 %v4056, %v4119
    %v4126 = vadd.f32 %v4057, %v4118
    %v4127 = vadd.f32 %v4058, %v4119
    %v4128 = vadd.f32 %v4059, %v4118
    %v4129 = vadd.f32 %v4060, %v4119
    %v4130 = vadd.f32 %v4061, %v4118
    %v4131 = vadd.f32 %v4062, %v4119
    %v4132 = vadd.f32 %v4063, %v4118
    %v4133 = vadd.f32 %v4064, %v4119
    %v4134 = vadd.f32 %v4065, %v4118
    %v4135 = vadd.f32 %v4066, %v4119
    %v4136 = vadd.f32 %v4067, %v4118
    %v4137 = vadd.f32 %v4068, %v4119
    %v4138 = vadd.f32 %v4069, %v4118
    %v4139 = vadd.f32 %v4070, %v4119
    %v4140 = vadd.f32 %v4071, %v4118
    %v4141 = vadd.f32 %v4072, %v4119
    %v4142 = vadd.f32 %v4073, %v4118
    %v4143 = vadd.f32 %v4074, %v4119
    %v4144 = vadd.f32 %v4075, %v4118
    %v4145 = vadd.f32 %v4076, %v4119
    %v4146 = vadd.f32 %v4077, %v4118
    %v4147 = vadd.f32 %v4078, %v4119
    %v4148 = vadd.f32 %v4079, %v4118
    %v4149 = vadd.f32 %v4080, %v4119
    %v4150 = vadd.f32 %v4081, %v4118
    %v4151 = vadd.f32 %v4082, %v4119
    %v4152 = vadd.f32 %v4083, %v4118
    %v4153 = vadd.f32 %v4084, %v4119
    %v4154 = vadd.f32 %v4085, %v4118
    %v4155 = vadd.f32 %v4086, %v4119
    %v4156 = vadd.f32 %v4087, %v4118
    %v4157 = vadd.f32 %v4088, %v4119
    %v4158 = vadd.f32 %v4089, %v4118
    %v4159 = vadd.f32 %v4090, %v4119
    %v4160 = vadd.f32 %v4091, %v4118
    %v4161 = vadd.f32 %v4092, %v4119
    %v4162 = vadd.f32 %v4093, %v4118
    %v4163 = vadd.f32 %v4094, %v4119
    %v4164 = vadd.f32 %v4095, %v4118
    %v4165 = vadd.f32 %v4096, %v4119
    %v4166 = vadd.f32 %v4097, %v4118
    %v4167 = vadd.f32 %v4098, %v4119
    %v4168 = vadd.f32 %v4099, %v4118
    %v4169 = vadd.f32 %v4100, %v4119
    %v4170 = vadd.f32 %v4101, %v4118
    %v4171 = vadd.f32 %v4102, %v4119
    %v4172 = vadd.f32 %v4103, %v4118
    %v4173 = vadd.f32 %v4104, %v4119
    %v4174 = vadd.f32 %v4105, %v4118
    %v4175 = vadd.f32 %v4106, %v4119
    %v4176 = vadd.f32 %v4107, %v4118
    %v4177 = vadd.f32 %v4108, %v4119
    %v4178 = vadd.f32 %v4109, %v4118
    %v4179 = vadd.f32 %v4110, %v4119
    %v4180 = vadd.f32 %v4111, %v4118
    %v4181 = vadd.f32 %v4112, %v4119
    %v4182 = vadd.f32 %v4113, %v4118
    %v4183 = vadd.f32 %v4114, %v4119
    %v4184 = vadd.f32 %v4115, %v4118
    %v4185 = vadd.f32 %v4116, %v4119
    %v4186 = vmul.f32 %v4122, 0.5
    %v4187 = vmul.f32 %v4123, 0.5
    %v4188 = vmul.f32 %v4124, 0.5
    %v4189 = vmul.f32 %v4125, 0.5
    %v4190 = vmul.f32 %v4126, 0.5
    %v4191 = vmul.f32 %v4127, 0.5
    %v4192 = vmul.f32 %v4128, 0.5
    %v4193 = vmul.f32 %v4129, 0.5
    %v4194 = vmul.f32 %v4130, 0.5
    %v4195 = vmul.f32 %v4131, 0.5
    %v4196 = vmul.f32 %v4132, 0.5
    %v4197 = vmul.f32 %v4133, 0.5
    %v4198 = vmul.f32 %v4134, 0.5
    %v4199 = vmul.f32 %v4135, 0.5
    %v4200 = vmul.f32 %v4136, 0.5
    %v4201 = vmul.f32 %v4137, 0.5
    %v4202 = vmul.f32 %v4138, 0.5
    %v4203 = vmul.f32 %v4139, 0.5
    %v4204 = vmul.f32 %v4140, 0.5
    %v4205 = vmul.f32 %v4141, 0.5
    %v4206 = vmul.f32 %v4142, 0.5
    %v4207 = vmul.f32 %v4143, 0.5
    %v4208 = vmul.f32 %v4144, 0.5
    %v4209 = vmul.f32 %v4145, 0.5
    %v4210 = vmul.f32 %v4146, 0.5
    %v4211 = vmul.f32 %v4147, 0.5
    %v4212 = vmul.f32 %v4148, 0.5
    %v4213 = vmul.f32 %v4149, 0.5
    %v4214 = vmul.f32 %v4150, 0.5
    %v4215 = vmul.f32 %v4151, 0.5
    %v4216 = vmul.f32 %v4152, 0.5
    %v4217 = vmul.f32 %v4153, 0.5
    %v4218 = vmul.f32 %v4154, 0.5
    %v4219 = vmul.f32 %v4155, 0.5
    %v4220 = vmul.f32 %v4156, 0.5
    %v4221 = vmul.f32 %v4157, 0.5
    %v4222 = vmul.f32 %v4158, 0.5
    %v4223 = vmul.f32 %v4159, 0.5
    %v4224 = vmul.f32 %v4160, 0.5
    %v4225 = vmul.f32 %v4161, 0.5
    %v4226 = vmul.f32 %v4162, 0.5
    %v4227 = vmul.f32 %v4163, 0.5
    %v4228 = vmul.f32 %v4164, 0.5
    %v4229 = vmul.f32 %v4165, 0.5
    %v4230 = vmul.f32 %v4166, 0.5
    %v4231 = vmul.f32 %v4167, 0.5
    %v4232 = vmul.f32 %v4168, 0.5
    %v4233 = vmul.f32 %v4169, 0.5
    %v4234 = vmul.f32 %v4170, 0.5
    %v4235 = vmul.f32 %v4171, 0.5
    %v4236 = vmul.f32 %v4172, 0.5
    %v4237 = vmul.f32 %v4173, 0.5
    %v4238 = vmul.f32 %v4174, 0.5
    %v4239 = vmul.f32 %v4175, 0.5
    %v4240 = vmul.f32 %v4176, 0.5
    %v4241 = vmul.f32 %v4177, 0.5
    %v4242 = vmul.f32 %v4178, 0.5
    %v4243 = vmul.f32 %v4179, 0.5
    %v4244 = vmul.f32 %v4180, 0.5
    %v4245 = vmul.f32 %v4181, 0.5
    %v4246 = vmul.f32 %v4182, 0.5
    %v4247 = vmul.f32 %v4183, 0.5
    %v4248 = vmul.f32 %v4184, 0.5
    %v4249 = vmul.f32 %v4185, 0.5
    %v4250 = vmul.f32 %v4122, 0.044715
    %v4251 = vmul.f32 %v4123, 0.044715
    %v4252 = vmul.f32 %v4124, 0.044715
    %v4253 = vmul.f32 %v4125, 0.044715
    %v4254 = vmul.f32 %v4126, 0.044715
    %v4255 = vmul.f32 %v4127, 0.044715
    %v4256 = vmul.f32 %v4128, 0.044715
    %v4257 = vmul.f32 %v4129, 0.044715
    %v4258 = vmul.f32 %v4130, 0.044715
    %v4259 = vmul.f32 %v4131, 0.044715
    %v4260 = vmul.f32 %v4132, 0.044715
    %v4261 = vmul.f32 %v4133, 0.044715
    %v4262 = vmul.f32 %v4134, 0.044715
    %v4263 = vmul.f32 %v4135, 0.044715
    %v4264 = vmul.f32 %v4136, 0.044715
    %v4265 = vmul.f32 %v4137, 0.044715
    %v4266 = vmul.f32 %v4138, 0.044715
    %v4267 = vmul.f32 %v4139, 0.044715
    %v4268 = vmul.f32 %v4140, 0.044715
    %v4269 = vmul.f32 %v4141, 0.044715
    %v4270 = vmul.f32 %v4142, 0.044715
    %v4271 = vmul.f32 %v4143, 0.044715
    %v4272 = vmul.f32 %v4144, 0.044715
    %v4273 = vmul.f32 %v4145, 0.044715
    %v4274 = vmul.f32 %v4146, 0.044715
    %v4275 = vmul.f32 %v4147, 0.044715
    %v4276 = vmul.f32 %v4148, 0.044715
    %v4277 = vmul.f32 %v4149, 0.044715
    %v4278 = vmul.f32 %v4150, 0.044715
    %v4279 = vmul.f32 %v4151, 0.044715
    %v4280 = vmul.f32 %v4152, 0.044715
    %v4281 = vmul.f32 %v4153, 0.044715
    %v4282 = vmul.f32 %v4154, 0.044715
    %v4283 = vmul.f32 %v4155, 0.044715
    %v4284 = vmul.f32 %v4156, 0.044715
    %v4285 = vmul.f32 %v4157, 0.044715
    %v4286 = vmul.f32 %v4158, 0.044715
    %v4287 = vmul.f32 %v4159, 0.044715
    %v4288 = vmul.f32 %v4160, 0.044715
    %v4289 = vmul.f32 %v4161, 0.044715
    %v4290 = vmul.f32 %v4162, 0.044715
    %v4291 = vmul.f32 %v4163, 0.044715
    %v4292 = vmul.f32 %v4164, 0.044715
    %v4293 = vmul.f32 %v4165, 0.044715
    %v4294 = vmul.f32 %v4166, 0.044715
    %v4295 = vmul.f32 %v4167, 0.044715
    %v4296 = vmul.f32 %v4168, 0.044715
    %v4297 = vmul.f32 %v4169, 0.044715
    %v4298 = vmul.f32 %v4170, 0.044715
    %v4299 = vmul.f32 %v4171, 0.044715
    %v4300 = vmul.f32 %v4172, 0.044715
    %v4301 = vmul.f32 %v4173, 0.044715
    %v4302 = vmul.f32 %v4174, 0.044715
    %v4303 = vmul.f32 %v4175, 0.044715
    %v4304 = vmul.f32 %v4176, 0.044715
    %v4305 = vmul.f32 %v4177, 0.044715
    %v4306 = vmul.f32 %v4178, 0.044715
    %v4307 = vmul.f32 %v4179, 0.044715
    %v4308 = vmul.f32 %v4180, 0.044715
    %v4309 = vmul.f32 %v4181, 0.044715
    %v4310 = vmul.f32 %v4182, 0.044715
    %v4311 = vmul.f32 %v4183, 0.044715
    %v4312 = vmul.f32 %v4184, 0.044715
    %v4313 = vmul.f32 %v4185, 0.044715
    %v4314 = vmul.f32 %v4250, %v4122
    %v4315 = vmul.f32 %v4251, %v4123
    %v4316 = vmul.f32 %v4252, %v4124
    %v4317 = vmul.f32 %v4253, %v4125
    %v4318 = vmul.f32 %v4254, %v4126
    %v4319 = vmul.f32 %v4255, %v4127
    %v4320 = vmul.f32 %v4256, %v4128
    %v4321 = vmul.f32 %v4257, %v4129
    %v4322 = vmul.f32 %v4258, %v4130
    %v4323 = vmul.f32 %v4259, %v4131
    %v4324 = vmul.f32 %v4260, %v4132
    %v4325 = vmul.f32 %v4261, %v4133
    %v4326 = vmul.f32 %v4262, %v4134
    %v4327 = vmul.f32 %v4263, %v4135
    %v4328 = vmul.f32 %v4264, %v4136
    %v4329 = vmul.f32 %v4265, %v4137
    %v4330 = vmul.f32 %v4266, %v4138
    %v4331 = vmul.f32 %v4267, %v4139
    %v4332 = vmul.f32 %v4268, %v4140
    %v4333 = vmul.f32 %v4269, %v4141
    %v4334 = vmul.f32 %v4270, %v4142
    %v4335 = vmul.f32 %v4271, %v4143
    %v4336 = vmul.f32 %v4272, %v4144
    %v4337 = vmul.f32 %v4273, %v4145
    %v4338 = vmul.f32 %v4274, %v4146
    %v4339 = vmul.f32 %v4275, %v4147
    %v4340 = vmul.f32 %v4276, %v4148
    %v4341 = vmul.f32 %v4277, %v4149
    %v4342 = vmul.f32 %v4278, %v4150
    %v4343 = vmul.f32 %v4279, %v4151
    %v4344 = vmul.f32 %v4280, %v4152
    %v4345 = vmul.f32 %v4281, %v4153
    %v4346 = vmul.f32 %v4282, %v4154
    %v4347 = vmul.f32 %v4283, %v4155
    %v4348 = vmul.f32 %v4284, %v4156
    %v4349 = vmul.f32 %v4285, %v4157
    %v4350 = vmul.f32 %v4286, %v4158
    %v4351 = vmul.f32 %v4287, %v4159
    %v4352 = vmul.f32 %v4288, %v4160
    %v4353 = vmul.f32 %v4289, %v4161
    %v4354 = vmul.f32 %v4290, %v4162
    %v4355 = vmul.f32 %v4291, %v4163
    %v4356 = vmul.f32 %v4292, %v4164
    %v4357 = vmul.f32 %v4293, %v4165
    %v4358 = vmul.f32 %v4294, %v4166
    %v4359 = vmul.f32 %v4295, %v4167
    %v4360 = vmul.f32 %v4296, %v4168
    %v4361 = vmul.f32 %v4297, %v4169
    %v4362 = vmul.f32 %v4298, %v4170
    %v4363 = vmul.f32 %v4299, %v4171
    %v4364 = vmul.f32 %v4300, %v4172
    %v4365 = vmul.f32 %v4301, %v4173
    %v4366 = vmul.f32 %v4302, %v4174
    %v4367 = vmul.f32 %v4303, %v4175
    %v4368 = vmul.f32 %v4304, %v4176
    %v4369 = vmul.f32 %v4305, %v4177
    %v4370 = vmul.f32 %v4306, %v4178
    %v4371 = vmul.f32 %v4307, %v4179
    %v4372 = vmul.f32 %v4308, %v4180
    %v4373 = vmul.f32 %v4309, %v4181
    %v4374 = vmul.f32 %v4310, %v4182
    %v4375 = vmul.f32 %v4311, %v4183
    %v4376 = vmul.f32 %v4312, %v4184
    %v4377 = vmul.f32 %v4313, %v4185
    %v4378 = vmul.f32 %v4314, %v4122
    %v4379 = vmul.f32 %v4315, %v4123
    %v4380 = vmul.f32 %v4316, %v4124
    %v4381 = vmul.f32 %v4317, %v4125
    %v4382 = vmul.f32 %v4318, %v4126
    %v4383 = vmul.f32 %v4319, %v4127
    %v4384 = vmul.f32 %v4320, %v4128
    %v4385 = vmul.f32 %v4321, %v4129
    %v4386 = vmul.f32 %v4322, %v4130
    %v4387 = vmul.f32 %v4323, %v4131
    %v4388 = vmul.f32 %v4324, %v4132
    %v4389 = vmul.f32 %v4325, %v4133
    %v4390 = vmul.f32 %v4326, %v4134
    %v4391 = vmul.f32 %v4327, %v4135
    %v4392 = vmul.f32 %v4328, %v4136
    %v4393 = vmul.f32 %v4329, %v4137
    %v4394 = vmul.f32 %v4330, %v4138
    %v4395 = vmul.f32 %v4331, %v4139
    %v4396 = vmul.f32 %v4332, %v4140
    %v4397 = vmul.f32 %v4333, %v4141
    %v4398 = vmul.f32 %v4334, %v4142
    %v4399 = vmul.f32 %v4335, %v4143
    %v4400 = vmul.f32 %v4336, %v4144
    %v4401 = vmul.f32 %v4337, %v4145
    %v4402 = vmul.f32 %v4338, %v4146
    %v4403 = vmul.f32 %v4339, %v4147
    %v4404 = vmul.f32 %v4340, %v4148
    %v4405 = vmul.f32 %v4341, %v4149
    %v4406 = vmul.f32 %v4342, %v4150
    %v4407 = vmul.f32 %v4343, %v4151
    %v4408 = vmul.f32 %v4344, %v4152
    %v4409 = vmul.f32 %v4345, %v4153
    %v4410 = vmul.f32 %v4346, %v4154
    %v4411 = vmul.f32 %v4347, %v4155
    %v4412 = vmul.f32 %v4348, %v4156
    %v4413 = vmul.f32 %v4349, %v4157
    %v4414 = vmul.f32 %v4350, %v4158
    %v4415 = vmul.f32 %v4351, %v4159
    %v4416 = vmul.f32 %v4352, %v4160
    %v4417 = vmul.f32 %v4353, %v4161
    %v4418 = vmul.f32 %v4354, %v4162
    %v4419 = vmul.f32 %v4355, %v4163
    %v4420 = vmul.f32 %v4356, %v4164
    %v4421 = vmul.f32 %v4357, %v4165
    %v4422 = vmul.f32 %v4358, %v4166
    %v4423 = vmul.f32 %v4359, %v4167
    %v4424 = vmul.f32 %v4360, %v4168
    %v4425 = vmul.f32 %v4361, %v4169
    %v4426 = vmul.f32 %v4362, %v4170
    %v4427 = vmul.f32 %v4363, %v4171
    %v4428 = vmul.f32 %v4364, %v4172
    %v4429 = vmul.f32 %v4365, %v4173
    %v4430 = vmul.f32 %v4366, %v4174
    %v4431 = vmul.f32 %v4367, %v4175
    %v4432 = vmul.f32 %v4368, %v4176
    %v4433 = vmul.f32 %v4369, %v4177
    %v4434 = vmul.f32 %v4370, %v4178
    %v4435 = vmul.f32 %v4371, %v4179
    %v4436 = vmul.f32 %v4372, %v4180
    %v4437 = vmul.f32 %v4373, %v4181
    %v4438 = vmul.f32 %v4374, %v4182
    %v4439 = vmul.f32 %v4375, %v4183
    %v4440 = vmul.f32 %v4376, %v4184
    %v4441 = vmul.f32 %v4377, %v4185
    %v4442 = vadd.f32 %v4122, %v4378
    %v4443 = vadd.f32 %v4123, %v4379
    %v4444 = vadd.f32 %v4124, %v4380
    %v4445 = vadd.f32 %v4125, %v4381
    %v4446 = vadd.f32 %v4126, %v4382
    %v4447 = vadd.f32 %v4127, %v4383
    %v4448 = vadd.f32 %v4128, %v4384
    %v4449 = vadd.f32 %v4129, %v4385
    %v4450 = vadd.f32 %v4130, %v4386
    %v4451 = vadd.f32 %v4131, %v4387
    %v4452 = vadd.f32 %v4132, %v4388
    %v4453 = vadd.f32 %v4133, %v4389
    %v4454 = vadd.f32 %v4134, %v4390
    %v4455 = vadd.f32 %v4135, %v4391
    %v4456 = vadd.f32 %v4136, %v4392
    %v4457 = vadd.f32 %v4137, %v4393
    %v4458 = vadd.f32 %v4138, %v4394
    %v4459 = vadd.f32 %v4139, %v4395
    %v4460 = vadd.f32 %v4140, %v4396
    %v4461 = vadd.f32 %v4141, %v4397
    %v4462 = vadd.f32 %v4142, %v4398
    %v4463 = vadd.f32 %v4143, %v4399
    %v4464 = vadd.f32 %v4144, %v4400
    %v4465 = vadd.f32 %v4145, %v4401
    %v4466 = vadd.f32 %v4146, %v4402
    %v4467 = vadd.f32 %v4147, %v4403
    %v4468 = vadd.f32 %v4148, %v4404
    %v4469 = vadd.f32 %v4149, %v4405
    %v4470 = vadd.f32 %v4150, %v4406
    %v4471 = vadd.f32 %v4151, %v4407
    %v4472 = vadd.f32 %v4152, %v4408
    %v4473 = vadd.f32 %v4153, %v4409
    %v4474 = vadd.f32 %v4154, %v4410
    %v4475 = vadd.f32 %v4155, %v4411
    %v4476 = vadd.f32 %v4156, %v4412
    %v4477 = vadd.f32 %v4157, %v4413
    %v4478 = vadd.f32 %v4158, %v4414
    %v4479 = vadd.f32 %v4159, %v4415
    %v4480 = vadd.f32 %v4160, %v4416
    %v4481 = vadd.f32 %v4161, %v4417
    %v4482 = vadd.f32 %v4162, %v4418
    %v4483 = vadd.f32 %v4163, %v4419
    %v4484 = vadd.f32 %v4164, %v4420
    %v4485 = vadd.f32 %v4165, %v4421
    %v4486 = vadd.f32 %v4166, %v4422
    %v4487 = vadd.f32 %v4167, %v4423
    %v4488 = vadd.f32 %v4168, %v4424
    %v4489 = vadd.f32 %v4169, %v4425
    %v4490 = vadd.f32 %v4170, %v4426
    %v4491 = vadd.f32 %v4171, %v4427
    %v4492 = vadd.f32 %v4172, %v4428
    %v4493 = vadd.f32 %v4173, %v4429
    %v4494 = vadd.f32 %v4174, %v4430
    %v4495 = vadd.f32 %v4175, %v4431
    %v4496 = vadd.f32 %v4176, %v4432
    %v4497 = vadd.f32 %v4177, %v4433
    %v4498 = vadd.f32 %v4178, %v4434
    %v4499 = vadd.f32 %v4179, %v4435
    %v4500 = vadd.f32 %v4180, %v4436
    %v4501 = vadd.f32 %v4181, %v4437
    %v4502 = vadd.f32 %v4182, %v4438
    %v4503 = vadd.f32 %v4183, %v4439
    %v4504 = vadd.f32 %v4184, %v4440
    %v4505 = vadd.f32 %v4185, %v4441
    %v4506 = vmul.f32 %v4442, 0.7978846
    %v4507 = vmul.f32 %v4443, 0.7978846
    %v4508 = vmul.f32 %v4444, 0.7978846
    %v4509 = vmul.f32 %v4445, 0.7978846
    %v4510 = vmul.f32 %v4446, 0.7978846
    %v4511 = vmul.f32 %v4447, 0.7978846
    %v4512 = vmul.f32 %v4448, 0.7978846
    %v4513 = vmul.f32 %v4449, 0.7978846
    %v4514 = vmul.f32 %v4450, 0.7978846
    %v4515 = vmul.f32 %v4451, 0.7978846
    %v4516 = vmul.f32 %v4452, 0.7978846
    %v4517 = vmul.f32 %v4453, 0.7978846
    %v4518 = vmul.f32 %v4454, 0.7978846
    %v4519 = vmul.f32 %v4455, 0.7978846
    %v4520 = vmul.f32 %v4456, 0.7978846
    %v4521 = vmul.f32 %v4457, 0.7978846
    %v4522 = vmul.f32 %v4458, 0.7978846
    %v4523 = vmul.f32 %v4459, 0.7978846
    %v4524 = vmul.f32 %v4460, 0.7978846
    %v4525 = vmul.f32 %v4461, 0.7978846
    %v4526 = vmul.f32 %v4462, 0.7978846
    %v4527 = vmul.f32 %v4463, 0.7978846
    %v4528 = vmul.f32 %v4464, 0.7978846
    %v4529 = vmul.f32 %v4465, 0.7978846
    %v4530 = vmul.f32 %v4466, 0.7978846
    %v4531 = vmul.f32 %v4467, 0.7978846
    %v4532 = vmul.f32 %v4468, 0.7978846
    %v4533 = vmul.f32 %v4469, 0.7978846
    %v4534 = vmul.f32 %v4470, 0.7978846
    %v4535 = vmul.f32 %v4471, 0.7978846
    %v4536 = vmul.f32 %v4472, 0.7978846
    %v4537 = vmul.f32 %v4473, 0.7978846
    %v4538 = vmul.f32 %v4474, 0.7978846
    %v4539 = vmul.f32 %v4475, 0.7978846
    %v4540 = vmul.f32 %v4476, 0.7978846
    %v4541 = vmul.f32 %v4477, 0.7978846
    %v4542 = vmul.f32 %v4478, 0.7978846
    %v4543 = vmul.f32 %v4479, 0.7978846
    %v4544 = vmul.f32 %v4480, 0.7978846
    %v4545 = vmul.f32 %v4481, 0.7978846
    %v4546 = vmul.f32 %v4482, 0.7978846
    %v4547 = vmul.f32 %v4483, 0.7978846
    %v4548 = vmul.f32 %v4484, 0.7978846
    %v4549 = vmul.f32 %v4485, 0.7978846
    %v4550 = vmul.f32 %v4486, 0.7978846
    %v4551 = vmul.f32 %v4487, 0.7978846
    %v4552 = vmul.f32 %v4488, 0.7978846
    %v4553 = vmul.f32 %v4489, 0.7978846
    %v4554 = vmul.f32 %v4490, 0.7978846
    %v4555 = vmul.f32 %v4491, 0.7978846
    %v4556 = vmul.f32 %v4492, 0.7978846
    %v4557 = vmul.f32 %v4493, 0.7978846
    %v4558 = vmul.f32 %v4494, 0.7978846
    %v4559 = vmul.f32 %v4495, 0.7978846
    %v4560 = vmul.f32 %v4496, 0.7978846
    %v4561 = vmul.f32 %v4497, 0.7978846
    %v4562 = vmul.f32 %v4498, 0.7978846
    %v4563 = vmul.f32 %v4499, 0.7978846
    %v4564 = vmul.f32 %v4500, 0.7978846
    %v4565 = vmul.f32 %v4501, 0.7978846
    %v4566 = vmul.f32 %v4502, 0.7978846
    %v4567 = vmul.f32 %v4503, 0.7978846
    %v4568 = vmul.f32 %v4504, 0.7978846
    %v4569 = vmul.f32 %v4505, 0.7978846
    %v4570 = vtanh.pop %v4506
    %v4571 = vtanh.pop %v4507
    %v4572 = vtanh.pop %v4508
    %v4573 = vtanh.pop %v4509
    %v4574 = vtanh.pop %v4510
    %v4575 = vtanh.pop %v4511
    %v4576 = vtanh.pop %v4512
    %v4577 = vtanh.pop %v4513
    %v4578 = vtanh.pop %v4514
    %v4579 = vtanh.pop %v4515
    %v4580 = vtanh.pop %v4516
    %v4581 = vtanh.pop %v4517
    %v4582 = vtanh.pop %v4518
    %v4583 = vtanh.pop %v4519
    %v4584 = vtanh.pop %v4520
    %v4585 = vtanh.pop %v4521
    %v4586 = vtanh.pop %v4522
    %v4587 = vtanh.pop %v4523
    %v4588 = vtanh.pop %v4524
    %v4589 = vtanh.pop %v4525
    %v4590 = vtanh.pop %v4526
    %v4591 = vtanh.pop %v4527
    %v4592 = vtanh.pop %v4528
    %v4593 = vtanh.pop %v4529
    %v4594 = vtanh.pop %v4530
    %v4595 = vtanh.pop %v4531
    %v4596 = vtanh.pop %v4532
    %v4597 = vtanh.pop %v4533
    %v4598 = vtanh.pop %v4534
    %v4599 = vtanh.pop %v4535
    %v4600 = vtanh.pop %v4536
    %v4601 = vtanh.pop %v4537
    %v4602 = vtanh.pop %v4538
    %v4603 = vtanh.pop %v4539
    %v4604 = vtanh.pop %v4540
    %v4605 = vtanh.pop %v4541
    %v4606 = vtanh.pop %v4542
    %v4607 = vtanh.pop %v4543
    %v4608 = vtanh.pop %v4544
    %v4609 = vtanh.pop %v4545
    %v4610 = vtanh.pop %v4546
    %v4611 = vtanh.pop %v4547
    %v4612 = vtanh.pop %v4548
    %v4613 = vtanh.pop %v4549
    %v4614 = vtanh.pop %v4550
    %v4615 = vtanh.pop %v4551
    %v4616 = vtanh.pop %v4552
    %v4617 = vtanh.pop %v4553
    %v4618 = vtanh.pop %v4554
    %v4619 = vtanh.pop %v4555
    %v4620 = vtanh.pop %v4556
    %v4621 = vtanh.pop %v4557
    %v4622 = vtanh.pop %v4558
    %v4623 = vtanh.pop %v4559
    %v4624 = vtanh.pop %v4560
    %v4625 = vtanh.pop %v4561
    %v4626 = vtanh.pop %v4562
    %v4627 = vtanh.pop %v4563
    %v4628 = vtanh.pop %v4564
    %v4629 = vtanh.pop %v4565
    %v4630 = vtanh.pop %v4566
    %v4631 = vtanh.pop %v4567
    %v4632 = vtanh.pop %v4568
    %v4633 = vtanh.pop %v4569
    %v4634 = vadd.f32 %v4570, 1.0
    %v4635 = vadd.f32 %v4571, 1.0
    %v4636 = vadd.f32 %v4572, 1.0
    %v4637 = vadd.f32 %v4573, 1.0
    %v4638 = vadd.f32 %v4574, 1.0
    %v4639 = vadd.f32 %v4575, 1.0
    %v4640 = vadd.f32 %v4576, 1.0
    %v4641 = vadd.f32 %v4577, 1.0
    %v4642 = vadd.f32 %v4578, 1.0
    %v4643 = vadd.f32 %v4579, 1.0
    %v4644 = vadd.f32 %v4580, 1.0
    %v4645 = vadd.f32 %v4581, 1.0
    %v4646 = vadd.f32 %v4582, 1.0
    %v4647 = vadd.f32 %v4583, 1.0
    %v4648 = vadd.f32 %v4584, 1.0
    %v4649 = vadd.f32 %v4585, 1.0
    %v4650 = vadd.f32 %v4586, 1.0
    %v4651 = vadd.f32 %v4587, 1.0
    %v4652 = vadd.f32 %v4588, 1.0
    %v4653 = vadd.f32 %v4589, 1.0
    %v4654 = vadd.f32 %v4590, 1.0
    %v4655 = vadd.f32 %v4591, 1.0
    %v4656 = vadd.f32 %v4592, 1.0
    %v4657 = vadd.f32 %v4593, 1.0
    %v4658 = vadd.f32 %v4594, 1.0
    %v4659 = vadd.f32 %v4595, 1.0
    %v4660 = vadd.f32 %v4596, 1.0
    %v4661 = vadd.f32 %v4597, 1.0
    %v4662 = vadd.f32 %v4598, 1.0
    %v4663 = vadd.f32 %v4599, 1.0
    %v4664 = vadd.f32 %v4600, 1.0
    %v4665 = vadd.f32 %v4601, 1.0
    %v4666 = vadd.f32 %v4602, 1.0
    %v4667 = vadd.f32 %v4603, 1.0
    %v4668 = vadd.f32 %v4604, 1.0
    %v4669 = vadd.f32 %v4605, 1.0
    %v4670 = vadd.f32 %v4606, 1.0
    %v4671 = vadd.f32 %v4607, 1.0
    %v4672 = vadd.f32 %v4608, 1.0
    %v4673 = vadd.f32 %v4609, 1.0
    %v4674 = vadd.f32 %v4610, 1.0
    %v4675 = vadd.f32 %v4611, 1.0
    %v4676 = vadd.f32 %v4612, 1.0
    %v4677 = vadd.f32 %v4613, 1.0
    %v4678 = vadd.f32 %v4614, 1.0
    %v4679 = vadd.f32 %v4615, 1.0
    %v4680 = vadd.f32 %v4616, 1.0
    %v4681 = vadd.f32 %v4617, 1.0
    %v4682 = vadd.f32 %v4618, 1.0
    %v4683 = vadd.f32 %v4619, 1.0
    %v4684 = vadd.f32 %v4620, 1.0
    %v4685 = vadd.f32 %v4621, 1.0
    %v4686 = vadd.f32 %v4622, 1.0
    %v4687 = vadd.f32 %v4623, 1.0
    %v4688 = vadd.f32 %v4624, 1.0
    %v4689 = vadd.f32 %v4625, 1.0
    %v4690 = vadd.f32 %v4626, 1.0
    %v4691 = vadd.f32 %v4627, 1.0
    %v4692 = vadd.f32 %v4628, 1.0
    %v4693 = vadd.f32 %v4629, 1.0
    %v4694 = vadd.f32 %v4630, 1.0
    %v4695 = vadd.f32 %v4631, 1.0
    %v4696 = vadd.f32 %v4632, 1.0
    %v4697 = vadd.f32 %v4633, 1.0
    %v4698 = vmul.f32 %v4186, %v4634
    %v4699 = vmul.f32 %v4187, %v4635
    %v4700 = vmul.f32 %v4188, %v4636
    %v4701 = vmul.f32 %v4189, %v4637
    %v4702 = vmul.f32 %v4190, %v4638
    %v4703 = vmul.f32 %v4191, %v4639
    %v4704 = vmul.f32 %v4192, %v4640
    %v4705 = vmul.f32 %v4193, %v4641
    %v4706 = vmul.f32 %v4194, %v4642
    %v4707 = vmul.f32 %v4195, %v4643
    %v4708 = vmul.f32 %v4196, %v4644
    %v4709 = vmul.f32 %v4197, %v4645
    %v4710 = vmul.f32 %v4198, %v4646
    %v4711 = vmul.f32 %v4199, %v4647
    %v4712 = vmul.f32 %v4200, %v4648
    %v4713 = vmul.f32 %v4201, %v4649
    %v4714 = vmul.f32 %v4202, %v4650
    %v4715 = vmul.f32 %v4203, %v4651
    %v4716 = vmul.f32 %v4204, %v4652
    %v4717 = vmul.f32 %v4205, %v4653
    %v4718 = vmul.f32 %v4206, %v4654
    %v4719 = vmul.f32 %v4207, %v4655
    %v4720 = vmul.f32 %v4208, %v4656
    %v4721 = vmul.f32 %v4209, %v4657
    %v4722 = vmul.f32 %v4210, %v4658
    %v4723 = vmul.f32 %v4211, %v4659
    %v4724 = vmul.f32 %v4212, %v4660
    %v4725 = vmul.f32 %v4213, %v4661
    %v4726 = vmul.f32 %v4214, %v4662
    %v4727 = vmul.f32 %v4215, %v4663
    %v4728 = vmul.f32 %v4216, %v4664
    %v4729 = vmul.f32 %v4217, %v4665
    %v4730 = vmul.f32 %v4218, %v4666
    %v4731 = vmul.f32 %v4219, %v4667
    %v4732 = vmul.f32 %v4220, %v4668
    %v4733 = vmul.f32 %v4221, %v4669
    %v4734 = vmul.f32 %v4222, %v4670
    %v4735 = vmul.f32 %v4223, %v4671
    %v4736 = vmul.f32 %v4224, %v4672
    %v4737 = vmul.f32 %v4225, %v4673
    %v4738 = vmul.f32 %v4226, %v4674
    %v4739 = vmul.f32 %v4227, %v4675
    %v4740 = vmul.f32 %v4228, %v4676
    %v4741 = vmul.f32 %v4229, %v4677
    %v4742 = vmul.f32 %v4230, %v4678
    %v4743 = vmul.f32 %v4231, %v4679
    %v4744 = vmul.f32 %v4232, %v4680
    %v4745 = vmul.f32 %v4233, %v4681
    %v4746 = vmul.f32 %v4234, %v4682
    %v4747 = vmul.f32 %v4235, %v4683
    %v4748 = vmul.f32 %v4236, %v4684
    %v4749 = vmul.f32 %v4237, %v4685
    %v4750 = vmul.f32 %v4238, %v4686
    %v4751 = vmul.f32 %v4239, %v4687
    %v4752 = vmul.f32 %v4240, %v4688
    %v4753 = vmul.f32 %v4241, %v4689
    %v4754 = vmul.f32 %v4242, %v4690
    %v4755 = vmul.f32 %v4243, %v4691
    %v4756 = vmul.f32 %v4244, %v4692
    %v4757 = vmul.f32 %v4245, %v4693
    %v4758 = vmul.f32 %v4246, %v4694
    %v4759 = vmul.f32 %v4247, %v4695
    %v4760 = vmul.f32 %v4248, %v4696
    %v4761 = vmul.f32 %v4249, %v4697
    %v4762 = vrot.slane %v4698, 4
    %v4763 = vmax.f32 %v4698, %v4762
    %v4764 = vrot.slane %v4763, 2
    %v4765 = vmax.f32 %v4763, %v4764
    %v4766 = vrot.slane %v4765, 1
    %v4767 = vmax.f32 %v4765, %v4766
    %v4768 = vrot.slane %v4699, 4
    %v4769 = vmax.f32 %v4699, %v4768
    %v4770 = vrot.slane %v4769, 2
    %v4771 = vmax.f32 %v4769, %v4770
    %v4772 = vrot.slane %v4771, 1
    %v4773 = vmax.f32 %v4771, %v4772
    %v4774 = vrot.slane %v4700, 4
    %v4775 = vmax.f32 %v4700, %v4774
    %v4776 = vrot.slane %v4775, 2
    %v4777 = vmax.f32 %v4775, %v4776
    %v4778 = vrot.slane %v4777, 1
    %v4779 = vmax.f32 %v4777, %v4778
    %v4780 = vrot.slane %v4701, 4
    %v4781 = vmax.f32 %v4701, %v4780
    %v4782 = vrot.slane %v4781, 2
    %v4783 = vmax.f32 %v4781, %v4782
    %v4784 = vrot.slane %v4783, 1
    %v4785 = vmax.f32 %v4783, %v4784
    %v4786 = vrot.slane %v4702, 4
    %v4787 = vmax.f32 %v4702, %v4786
    %v4788 = vrot.slane %v4787, 2
    %v4789 = vmax.f32 %v4787, %v4788
    %v4790 = vrot.slane %v4789, 1
    %v4791 = vmax.f32 %v4789, %v4790
    %v4792 = vrot.slane %v4703, 4
    %v4793 = vmax.f32 %v4703, %v4792
    %v4794 = vrot.slane %v4793, 2
    %v4795 = vmax.f32 %v4793, %v4794
    %v4796 = vrot.slane %v4795, 1
    %v4797 = vmax.f32 %v4795, %v4796
    %v4798 = vrot.slane %v4704, 4
    %v4799 = vmax.f32 %v4704, %v4798
    %v4800 = vrot.slane %v4799, 2
    %v4801 = vmax.f32 %v4799, %v4800
    %v4802 = vrot.slane %v4801, 1
    %v4803 = vmax.f32 %v4801, %v4802
    %v4804 = vrot.slane %v4705, 4
    %v4805 = vmax.f32 %v4705, %v4804
    %v4806 = vrot.slane %v4805, 2
    %v4807 = vmax.f32 %v4805, %v4806
    %v4808 = vrot.slane %v4807, 1
    %v4809 = vmax.f32 %v4807, %v4808
    %v4810 = vrot.slane %v4706, 4
    %v4811 = vmax.f32 %v4706, %v4810
    %v4812 = vrot.slane %v4811, 2
    %v4813 = vmax.f32 %v4811, %v4812
    %v4814 = vrot.slane %v4813, 1
    %v4815 = vmax.f32 %v4813, %v4814
    %v4816 = vrot.slane %v4707, 4
    %v4817 = vmax.f32 %v4707, %v4816
    %v4818 = vrot.slane %v4817, 2
    %v4819 = vmax.f32 %v4817, %v4818
    %v4820 = vrot.slane %v4819, 1
    %v4821 = vmax.f32 %v4819, %v4820
    %v4822 = vrot.slane %v4708, 4
    %v4823 = vmax.f32 %v4708, %v4822
    %v4824 = vrot.slane %v4823, 2
    %v4825 = vmax.f32 %v4823, %v4824
    %v4826 = vrot.slane %v4825, 1
    %v4827 = vmax.f32 %v4825, %v4826
    %v4828 = vrot.slane %v4709, 4
    %v4829 = vmax.f32 %v4709, %v4828
    %v4830 = vrot.slane %v4829, 2
    %v4831 = vmax.f32 %v4829, %v4830
    %v4832 = vrot.slane %v4831, 1
    %v4833 = vmax.f32 %v4831, %v4832
    %v4834 = vrot.slane %v4710, 4
    %v4835 = vmax.f32 %v4710, %v4834
    %v4836 = vrot.slane %v4835, 2
    %v4837 = vmax.f32 %v4835, %v4836
    %v4838 = vrot.slane %v4837, 1
    %v4839 = vmax.f32 %v4837, %v4838
    %v4840 = vrot.slane %v4711, 4
    %v4841 = vmax.f32 %v4711, %v4840
    %v4842 = vrot.slane %v4841, 2
    %v4843 = vmax.f32 %v4841, %v4842
    %v4844 = vrot.slane %v4843, 1
    %v4845 = vmax.f32 %v4843, %v4844
    %v4846 = vrot.slane %v4712, 4
    %v4847 = vmax.f32 %v4712, %v4846
    %v4848 = vrot.slane %v4847, 2
    %v4849 = vmax.f32 %v4847, %v4848
    %v4850 = vrot.slane %v4849, 1
    %v4851 = vmax.f32 %v4849, %v4850
    %v4852 = vrot.slane %v4713, 4
    %v4853 = vmax.f32 %v4713, %v4852
    %v4854 = vrot.slane %v4853, 2
    %v4855 = vmax.f32 %v4853, %v4854
    %v4856 = vrot.slane %v4855, 1
    %v4857 = vmax.f32 %v4855, %v4856
    %v4858 = vrot.slane %v4714, 4
    %v4859 = vmax.f32 %v4714, %v4858
    %v4860 = vrot.slane %v4859, 2
    %v4861 = vmax.f32 %v4859, %v4860
    %v4862 = vrot.slane %v4861, 1
    %v4863 = vmax.f32 %v4861, %v4862
    %v4864 = vrot.slane %v4715, 4
    %v4865 = vmax.f32 %v4715, %v4864
    %v4866 = vrot.slane %v4865, 2
    %v4867 = vmax.f32 %v4865, %v4866
    %v4868 = vrot.slane %v4867, 1
    %v4869 = vmax.f32 %v4867, %v4868
    %v4870 = vrot.slane %v4716, 4
    %v4871 = vmax.f32 %v4716, %v4870
    %v4872 = vrot.slane %v4871, 2
    %v4873 = vmax.f32 %v4871, %v4872
    %v4874 = vrot.slane %v4873, 1
    %v4875 = vmax.f32 %v4873, %v4874
    %v4876 = vrot.slane %v4717, 4
    %v4877 = vmax.f32 %v4717, %v4876
    %v4878 = vrot.slane %v4877, 2
    %v4879 = vmax.f32 %v4877, %v4878
    %v4880 = vrot.slane %v4879, 1
    %v4881 = vmax.f32 %v4879, %v4880
    %v4882 = vrot.slane %v4718, 4
    %v4883 = vmax.f32 %v4718, %v4882
    %v4884 = vrot.slane %v4883, 2
    %v4885 = vmax.f32 %v4883, %v4884
    %v4886 = vrot.slane %v4885, 1
    %v4887 = vmax.f32 %v4885, %v4886
    %v4888 = vrot.slane %v4719, 4
    %v4889 = vmax.f32 %v4719, %v4888
    %v4890 = vrot.slane %v4889, 2
    %v4891 = vmax.f32 %v4889, %v4890
    %v4892 = vrot.slane %v4891, 1
    %v4893 = vmax.f32 %v4891, %v4892
    %v4894 = vrot.slane %v4720, 4
    %v4895 = vmax.f32 %v4720, %v4894
    %v4896 = vrot.slane %v4895, 2
    %v4897 = vmax.f32 %v4895, %v4896
    %v4898 = vrot.slane %v4897, 1
    %v4899 = vmax.f32 %v4897, %v4898
    %v4900 = vrot.slane %v4721, 4
    %v4901 = vmax.f32 %v4721, %v4900
    %v4902 = vrot.slane %v4901, 2
    %v4903 = vmax.f32 %v4901, %v4902
    %v4904 = vrot.slane %v4903, 1
    %v4905 = vmax.f32 %v4903, %v4904
    %v4906 = vrot.slane %v4722, 4
    %v4907 = vmax.f32 %v4722, %v4906
    %v4908 = vrot.slane %v4907, 2
    %v4909 = vmax.f32 %v4907, %v4908
    %v4910 = vrot.slane %v4909, 1
    %v4911 = vmax.f32 %v4909, %v4910
    %v4912 = vrot.slane %v4723, 4
    %v4913 = vmax.f32 %v4723, %v4912
    %v4914 = vrot.slane %v4913, 2
    %v4915 = vmax.f32 %v4913, %v4914
    %v4916 = vrot.slane %v4915, 1
    %v4917 = vmax.f32 %v4915, %v4916
    %v4918 = vrot.slane %v4724, 4
    %v4919 = vmax.f32 %v4724, %v4918
    %v4920 = vrot.slane %v4919, 2
    %v4921 = vmax.f32 %v4919, %v4920
    %v4922 = vrot.slane %v4921, 1
    %v4923 = vmax.f32 %v4921, %v4922
    %v4924 = vrot.slane %v4725, 4
    %v4925 = vmax.f32 %v4725, %v4924
    %v4926 = vrot.slane %v4925, 2
    %v4927 = vmax.f32 %v4925, %v4926
    %v4928 = vrot.slane %v4927, 1
    %v4929 = vmax.f32 %v4927, %v4928
    %v4930 = vrot.slane %v4726, 4
    %v4931 = vmax.f32 %v4726, %v4930
    %v4932 = vrot.slane %v4931, 2
    %v4933 = vmax.f32 %v4931, %v4932
    %v4934 = vrot.slane %v4933, 1
    %v4935 = vmax.f32 %v4933, %v4934
    %v4936 = vrot.slane %v4727, 4
    %v4937 = vmax.f32 %v4727, %v4936
    %v4938 = vrot.slane %v4937, 2
    %v4939 = vmax.f32 %v4937, %v4938
    %v4940 = vrot.slane %v4939, 1
    %v4941 = vmax.f32 %v4939, %v4940
    %v4942 = vrot.slane %v4728, 4
    %v4943 = vmax.f32 %v4728, %v4942
    %v4944 = vrot.slane %v4943, 2
    %v4945 = vmax.f32 %v4943, %v4944
    %v4946 = vrot.slane %v4945, 1
    %v4947 = vmax.f32 %v4945, %v4946
    %v4948 = vrot.slane %v4729, 4
    %v4949 = vmax.f32 %v4729, %v4948
    %v4950 = vrot.slane %v4949, 2
    %v4951 = vmax.f32 %v4949, %v4950
    %v4952 = vrot.slane %v4951, 1
    %v4953 = vmax.f32 %v4951, %v4952
    %v4954 = vrot.slane %v4730, 4
    %v4955 = vmax.f32 %v4730, %v4954
    %v4956 = vrot.slane %v4955, 2
    %v4957 = vmax.f32 %v4955, %v4956
    %v4958 = vrot.slane %v4957, 1
    %v4959 = vmax.f32 %v4957, %v4958
    %v4960 = vrot.slane %v4731, 4
    %v4961 = vmax.f32 %v4731, %v4960
    %v4962 = vrot.slane %v4961, 2
    %v4963 = vmax.f32 %v4961, %v4962
    %v4964 = vrot.slane %v4963, 1
    %v4965 = vmax.f32 %v4963, %v4964
    %v4966 = vrot.slane %v4732, 4
    %v4967 = vmax.f32 %v4732, %v4966
    %v4968 = vrot.slane %v4967, 2
    %v4969 = vmax.f32 %v4967, %v4968
    %v4970 = vrot.slane %v4969, 1
    %v4971 = vmax.f32 %v4969, %v4970
    %v4972 = vrot.slane %v4733, 4
    %v4973 = vmax.f32 %v4733, %v4972
    %v4974 = vrot.slane %v4973, 2
    %v4975 = vmax.f32 %v4973, %v4974
    %v4976 = vrot.slane %v4975, 1
    %v4977 = vmax.f32 %v4975, %v4976
    %v4978 = vrot.slane %v4734, 4
    %v4979 = vmax.f32 %v4734, %v4978
    %v4980 = vrot.slane %v4979, 2
    %v4981 = vmax.f32 %v4979, %v4980
    %v4982 = vrot.slane %v4981, 1
    %v4983 = vmax.f32 %v4981, %v4982
    %v4984 = vrot.slane %v4735, 4
    %v4985 = vmax.f32 %v4735, %v4984
    %v4986 = vrot.slane %v4985, 2
    %v4987 = vmax.f32 %v4985, %v4986
    %v4988 = vrot.slane %v4987, 1
    %v4989 = vmax.f32 %v4987, %v4988
    %v4990 = vrot.slane %v4736, 4
    %v4991 = vmax.f32 %v4736, %v4990
    %v4992 = vrot.slane %v4991, 2
    %v4993 = vmax.f32 %v4991, %v4992
    %v4994 = vrot.slane %v4993, 1
    %v4995 = vmax.f32 %v4993, %v4994
    %v4996 = vrot.slane %v4737, 4
    %v4997 = vmax.f32 %v4737, %v4996
    %v4998 = vrot.slane %v4997, 2
    %v4999 = vmax.f32 %v4997, %v4998
    %v5000 = vrot.slane %v4999, 1
    %v5001 = vmax.f32 %v4999, %v5000
    %v5002 = vrot.slane %v4738, 4
    %v5003 = vmax.f32 %v4738, %v5002
    %v5004 = vrot.slane %v5003, 2
    %v5005 = vmax.f32 %v5003, %v5004
    %v5006 = vrot.slane %v5005, 1
    %v5007 = vmax.f32 %v5005, %v5006
    %v5008 = vrot.slane %v4739, 4
    %v5009 = vmax.f32 %v4739, %v5008
    %v5010 = vrot.slane %v5009, 2
    %v5011 = vmax.f32 %v5009, %v5010
    %v5012 = vrot.slane %v5011, 1
    %v5013 = vmax.f32 %v5011, %v5012
    %v5014 = vrot.slane %v4740, 4
    %v5015 = vmax.f32 %v4740, %v5014
    %v5016 = vrot.slane %v5015, 2
    %v5017 = vmax.f32 %v5015, %v5016
    %v5018 = vrot.slane %v5017, 1
    %v5019 = vmax.f32 %v5017, %v5018
    %v5020 = vrot.slane %v4741, 4
    %v5021 = vmax.f32 %v4741, %v5020
    %v5022 = vrot.slane %v5021, 2
    %v5023 = vmax.f32 %v5021, %v5022
    %v5024 = vrot.slane %v5023, 1
    %v5025 = vmax.f32 %v5023, %v5024
    %v5026 = vrot.slane %v4742, 4
    %v5027 = vmax.f32 %v4742, %v5026
    %v5028 = vrot.slane %v5027, 2
    %v5029 = vmax.f32 %v5027, %v5028
    %v5030 = vrot.slane %v5029, 1
    %v5031 = vmax.f32 %v5029, %v5030
    %v5032 = vrot.slane %v4743, 4
    %v5033 = vmax.f32 %v4743, %v5032
    %v5034 = vrot.slane %v5033, 2
    %v5035 = vmax.f32 %v5033, %v5034
    %v5036 = vrot.slane %v5035, 1
    %v5037 = vmax.f32 %v5035, %v5036
    %v5038 = vrot.slane %v4744, 4
    %v5039 = vmax.f32 %v4744, %v5038
    %v5040 = vrot.slane %v5039, 2
    %v5041 = vmax.f32 %v5039, %v5040
    %v5042 = vrot.slane %v5041, 1
    %v5043 = vmax.f32 %v5041, %v5042
    %v5044 = vrot.slane %v4745, 4
    %v5045 = vmax.f32 %v4745, %v5044
    %v5046 = vrot.slane %v5045, 2
    %v5047 = vmax.f32 %v5045, %v5046
    %v5048 = vrot.slane %v5047, 1
    %v5049 = vmax.f32 %v5047, %v5048
    %v5050 = vrot.slane %v4746, 4
    %v5051 = vmax.f32 %v4746, %v5050
    %v5052 = vrot.slane %v5051, 2
    %v5053 = vmax.f32 %v5051, %v5052
    %v5054 = vrot.slane %v5053, 1
    %v5055 = vmax.f32 %v5053, %v5054
    %v5056 = vrot.slane %v4747, 4
    %v5057 = vmax.f32 %v4747, %v5056
    %v5058 = vrot.slane %v5057, 2
    %v5059 = vmax.f32 %v5057, %v5058
    %v5060 = vrot.slane %v5059, 1
    %v5061 = vmax.f32 %v5059, %v5060
    %v5062 = vrot.slane %v4748, 4
    %v5063 = vmax.f32 %v4748, %v5062
    %v5064 = vrot.slane %v5063, 2
    %v5065 = vmax.f32 %v5063, %v5064
    %v5066 = vrot.slane %v5065, 1
    %v5067 = vmax.f32 %v5065, %v5066
    %v5068 = vrot.slane %v4749, 4
    %v5069 = vmax.f32 %v4749, %v5068
    %v5070 = vrot.slane %v5069, 2
    %v5071 = vmax.f32 %v5069, %v5070
    %v5072 = vrot.slane %v5071, 1
    %v5073 = vmax.f32 %v5071, %v5072
    %v5074 = vrot.slane %v4750, 4
    %v5075 = vmax.f32 %v4750, %v5074
    %v5076 = vrot.slane %v5075, 2
    %v5077 = vmax.f32 %v5075, %v5076
    %v5078 = vrot.slane %v5077, 1
    %v5079 = vmax.f32 %v5077, %v5078
    %v5080 = vrot.slane %v4751, 4
    %v5081 = vmax.f32 %v4751, %v5080
    %v5082 = vrot.slane %v5081, 2
    %v5083 = vmax.f32 %v5081, %v5082
    %v5084 = vrot.slane %v5083, 1
    %v5085 = vmax.f32 %v5083, %v5084
    %v5086 = vrot.slane %v4752, 4
    %v5087 = vmax.f32 %v4752, %v5086
    %v5088 = vrot.slane %v5087, 2
    %v5089 = vmax.f32 %v5087, %v5088
    %v5090 = vrot.slane %v5089, 1
    %v5091 = vmax.f32 %v5089, %v5090
    %v5092 = vrot.slane %v4753, 4
    %v5093 = vmax.f32 %v4753, %v5092
    %v5094 = vrot.slane %v5093, 2
    %v5095 = vmax.f32 %v5093, %v5094
    %v5096 = vrot.slane %v5095, 1
    %v5097 = vmax.f32 %v5095, %v5096
    %v5098 = vrot.slane %v4754, 4
    %v5099 = vmax.f32 %v4754, %v5098
    %v5100 = vrot.slane %v5099, 2
    %v5101 = vmax.f32 %v5099, %v5100
    %v5102 = vrot.slane %v5101, 1
    %v5103 = vmax.f32 %v5101, %v5102
    %v5104 = vrot.slane %v4755, 4
    %v5105 = vmax.f32 %v4755, %v5104
    %v5106 = vrot.slane %v5105, 2
    %v5107 = vmax.f32 %v5105, %v5106
    %v5108 = vrot.slane %v5107, 1
    %v5109 = vmax.f32 %v5107, %v5108
    %v5110 = vrot.slane %v4756, 4
    %v5111 = vmax.f32 %v4756, %v5110
    %v5112 = vrot.slane %v5111, 2
    %v5113 = vmax.f32 %v5111, %v5112
    %v5114 = vrot.slane %v5113, 1
    %v5115 = vmax.f32 %v5113, %v5114
    %v5116 = vrot.slane %v4757, 4
    %v5117 = vmax.f32 %v4757, %v5116
    %v5118 = vrot.slane %v5117, 2
    %v5119 = vmax.f32 %v5117, %v5118
    %v5120 = vrot.slane %v5119, 1
    %v5121 = vmax.f32 %v5119, %v5120
    %v5122 = vrot.slane %v4758, 4
    %v5123 = vmax.f32 %v4758, %v5122
    %v5124 = vrot.slane %v5123, 2
    %v5125 = vmax.f32 %v5123, %v5124
    %v5126 = vrot.slane %v5125, 1
    %v5127 = vmax.f32 %v5125, %v5126
    %v5128 = vrot.slane %v4759, 4
    %v5129 = vmax.f32 %v4759, %v5128
    %v5130 = vrot.slane %v5129, 2
    %v5131 = vmax.f32 %v5129, %v5130
    %v5132 = vrot.slane %v5131, 1
    %v5133 = vmax.f32 %v5131, %v5132
    %v5134 = vrot.slane %v4760, 4
    %v5135 = vmax.f32 %v4760, %v5134
    %v5136 = vrot.slane %v5135, 2
    %v5137 = vmax.f32 %v5135, %v5136
    %v5138 = vrot.slane %v5137, 1
    %v5139 = vmax.f32 %v5137, %v5138
    %v5140 = vrot.slane %v4761, 4
    %v5141 = vmax.f32 %v4761, %v5140
    %v5142 = vrot.slane %v5141, 2
    %v5143 = vmax.f32 %v5141, %v5142
    %v5144 = vrot.slane %v5143, 1
    %v5145 = vmax.f32 %v5143, %v5144
    %v5146 = vld [vmem:[%s1] sm:$0xff]
    %v5147 = vld [vmem:[%s1 + $0x8] sm:$0xff]
    %v5148 = vld [vmem:[%s1 + $0x10] sm:$0xff]
    %v5149 = vld [vmem:[%s1 + $0x18] sm:$0xff]
    %v5150 = vld [vmem:[%s2 + $0x4] sm:$0x7]
    %5152 = vset.pattern.permute.xlu0 0
    %5153 = vperm.xlu0 %5152, %v5146
    %v5154 = vpop.permute.xlu0 %5153
    %5157 = vset.pattern.permute.xlu0 0
    %5158 = vperm.xlu0 %5157, %v5147
    %v5159 = vpop.permute.xlu0 %5158
    %5162 = vset.pattern.permute.xlu0 0
    %5163 = vperm.xlu0 %5162, %v5148
    %v5164 = vpop.permute.xlu0 %5163
    %5167 = vset.pattern.permute.xlu0 0
    %5168 = vperm.xlu0 %5167, %v5149
    %v5169 = vpop.permute.xlu0 %5168
    %v5171 = vperm.slane %v5150, 0
    %v5172 = vmul.f32 %v5154, %v5171
    %v5173 = vmul.f32 %v5159, %v5171
    %v5174 = vmul.f32 %v5164, %v5171
    %v5175 = vmul.f32 %v5169, %v5171
    %5176 = vset.pattern.permute.xlu0 1
    %5177 = vperm.xlu0 %5176, %v5146
    %v5178 = vpop.permute.xlu0 %5177
    %5180 = vset.pattern.permute.xlu0 1
    %5181 = vperm.xlu0 %5180, %v5147
    %v5182 = vpop.permute.xlu0 %5181
    %5184 = vset.pattern.permute.xlu0 1
    %5185 = vperm.xlu0 %5184, %v5148
    %v5186 = vpop.permute.xlu0 %5185
    %5188 = vset.pattern.permute.xlu0 1
    %5189 = vperm.xlu0 %5188, %v5149
    %v5190 = vpop.permute.xlu0 %5189
    %v5192 = vperm.slane %v5150, 1
    %v5193 = vmul.f32 %v5178, %v5192
    %v5194 = vmul.f32 %v5182, %v5192
    %v5195 = vmul.f32 %v5186, %v5192
    %v5196 = vmul.f32 %v5190, %v5192
    %v5197 = vadd.f32 %v5172, %v5193
    %v5198 = vadd.f32 %v5173, %v5194
    %v5199 = vadd.f32 %v5174, %v5195
    %v5200 = vadd.f32 %v5175, %v5196
    %5201 = vset.pattern.permute.xlu0 2
    %5202 = vperm.xlu0 %5201, %v5146
    %v5203 = vpop.permute.xlu0 %5202
    %5205 = vset.pattern.permute.xlu0 2
    %5206 = vperm.xlu0 %5205, %v5147
    %v5207 = vpop.permute.xlu0 %5206
    %5209 = vset.pattern.permute.xlu0 2
    %5210 = vperm.xlu0 %5209, %v5148
    %v5211 = vpop.permute.xlu0 %5210
    %5213 = vset.pattern.permute.xlu0 2
    %5214 = vperm.xlu0 %5213, %v5149
    %v5215 = vpop.permute.xlu0 %5214
    %v5217 = vperm.slane %v5150, 2
    %v5218 = vmul.f32 %v5203, %v5217
    %v5219 = vmul.f32 %v5207, %v5217
    %v5220 = vmul.f32 %v5211, %v5217
    %v5221 = vmul.f32 %v5215, %v5217
    %v5222 = vadd.f32 %v5197, %v5218
    %v5223 = vadd.f32 %v5198, %v5219
    %v5224 = vadd.f32 %v5199, %v5220
    %v5225 = vadd.f32 %v5200, %v5221
    %v5226 = vld [vmem:[%s6 + $0xc] sm:$0x1]
    %v5228 = vperm.slane %v5226, 0
    %v5230 = vadd.f32 %v5222, %v5228
    %v5231 = vadd.f32 %v5223, %v5228
    %v5232 = vadd.f32 %v5224, %v5228
    %v5233 = vadd.f32 %v5225, %v5228
    %v5234 = vmul.f32 %v5230, 0.5
    %v5235 = vmul.f32 %v5231, 0.5
    %v5236 = vmul.f32 %v5232, 0.5
    %v5237 = vmul.f32 %v5233, 0.5
    %v5238 = vmul.f32 %v5230, 0.044715
    %v5239 = vmul.f32 %v5231, 0.044715
    %v5240 = vmul.f32 %v5232, 0.044715
    %v5241 = vmul.f32 %v5233, 0.044715
    %v5242 = vmul.f32 %v5238, %v5230
    %v5243 = vmul.f32 %v5239, %v5231
    %v5244 = vmul.f32 %v5240, %v5232
    %v5245 = vmul.f32 %v5241, %v5233
    %v5246 = vmul.f32 %v5242, %v5230
    %v5247 = vmul.f32 %v5243, %v5231
    %v5248 = vmul.f32 %v5244, %v5232
    %v5249 = vmul.f32 %v5245, %v5233
    %v5250 = vadd.f32 %v5230, %v5246
    %v5251 = vadd.f32 %v5231, %v5247
    %v5252 = vadd.f32 %v5232, %v5248
    %v5253 = vadd.f32 %v5233, %v5249
    %v5254 = vmul.f32 %v5250, 0.7978846
    %v5255 = vmul.f32 %v5251, 0.7978846
    %v5256 = vmul.f32 %v5252, 0.7978846
    %v5257 = vmul.f32 %v5253, 0.7978846
    %v5258 = vtanh.pop %v5254
    %v5259 = vtanh.pop %v5255
    %v5260 = vtanh.pop %v5256
    %v5261 = vtanh.pop %v5257
    %v5262 = vadd.f32 %v5258, 1.0
    %v5263 = vadd.f32 %v5259, 1.0
    %v5264 = vadd.f32 %v5260, 1.0
    %v5265 = vadd.f32 %v5261, 1.0
    %v5266 = vmul.f32 %v5234, %v5262
    %v5267 = vmul.f32 %v5235, %v5263
    %v5268 = vmul.f32 %v5236, %v5264
    %v5269 = vmul.f32 %v5237, %v5265
    %vm5334 = vcmask 1041409
    %v5335 = vsel %vm5334, %v4779, %v4767
    %vm5336 = vcmask 1042434
    %v5337 = vsel %vm5336, %v4791, %v5335
    %vm5338 = vcmask 1043459
    %v5339 = vsel %vm5338, %v4803, %v5337
    %vm5340 = vcmask 1044484
    %v5341 = vsel %vm5340, %v4815, %v5339
    %vm5342 = vcmask 1045509
    %v5343 = vsel %vm5342, %v4827, %v5341
    %vm5344 = vcmask 1046534
    %v5345 = vsel %vm5344, %v4839, %v5343
    %vm5346 = vcmask 1047559
    %v5347 = vsel %vm5346, %v4851, %v5345
    %v5348 = vsel %vm5334, %v4785, %v4773
    %v5349 = vsel %vm5336, %v4797, %v5348
    %v5350 = vsel %vm5338, %v4809, %v5349
    %v5351 = vsel %vm5340, %v4821, %v5350
    %v5352 = vsel %vm5342, %v4833, %v5351
    %v5353 = vsel %vm5344, %v4845, %v5352
    %v5354 = vsel %vm5346, %v4857, %v5353
    %v5355 = vsel %vm5334, %v4875, %v4863
    %v5356 = vsel %vm5336, %v4887, %v5355
    %v5357 = vsel %vm5338, %v4899, %v5356
    %v5358 = vsel %vm5340, %v4911, %v5357
    %v5359 = vsel %vm5342, %v4923, %v5358
    %v5360 = vsel %vm5344, %v4935, %v5359
    %v5361 = vsel %vm5346, %v4947, %v5360
    %v5362 = vsel %vm5334, %v4881, %v4869
    %v5363 = vsel %vm5336, %v4893, %v5362
    %v5364 = vsel %vm5338, %v4905, %v5363
    %v5365 = vsel %vm5340, %v4917, %v5364
    %v5366 = vsel %vm5342, %v4929, %v5365
    %v5367 = vsel %vm5344, %v4941, %v5366
    %v5368 = vsel %vm5346, %v4953, %v5367
    %v5369 = vsel %vm5334, %v4971, %v4959
    %v5370 = vsel %vm5336, %v4983, %v5369
    %v5371 = vsel %vm5338, %v4995, %v5370
    %v5372 = vsel %vm5340, %v5007, %v5371
    %v5373 = vsel %vm5342, %v5019, %v5372
    %v5374 = vsel %vm5344, %v5031, %v5373
    %v5375 = vsel %vm5346, %v5043, %v5374
    %v5376 = vsel %vm5334, %v4977, %v4965
    %v5377 = vsel %vm5336, %v4989, %v5376
    %v5378 = vsel %vm5338, %v5001, %v5377
    %v5379 = vsel %vm5340, %v5013, %v5378
    %v5380 = vsel %vm5342, %v5025, %v5379
    %v5381 = vsel %vm5344, %v5037, %v5380
    %v5382 = vsel %vm5346, %v5049, %v5381
    %v5383 = vsel %vm5334, %v5067, %v5055
    %v5384 = vsel %vm5336, %v5079, %v5383
    %v5385 = vsel %vm5338, %v5091, %v5384
    %v5386 = vsel %vm5340, %v5103, %v5385
    %v5387 = vsel %vm5342, %v5115, %v5386
    %v5388 = vsel %vm5344, %v5127, %v5387
    %v5389 = vsel %vm5346, %v5139, %v5388
    %v5390 = vsel %vm5334, %v5073, %v5061
    %v5391 = vsel %vm5336, %v5085, %v5390
    %v5392 = vsel %vm5338, %v5097, %v5391
    %v5393 = vsel %vm5340, %v5109, %v5392
    %v5394 = vsel %vm5342, %v5121, %v5393
    %v5395 = vsel %vm5344, %v5133, %v5394
    %v5396 = vsel %vm5346, %v5145, %v5395
    %v5405 = vld [vmem:[%s5] sm:$0xff]
    %v5406 = vld [vmem:[%s5 + $0x8] sm:$0xff]
    %v5407 = vld [vmem:[%s5 + $0x10] sm:$0xff]
    %v5408 = vld [vmem:[%s5 + $0x18] sm:$0xff]
    %v5409 = vld [vmem:[%s5 + $0x20] sm:$0xff]
    %v5410 = vld [vmem:[%s5 + $0x28] sm:$0xff]
    %v5411 = vld [vmem:[%s5 + $0x30] sm:$0xff]
    %v5412 = vld [vmem:[%s5 + $0x38] sm:$0xff]
    %v5413 = vld [vmem:[%s5 + $0x40] sm:$0xff]
    %v5414 = vld [vmem:[%s5 + $0x48] sm:$0xff]
    %v5415 = vld [vmem:[%s5 + $0x50] sm:$0xff]
    %v5416 = vld [vmem:[%s5 + $0x58] sm:$0xff]
    %v5417 = vld [vmem:[%s5 + $0x60] sm:$0xff]
    %v5418 = vld [vmem:[%s5 + $0x68] sm:$0xff]
    %v5419 = vld [vmem:[%s5 + $0x70] sm:$0xff]
    %v5420 = vld [vmem:[%s5 + $0x78] sm:$0xff]
    %v5421 = vld [vmem:[%s5 + $0x80] sm:$0xff]
    %v5422 = vld [vmem:[%s5 + $0x88] sm:$0xff]
    %v5423 = vld [vmem:[%s5 + $0x90] sm:$0xff]
    %v5424 = vld [vmem:[%s5 + $0x98] sm:$0xff]
    %v5425 = vld [vmem:[%s5 + $0xa0] sm:$0xff]
    %v5426 = vld [vmem:[%s5 + $0xa8] sm:$0xff]
    %v5427 = vld [vmem:[%s5 + $0xb0] sm:$0xff]
    %v5428 = vld [vmem:[%s5 + $0xb8] sm:$0xff]
    %v5429 = vld [vmem:[%s5 + $0xc0] sm:$0xff]
    %v5430 = vld [vmem:[%s5 + $0xc8] sm:$0xff]
    %v5431 = vld [vmem:[%s5 + $0xd0] sm:$0xff]
    %v5432 = vld [vmem:[%s5 + $0xd8] sm:$0xff]
    %v5433 = vld [vmem:[%s5 + $0xe0] sm:$0xff]
    %v5434 = vld [vmem:[%s5 + $0xe8] sm:$0xff]
    %v5435 = vld [vmem:[%s5 + $0xf0] sm:$0xff]
    %v5436 = vld [vmem:[%s5 + $0xf8] sm:$0xff]
    %v5437 = vld [vmem:[%s5 + $0x100] sm:$0xff]
    %v5438 = vld [vmem:[%s5 + $0x108] sm:$0xff]
    %v5439 = vld [vmem:[%s5 + $0x110] sm:$0xff]
    %v5440 = vld [vmem:[%s5 + $0x118] sm:$0xff]
    %v5441 = vld [vmem:[%s6 + $0xd] sm:$0x1]
    %v5443 = vperm.slane %v5441, 0
    %vm5445 = vcmask 261120
    %v5447 = vsel %vm5445, %v5266, 0
    %v5450 = vsel %vm5445, %v5267, 0
    %v5453 = vsel %vm5445, %v5268, 0
    %v5456 = vsel %vm5445, %v5269, 0
    %5458 = vmatpush.msra.mxu0 %v5420
    %5459 = vmatpush.msra.mxu0 %v5419
    %5460 = vmatpush.msra.mxu0 %v5418
    %5461 = vmatpush.msra.mxu0 %v5417
    %5462 = vmatpush.msra.mxu0 %v5416
    %5463 = vmatpush.msra.mxu0 %v5415
    %5464 = vmatpush.msra.mxu0 %v5414
    %5465 = vmatpush.msra.mxu0 %v5413
    %5466 = vmatpush.msra.mxu0 %v5412
    %5467 = vmatpush.msra.mxu0 %v5411
    %5468 = vmatpush.msra.mxu0 %v5410
    %5469 = vmatpush.msra.mxu0 %v5409
    %5470 = vmatpush.msra.mxu0 %v5408
    %5471 = vmatpush.msra.mxu0 %v5407
    %5472 = vmatpush.msra.mxu0 %v5406
    %5473 = vmatpush.msra.mxu0 %v5405
    %5474 = vmatmul.f32.gmra.mxu0 %v5347
    %v5475 = vpop.f32.mrf.mxu0
    %v5476 = vadd.f32 %v5443, %v5475
    %5477 = vmatmul.f32.gmra.mxu0 %v5361
    %v5478 = vpop.f32.mrf.mxu0
    %v5479 = vadd.f32 %v5443, %v5478
    %5480 = vmatmul.f32.gmra.mxu0 %v5375
    %v5481 = vpop.f32.mrf.mxu0
    %v5482 = vadd.f32 %v5443, %v5481
    %5483 = vmatmul.f32.gmra.mxu0 %v5389
    %v5484 = vpop.f32.mrf.mxu0
    %v5485 = vadd.f32 %v5443, %v5484
    %5486 = vdwg.mxu0
    %5487 = vmatpush.msra.mxu0 %v5436
    %5488 = vmatpush.msra.mxu0 %v5435
    %5489 = vmatpush.msra.mxu0 %v5434
    %5490 = vmatpush.msra.mxu0 %v5433
    %5491 = vmatpush.msra.mxu0 %v5432
    %5492 = vmatpush.msra.mxu0 %v5431
    %5493 = vmatpush.msra.mxu0 %v5430
    %5494 = vmatpush.msra.mxu0 %v5429
    %5495 = vmatpush.msra.mxu0 %v5428
    %5496 = vmatpush.msra.mxu0 %v5427
    %5497 = vmatpush.msra.mxu0 %v5426
    %5498 = vmatpush.msra.mxu0 %v5425
    %5499 = vmatpush.msra.mxu0 %v5424
    %5500 = vmatpush.msra.mxu0 %v5423
    %5501 = vmatpush.msra.mxu0 %v5422
    %5502 = vmatpush.msra.mxu0 %v5421
    %5503 = vmatmul.f32.gmra.mxu0 %v5354
    %v5504 = vpop.f32.mrf.mxu0
    %v5505 = vadd.f32 %v5476, %v5504
    %5506 = vmatmul.f32.gmra.mxu0 %v5368
    %v5507 = vpop.f32.mrf.mxu0
    %v5508 = vadd.f32 %v5479, %v5507
    %5509 = vmatmul.f32.gmra.mxu0 %v5382
    %v5510 = vpop.f32.mrf.mxu0
    %v5511 = vadd.f32 %v5482, %v5510
    %5512 = vmatmul.f32.gmra.mxu0 %v5396
    %v5513 = vpop.f32.mrf.mxu0
    %v5514 = vadd.f32 %v5485, %v5513
    %5515 = vdwg.mxu0
    %5516 = vmatpush.msra.mxu0 0.0
    %5517 = vmatpush.msra.mxu0 0.0
    %5518 = vmatpush.msra.mxu0 0.0
    %5519 = vmatpush.msra.mxu0 0.0
    %5520 = vmatpush.msra.mxu0 0.0
    %5521 = vmatpush.msra.mxu0 0.0
    %5522 = vmatpush.msra.mxu0 0.0
    %5523 = vmatpush.msra.mxu0 0.0
    %5524 = vmatpush.msra.mxu0 0.0
    %5525 = vmatpush.msra.mxu0 0.0
    %5526 = vmatpush.msra.mxu0 0.0
    %5527 = vmatpush.msra.mxu0 0.0
    %5528 = vmatpush.msra.mxu0 %v5440
    %5529 = vmatpush.msra.mxu0 %v5439
    %5530 = vmatpush.msra.mxu0 %v5438
    %5531 = vmatpush.msra.mxu0 %v5437
    %5532 = vmatmul.f32.gmra.mxu0 %v5447
    %v5533 = vpop.f32.mrf.mxu0
    %v5534 = vadd.f32 %v5505, %v5533
    %5535 = vmatmul.f32.gmra.mxu0 %v5450
    %v5536 = vpop.f32.mrf.mxu0
    %v5537 = vadd.f32 %v5508, %v5536
    %5538 = vmatmul.f32.gmra.mxu0 %v5453
    %v5539 = vpop.f32.mrf.mxu0
    %v5540 = vadd.f32 %v5511, %v5539
    %5541 = vmatmul.f32.gmra.mxu0 %v5456
    %v5542 = vpop.f32.mrf.mxu0
    %v5543 = vadd.f32 %v5514, %v5542
    %5544 = vdwg.mxu0
    %5545 = vst.msk [vmem:[#allocation2] sm:$0xff] %vm5445, %v5534
    %5546 = vst.msk [vmem:[#allocation2 + $0x8] sm:$0xff] %vm5445, %v5537
    %5547 = vst.msk [vmem:[#allocation2 + $0x10] sm:$0xff] %vm5445, %v5540
    %5548 = vst.msk [vmem:[#allocation2 + $0x18] sm:$0xff] %vm5445, %v5543
    // Predicated region
    $region30: #{tpu_custom_call.1} parent=1 // pred_check
      _
    $region31: #{tpu_custom_call.1} parent=1 // pred_check_branch
      %5550 = sbr.rel (0) target = $region33
    $region32: #{tpu_custom_call.1} parent=1 // pred_region
      %5552 = vsyncadd [#allocation3], 0
      %s5553 = sshll.u32 [#allocation2], 4
      %s5554 = int_to_ptr.vmem [resolvable:$true] %s5553
      %s5555 = sshll.u32 %s7, 4
      %s5556 = int_to_ptr.hbm [resolvable:$true] %s5555
      %5561 = dma.vmem_to_hbm [thread:$0]  %s5554, 512, %s5556, [#allocation3], 128, 128, 8
    $region33: #{tpu_custom_call.1} parent=1 // pred_fallthru
      _
    // Predicated region
    $region34: #{tpu_custom_call.1} parent=1 // pred_check
      _
    $region35: #{tpu_custom_call.1} parent=1 // pred_check_branch
      %5563 = sbr.rel (0) target = $region37
    $region36: #{tpu_custom_call.1} parent=1 // pred_region
      %5565 = dma.done [#allocation3], 512
    $region37: #{tpu_custom_call.1} parent=1 // pred_fallthru
      _
    %5566 = vsyncpa [#allocation3], 1

</llo_original>
